<compile_context>
chip_gen: v7x
topology: tpu7x:2x2x1
jax: 0.10.0
libtpu: 0.0.40
codegen_flags: <defaults>
</compile_context>

<pallas_src>
import jax
import jax.numpy as jnp
import numpy as np
from jax.experimental import pallas as pl
from jax.experimental.pallas import tpu as pltpu


def _round_up(v, m):
    return (v + m - 1) // m * m


def make_kernel(W, Cin, Cout, M, M_pad, identity):
    front = W + 1                       # zero-halo width each side of the row buffer
    Cmax = max(Cin, Cout)
    need_vmask = (M_pad != M)           # statically known; common sizes compile it out
    eps = 1e-5
    f32, bf16 = jnp.float32, jnp.bfloat16

    def silu(v):
        # sigmoid denominator via EUP approximate reciprocal (frees VALU slots)
        return v * pl.reciprocal(1.0 + jnp.exp(-v), approx=True)

    def kernel(x_ref, temb_ref,
               w1_ref, b1_ref, g1_ref, be1_ref,
               wt_ref, bt_ref,
               w2_ref, b2_ref, g2_ref, be2_ref,
               ws_ref, bs_ref,
               gavg_ref, colmask_ref,
               out_ref, hpad_ref):
        cms0 = colmask_ref[0:1, :]      # zero where image column x == 0   (dx=0 taps)
        vmask = colmask_ref[1:2, :]     # zero where flattened pos >= H*W  (padding lanes)
        cms2 = colmask_ref[2:3, :]      # zero where image column x == W-1 (dx=2 taps)
        gavg = gavg_ref[...]            # (Cout, Cout) group-averaging matrix

        def group_norm(h, gamma, beta):
            # two-pass: group mean first, then centered second moment
            hm = h * vmask if need_vmask else h
            mean_c = jnp.dot(gavg, jnp.sum(hm, axis=1, keepdims=True),
                             preferred_element_type=f32)            # (Cout, 1)
            d = h - mean_c
            if need_vmask:
                d = d * vmask
            var_c = jnp.dot(gavg, jnp.sum(d * d, axis=1, keepdims=True),
                            preferred_element_type=f32)             # (Cout, 1)
            return d * (jax.lax.rsqrt(var_c + eps) * gamma) + beta

        def conv3x3(w_ref, cin):
            # 9 accumulating bf16 MXU dots on lane-shifted views of the haloed
            # row buffer; taps grouped by dx so only 2 full-width edge-mask
            # multiplies remain (no (9*C, M_pad) im2col scratch at all).
            per_dx = []
            for dx in range(3):
                acc = None
                for dy in range(3):
                    k = dy * 3 + dx
                    o = dy * W + dx
                    c = jnp.dot(w_ref[k], hpad_ref[0:cin, o:o + M_pad],
                                preferred_element_type=f32)
                    acc = c if acc is None else acc + c
                per_dx.append(acc)
            return per_dx[0] * cms0 + per_dx[1] + per_dx[2] * cms2

        # ---- zero the halo strips (interior is always fully overwritten) ----
        hpad_ref[:, 0:front] = jnp.zeros((Cmax, front), bf16)
        hpad_ref[:, front + M_pad:front + M_pad + front] = (
            jnp.zeros((Cmax, front), bf16))

        # ---- conv1: patches taken straight from the (Cin, M_pad) input ------
        hpad_ref[0:Cin, front:front + M_pad] = x_ref[...]
        h = conv3x3(w1_ref, Cin) + b1_ref[...]                       # f32 (Cout, M_pad)
        h = silu(group_norm(h, g1_ref[...], be1_ref[...]))

        # ---- time-embedding projection, broadcast over spatial lanes --------
        t = jnp.dot(wt_ref[...], temb_ref[...],
                    preferred_element_type=f32) + bt_ref[...]        # (Cout, 1)
        h = h + t

        # ---- conv2: reuse the same haloed buffer with the activations -------
        hstore = (h * vmask) if need_vmask else h
        hpad_ref[0:Cout, front:front + M_pad] = hstore.astype(bf16)
        h2 = conv3x3(w2_ref, Cout) + b2_ref[...]
        h2 = silu(group_norm(h2, g2_ref[...], be2_ref[...]))

        # ---- shortcut (identity or 1x1 conv) + residual add ------------------
        if identity:
            sc = x_ref[...].astype(f32)
        else:
            sc = jnp.dot(ws_ref[...], x_ref[...],
                         preferred_element_type=f32) + bs_ref[...]
        out_ref[...] = (sc + h2).astype(out_ref.dtype)

    return kernel


def residual_block_pallas(x, temb, params, num_groups=8):
    """x: (N, Cin, H, W) NCHW f32, temb: (N, Tc). Returns (N, Cout, H, W) f32."""
    N, Cin, H, W = x.shape
    Cout = params["b1"].shape[0]
    Tc = temb.shape[1]
    G = num_groups
    assert Cout % G == 0
    M = H * W
    M_pad = _round_up(M, 128)
    front = W + 1
    Lpad = _round_up(M_pad + 2 * front, 128)
    Cmax = max(Cin, Cout)
    identity = (Cin == Cout)
    f32, bf16 = jnp.float32, jnp.bfloat16

    # ---- input as a (N, Cin, M_pad) bf16 slab: no 9x im2col inflation -------
    x_flat = x.reshape(N, Cin, M).astype(bf16)
    if M_pad != M:
        x_flat = jnp.pad(x_flat, ((0, 0), (0, 0), (0, M_pad - M)))
    temb_col = temb.astype(bf16)[:, :, None]                        # (N, Tc, 1)

    # ---- per-tap weights, channels on sublanes, bf16 MXU operands -----------
    w1t = jnp.transpose(params["W1"], (2, 3, 0, 1)).reshape(9, Cout, Cin).astype(bf16)
    w2t = jnp.transpose(params["W2"], (2, 3, 0, 1)).reshape(9, Cout, Cout).astype(bf16)
    wtm = params["Wt"].astype(bf16)                                 # (Cout, Tc)
    if identity:
        wsm = jnp.zeros((1, 1), bf16)       # dummy: never read on the identity path
        bsv = jnp.zeros((1, 1), f32)
    else:
        wsm = params["Ws"][:, :, 0, 0].astype(bf16)                 # (Cout, Cin)
        bsv = params["bs"].reshape(Cout, 1).astype(f32)

    col = lambda v: v.reshape(-1, 1).astype(f32)                    # (Cout, 1) columns
    b1c, g1c, be1c = col(params["b1"]), col(params["g1"]), col(params["be1"])
    btc = col(params["bt"])
    b2c, g2c, be2c = col(params["b2"]), col(params["g2"]), col(params["be2"])

    # group-averaging matrix: gavg @ per-channel-sums == per-group mean per channel
    Cg = Cout // G
    gm = (jnp.arange(Cout)[:, None] // Cg == jnp.arange(G)[None, :]).astype(f32)
    gavg = jnp.dot(gm, gm.T) / float(M * Cg)                        # (Cout, Cout)

    # per-dx edge masks + valid-lane mask (rows: dx=0 edge, valid, dx=2 edge)
    pidx = jnp.arange(M_pad)
    xcol = pidx % W
    pvalid = pidx < M
    colmask = jnp.stack([pvalid & (xcol >= 1),
                         pvalid,
                         pvalid & (xcol <= W - 2)]).astype(f32)     # (3, M_pad)

    kernel = make_kernel(W, Cin, Cout, M, M_pad, identity)

    def inv(arr):                                                   # grid-invariant operand
        zeros = (0,) * arr.ndim
        return pl.BlockSpec(arr.shape, lambda n: zeros)

    grid_spec = pltpu.PrefetchScalarGridSpec(
        num_scalar_prefetch=0,
        grid=(N,),
        in_specs=[
            pl.BlockSpec((None, Cin, M_pad), lambda n: (n, 0, 0)),  # x slab (bf16)
            pl.BlockSpec((None, Tc, 1), lambda n: (n, 0, 0)),       # temb column
            inv(w1t), inv(b1c), inv(g1c), inv(be1c),
            inv(wtm), inv(btc),
            inv(w2t), inv(b2c), inv(g2c), inv(be2c),
            inv(wsm), inv(bsv),
            inv(gavg), inv(colmask),
        ],
        out_specs=pl.BlockSpec((None, Cout, M_pad), lambda n: (n, 0, 0)),
        scratch_shapes=[pltpu.VMEM((Cmax, Lpad), bf16)],  # shared zero-haloed row buffer
    )

    out = pl.pallas_call(
        kernel,
        out_shape=jax.ShapeDtypeStruct((N, Cout, M_pad), f32),
        grid_spec=grid_spec,
        compiler_params=pltpu.CompilerParams(
            dimension_semantics=("parallel",),           # batch steps are independent
            vmem_limit_bytes=48 * 1024 * 1024),          # > 16/32 MiB defaults, < v7x 64 MiB
    )(x_flat, temb_col,
      w1t, b1c, g1c, be1c,
      wtm, btc,
      w2t, b2c, g2c, be2c,
      wsm, bsv, gavg, colmask)

    if M_pad != M:
        out = out[:, :, :M]                              # free when M is a 128-multiple
    return out.reshape(N, Cout, H, W)


# ---------------- pure-JAX reference (for correctness check) -------------
def ref_residual_block(x, temb, params, num_groups=8, eps=1e-5):
    P = jax.lax.Precision.HIGHEST

    def conv(h, w, b, pad):
        y = jax.lax.conv_general_dilated(
            h, w, window_strides=(1, 1), padding=((pad, pad), (pad, pad)),
            dimension_numbers=("NCHW", "OIHW", "NCHW"), precision=P)
        return y + b[None, :, None, None]

    def gn(h, gamma, beta):
        N, C, H, W = h.shape
        G = num_groups
        hg = h.reshape(N, G, C // G, H, W)
        m = hg.mean(axis=(2, 3, 4), keepdims=True)
        v = jnp.mean((hg - m) ** 2, axis=(2, 3, 4), keepdims=True)
        hn = ((hg - m) / jnp.sqrt(v + eps)).reshape(N, C, H, W)
        return hn * gamma[None, :, None, None] + beta[None, :, None, None]

    silu = lambda v: v * jax.nn.sigmoid(v)

    h = silu(gn(conv(x, params["W1"], params["b1"], 1), params["g1"], params["be1"]))
    t = jnp.dot(temb, params["Wt"].T, precision=P) + params["bt"]
    h = h + t[:, :, None, None]
    h = silu(gn(conv(h, params["W2"], params["b2"], 1), params["g2"], params["be2"]))
    if x.shape[1] != params["b1"].shape[0]:
        xs = conv(x, params["Ws"], params["bs"], 0)
    else:
        xs = x
    return xs + h


if __name__ == "__main__":
    def make_params(k, Cin, Cout, Tc, identity):
        ks = jax.random.split(k, 14)
        p = {
            "W1": 0.1 * jax.random.normal(ks[0], (Cout, Cin, 3, 3), jnp.float32),
            "b1": 0.1 * jax.random.normal(ks[1], (Cout,), jnp.float32),
            "g1": 1.0 + 0.1 * jax.random.normal(ks[2], (Cout,), jnp.float32),
            "be1": 0.1 * jax.random.normal(ks[3], (Cout,), jnp.float32),
            "Wt": 0.1 * jax.random.normal(ks[4], (Cout, Tc), jnp.float32),
            "bt": 0.1 * jax.random.normal(ks[5], (Cout,), jnp.float32),
            "W2": 0.1 * jax.random.normal(ks[6], (Cout, Cout, 3, 3), jnp.float32),
            "b2": 0.1 * jax.random.normal(ks[7], (Cout,), jnp.float32),
            "g2": 1.0 + 0.1 * jax.random.normal(ks[8], (Cout,), jnp.float32),
            "be2": 0.1 * jax.random.normal(ks[9], (Cout,), jnp.float32),
        }
        if not identity:
            p["Ws"] = 0.1 * jax.random.normal(ks[10], (Cout, Cin, 1, 1), jnp.float32)
            p["bs"] = 0.1 * jax.random.normal(ks[11], (Cout,), jnp.float32)
        return p, ks[12], ks[13]

    # --- 1x1-conv shortcut path (Cin != Cout) ------------------------------
    N, Cin, Cout, Tc, H, W = 2, 4, 16, 32, 16, 16
    params, kx, kt = make_params(jax.random.PRNGKey(0), Cin, Cout, Tc, identity=False)
    x = jax.random.normal(kx, (N, Cin, H, W), jnp.float32)
    temb = jax.random.normal(kt, (N, Tc), jnp.float32)
    out = jax.block_until_ready(residual_block_pallas(x, temb, params))
    ref = ref_residual_block(x, temb, params)
    np.testing.assert_allclose(np.asarray(out), np.asarray(ref), rtol=2e-2, atol=2e-2)

    # --- identity shortcut path (Cin == Cout) ------------------------------
    params2, kx2, kt2 = make_params(jax.random.PRNGKey(1), Cout, Cout, Tc, identity=True)
    x2 = jax.random.normal(kx2, (N, Cout, H, W), jnp.float32)
    temb2 = jax.random.normal(kt2, (N, Tc), jnp.float32)
    out2 = jax.block_until_ready(residual_block_pallas(x2, temb2, params2))
    ref2 = ref_residual_block(x2, temb2, params2)
    np.testing.assert_allclose(np.asarray(out2), np.asarray(ref2), rtol=2e-2, atol=2e-2)

    print("KERNEL_OK")
</pallas_src>

<mosaic_0001>
module attributes {stable_mosaic.version = 11 : i64} {
  func.func @kernel(%arg0: i32, %arg1: memref<1x4x256xbf16, #tpu.memory_space<vmem>>, %arg2: memref<1x32x1xbf16, #tpu.memory_space<vmem>>, %arg3: memref<9x16x4xbf16, #tpu.memory_space<vmem>>, %arg4: memref<16x1xf32, #tpu.memory_space<vmem>>, %arg5: memref<16x1xf32, #tpu.memory_space<vmem>>, %arg6: memref<16x1xf32, #tpu.memory_space<vmem>>, %arg7: memref<16x32xbf16, #tpu.memory_space<vmem>>, %arg8: memref<16x1xf32, #tpu.memory_space<vmem>>, %arg9: memref<9x16x16xbf16, #tpu.memory_space<vmem>>, %arg10: memref<16x1xf32, #tpu.memory_space<vmem>>, %arg11: memref<16x1xf32, #tpu.memory_space<vmem>>, %arg12: memref<16x1xf32, #tpu.memory_space<vmem>>, %arg13: memref<16x4xbf16, #tpu.memory_space<vmem>>, %arg14: memref<16x1xf32, #tpu.memory_space<vmem>>, %arg15: memref<16x16xf32, #tpu.memory_space<vmem>>, %arg16: memref<3x256xf32, #tpu.memory_space<vmem>>, %arg17: memref<1x16x256xf32, #tpu.memory_space<vmem>>, %arg18: memref<16x384xbf16, #tpu.memory_space<vmem>>) attributes {dimension_semantics = [#tpu.dimension_semantics<parallel>], iteration_bounds = array<i64: 2>, scalar_prefetch = 0 : i64, scratch_operands = 1 : i64, tpu.core_type = #tpu.core_type<tc>, window_params = [{transform_indices = @transform_0, window_bounds = array<i64: 1, 4, 256>}, {transform_indices = @transform_1, window_bounds = array<i64: 1, 32, 1>}, {pipeline_mode = #tpu.pipeline_mode<synchronous>, transform_indices = @transform_2, window_bounds = array<i64: 9, 16, 4>}, {pipeline_mode = #tpu.pipeline_mode<synchronous>, transform_indices = @transform_3, window_bounds = array<i64: 16, 1>}, {pipeline_mode = #tpu.pipeline_mode<synchronous>, transform_indices = @transform_4, window_bounds = array<i64: 16, 1>}, {pipeline_mode = #tpu.pipeline_mode<synchronous>, transform_indices = @transform_5, window_bounds = array<i64: 16, 1>}, {pipeline_mode = #tpu.pipeline_mode<synchronous>, transform_indices = @transform_6, window_bounds = array<i64: 16, 32>}, {pipeline_mode = #tpu.pipeline_mode<synchronous>, transform_indices = @transform_7, window_bounds = array<i64: 16, 1>}, {pipeline_mode = #tpu.pipeline_mode<synchronous>, transform_indices = @transform_8, window_bounds = array<i64: 9, 16, 16>}, {pipeline_mode = #tpu.pipeline_mode<synchronous>, transform_indices = @transform_9, window_bounds = array<i64: 16, 1>}, {pipeline_mode = #tpu.pipeline_mode<synchronous>, transform_indices = @transform_10, window_bounds = array<i64: 16, 1>}, {pipeline_mode = #tpu.pipeline_mode<synchronous>, transform_indices = @transform_11, window_bounds = array<i64: 16, 1>}, {pipeline_mode = #tpu.pipeline_mode<synchronous>, transform_indices = @transform_12, window_bounds = array<i64: 16, 4>}, {pipeline_mode = #tpu.pipeline_mode<synchronous>, transform_indices = @transform_13, window_bounds = array<i64: 16, 1>}, {pipeline_mode = #tpu.pipeline_mode<synchronous>, transform_indices = @transform_14, window_bounds = array<i64: 16, 16>}, {pipeline_mode = #tpu.pipeline_mode<synchronous>, transform_indices = @transform_15, window_bounds = array<i64: 3, 256>}, {transform_indices = @transform_16, window_bounds = array<i64: 1, 16, 256>}]} {
    %c0 = arith.constant 0 : index
    %c0_0 = arith.constant 0 : index
    %0 = vector.load %arg16[%c0, %c0_0] : memref<3x256xf32, #tpu.memory_space<vmem>>, vector<1x256xf32>
    %c2 = arith.constant 2 : index
    %c0_1 = arith.constant 0 : index
    %1 = vector.load %arg16[%c2, %c0_1] : memref<3x256xf32, #tpu.memory_space<vmem>>, vector<1x256xf32>
    %c0_2 = arith.constant 0 : index
    %c0_3 = arith.constant 0 : index
    %2 = vector.load %arg15[%c0_2, %c0_3] : memref<16x16xf32, #tpu.memory_space<vmem>>, vector<16x16xf32>
    %cst = arith.constant 0.000000e+00 : bf16
    %3 = vector.broadcast %cst : bf16 to vector<16x17xbf16>
    %c0_4 = arith.constant 0 : index
    %c0_5 = arith.constant 0 : index
    %4 = vector.load %arg18[%c0_4, %c0_5] : memref<16x384xbf16, #tpu.memory_space<vmem>>, vector<16x17xbf16>
    tpu.vector_store %arg18[%c0_4, %c0_5], %3 {strides = array<i32>} : memref<16x384xbf16, #tpu.memory_space<vmem>>, vector<16x17xbf16>,
    %cst_6 = arith.constant 0.000000e+00 : bf16
    %5 = vector.broadcast %cst_6 : bf16 to vector<16x17xbf16>
    %c0_7 = arith.constant 0 : index
    %c273 = arith.constant 273 : index
    %6 = vector.load %arg18[%c0_7, %c273] : memref<16x384xbf16, #tpu.memory_space<vmem>>, vector<16x17xbf16>
    tpu.vector_store %arg18[%c0_7, %c273], %5 {strides = array<i32>} : memref<16x384xbf16, #tpu.memory_space<vmem>>, vector<16x17xbf16>,
    %c0_8 = arith.constant 0 : index
    %c0_9 = arith.constant 0 : index
    %c0_10 = arith.constant 0 : index
    %7 = vector.load %arg1[%c0_8, %c0_9, %c0_10] : memref<1x4x256xbf16, #tpu.memory_space<vmem>>, vector<1x4x256xbf16>
    %8 = vector.shape_cast %7 : vector<1x4x256xbf16> to vector<4x256xbf16>
    %c0_11 = arith.constant 0 : index
    %c17 = arith.constant 17 : index
    %9 = vector.load %arg18[%c0_11, %c17] : memref<16x384xbf16, #tpu.memory_space<vmem>>, vector<4x256xbf16>
    tpu.vector_store %arg18[%c0_11, %c17], %8 {strides = array<i32>} : memref<16x384xbf16, #tpu.memory_space<vmem>>, vector<4x256xbf16>,
    %c0_12 = arith.constant 0 : index
    %c0_13 = arith.constant 0 : index
    %c0_14 = arith.constant 0 : index
    %10 = vector.load %arg3[%c0_12, %c0_13, %c0_14] : memref<9x16x4xbf16, #tpu.memory_space<vmem>>, vector<1x16x4xbf16>
    %11 = vector.shape_cast %10 : vector<1x16x4xbf16> to vector<16x4xbf16>
    %c0_15 = arith.constant 0 : index
    %c0_16 = arith.constant 0 : index
    %12 = vector.load %arg18[%c0_15, %c0_16] : memref<16x384xbf16, #tpu.memory_space<vmem>>, vector<4x256xbf16>
    %cst_17 = arith.constant dense<0.000000e+00> : vector<16x256xf32>
    %13 = tpu.matmul %11, %12, %cst_17 {dimension_numbers = #tpu.dot_dimension_numbers<[1], [0], [0], [1], [0, 0, 1, 1], [], []>} : vector<16x4xbf16>, vector<4x256xbf16>, vector<16x256xf32> -> vector<16x256xf32>
    %c3 = arith.constant 3 : index
    %c0_18 = arith.constant 0 : index
    %c0_19 = arith.constant 0 : index
    %14 = vector.load %arg3[%c3, %c0_18, %c0_19] : memref<9x16x4xbf16, #tpu.memory_space<vmem>>, vector<1x16x4xbf16>
    %15 = vector.shape_cast %14 : vector<1x16x4xbf16> to vector<16x4xbf16>
    %c0_20 = arith.constant 0 : index
    %c16 = arith.constant 16 : index
    %16 = vector.load %arg18[%c0_20, %c16] : memref<16x384xbf16, #tpu.memory_space<vmem>>, vector<4x256xbf16>
    %cst_21 = arith.constant dense<0.000000e+00> : vector<16x256xf32>
    %17 = tpu.matmul %15, %16, %cst_21 {dimension_numbers = #tpu.dot_dimension_numbers<[1], [0], [0], [1], [0, 0, 1, 1], [], []>} : vector<16x4xbf16>, vector<4x256xbf16>, vector<16x256xf32> -> vector<16x256xf32>
    %18 = arith.addf %13, %17 : vector<16x256xf32>
    %c6 = arith.constant 6 : index
    %c0_22 = arith.constant 0 : index
    %c0_23 = arith.constant 0 : index
    %19 = vector.load %arg3[%c6, %c0_22, %c0_23] : memref<9x16x4xbf16, #tpu.memory_space<vmem>>, vector<1x16x4xbf16>
    %20 = vector.shape_cast %19 : vector<1x16x4xbf16> to vector<16x4xbf16>
    %c0_24 = arith.constant 0 : index
    %c32 = arith.constant 32 : index
    %21 = vector.load %arg18[%c0_24, %c32] : memref<16x384xbf16, #tpu.memory_space<vmem>>, vector<4x256xbf16>
    %cst_25 = arith.constant dense<0.000000e+00> : vector<16x256xf32>
    %22 = tpu.matmul %20, %21, %cst_25 {dimension_numbers = #tpu.dot_dimension_numbers<[1], [0], [0], [1], [0, 0, 1, 1], [], []>} : vector<16x4xbf16>, vector<4x256xbf16>, vector<16x256xf32> -> vector<16x256xf32>
    %23 = arith.addf %18, %22 : vector<16x256xf32>
    %c1 = arith.constant 1 : index
    %c0_26 = arith.constant 0 : index
    %c0_27 = arith.constant 0 : index
    %24 = vector.load %arg3[%c1, %c0_26, %c0_27] : memref<9x16x4xbf16, #tpu.memory_space<vmem>>, vector<1x16x4xbf16>
    %25 = vector.shape_cast %24 : vector<1x16x4xbf16> to vector<16x4xbf16>
    %c0_28 = arith.constant 0 : index
    %c1_29 = arith.constant 1 : index
    %26 = vector.load %arg18[%c0_28, %c1_29] : memref<16x384xbf16, #tpu.memory_space<vmem>>, vector<4x256xbf16>
    %cst_30 = arith.constant dense<0.000000e+00> : vector<16x256xf32>
    %27 = tpu.matmul %25, %26, %cst_30 {dimension_numbers = #tpu.dot_dimension_numbers<[1], [0], [0], [1], [0, 0, 1, 1], [], []>} : vector<16x4xbf16>, vector<4x256xbf16>, vector<16x256xf32> -> vector<16x256xf32>
    %c4 = arith.constant 4 : index
    %c0_31 = arith.constant 0 : index
    %c0_32 = arith.constant 0 : index
    %28 = vector.load %arg3[%c4, %c0_31, %c0_32] : memref<9x16x4xbf16, #tpu.memory_space<vmem>>, vector<1x16x4xbf16>
    %29 = vector.shape_cast %28 : vector<1x16x4xbf16> to vector<16x4xbf16>
    %c0_33 = arith.constant 0 : index
    %c17_34 = arith.constant 17 : index
    %30 = vector.load %arg18[%c0_33, %c17_34] : memref<16x384xbf16, #tpu.memory_space<vmem>>, vector<4x256xbf16>
    %cst_35 = arith.constant dense<0.000000e+00> : vector<16x256xf32>
    %31 = tpu.matmul %29, %30, %cst_35 {dimension_numbers = #tpu.dot_dimension_numbers<[1], [0], [0], [1], [0, 0, 1, 1], [], []>} : vector<16x4xbf16>, vector<4x256xbf16>, vector<16x256xf32> -> vector<16x256xf32>
    %32 = arith.addf %27, %31 : vector<16x256xf32>
    %c7 = arith.constant 7 : index
    %c0_36 = arith.constant 0 : index
    %c0_37 = arith.constant 0 : index
    %33 = vector.load %arg3[%c7, %c0_36, %c0_37] : memref<9x16x4xbf16, #tpu.memory_space<vmem>>, vector<1x16x4xbf16>
    %34 = vector.shape_cast %33 : vector<1x16x4xbf16> to vector<16x4xbf16>
    %c0_38 = arith.constant 0 : index
    %c33 = arith.constant 33 : index
    %35 = vector.load %arg18[%c0_38, %c33] : memref<16x384xbf16, #tpu.memory_space<vmem>>, vector<4x256xbf16>
    %cst_39 = arith.constant dense<0.000000e+00> : vector<16x256xf32>
    %36 = tpu.matmul %34, %35, %cst_39 {dimension_numbers = #tpu.dot_dimension_numbers<[1], [0], [0], [1], [0, 0, 1, 1], [], []>} : vector<16x4xbf16>, vector<4x256xbf16>, vector<16x256xf32> -> vector<16x256xf32>
    %37 = arith.addf %32, %36 : vector<16x256xf32>
    %c2_40 = arith.constant 2 : index
    %c0_41 = arith.constant 0 : index
    %c0_42 = arith.constant 0 : index
    %38 = vector.load %arg3[%c2_40, %c0_41, %c0_42] : memref<9x16x4xbf16, #tpu.memory_space<vmem>>, vector<1x16x4xbf16>
    %39 = vector.shape_cast %38 : vector<1x16x4xbf16> to vector<16x4xbf16>
    %c0_43 = arith.constant 0 : index
    %c2_44 = arith.constant 2 : index
    %40 = vector.load %arg18[%c0_43, %c2_44] : memref<16x384xbf16, #tpu.memory_space<vmem>>, vector<4x256xbf16>
    %cst_45 = arith.constant dense<0.000000e+00> : vector<16x256xf32>
    %41 = tpu.matmul %39, %40, %cst_45 {dimension_numbers = #tpu.dot_dimension_numbers<[1], [0], [0], [1], [0, 0, 1, 1], [], []>} : vector<16x4xbf16>, vector<4x256xbf16>, vector<16x256xf32> -> vector<16x256xf32>
    %c5 = arith.constant 5 : index
    %c0_46 = arith.constant 0 : index
    %c0_47 = arith.constant 0 : index
    %42 = vector.load %arg3[%c5, %c0_46, %c0_47] : memref<9x16x4xbf16, #tpu.memory_space<vmem>>, vector<1x16x4xbf16>
    %43 = vector.shape_cast %42 : vector<1x16x4xbf16> to vector<16x4xbf16>
    %c0_48 = arith.constant 0 : index
    %c18 = arith.constant 18 : index
    %44 = vector.load %arg18[%c0_48, %c18] : memref<16x384xbf16, #tpu.memory_space<vmem>>, vector<4x256xbf16>
    %cst_49 = arith.constant dense<0.000000e+00> : vector<16x256xf32>
    %45 = tpu.matmul %43, %44, %cst_49 {dimension_numbers = #tpu.dot_dimension_numbers<[1], [0], [0], [1], [0, 0, 1, 1], [], []>} : vector<16x4xbf16>, vector<4x256xbf16>, vector<16x256xf32> -> vector<16x256xf32>
    %46 = arith.addf %41, %45 : vector<16x256xf32>
    %c8 = arith.constant 8 : index
    %c0_50 = arith.constant 0 : index
    %c0_51 = arith.constant 0 : index
    %47 = vector.load %arg3[%c8, %c0_50, %c0_51] : memref<9x16x4xbf16, #tpu.memory_space<vmem>>, vector<1x16x4xbf16>
    %48 = vector.shape_cast %47 : vector<1x16x4xbf16> to vector<16x4xbf16>
    %c0_52 = arith.constant 0 : index
    %c34 = arith.constant 34 : index
    %49 = vector.load %arg18[%c0_52, %c34] : memref<16x384xbf16, #tpu.memory_space<vmem>>, vector<4x256xbf16>
    %cst_53 = arith.constant dense<0.000000e+00> : vector<16x256xf32>
    %50 = tpu.matmul %48, %49, %cst_53 {dimension_numbers = #tpu.dot_dimension_numbers<[1], [0], [0], [1], [0, 0, 1, 1], [], []>} : vector<16x4xbf16>, vector<4x256xbf16>, vector<16x256xf32> -> vector<16x256xf32>
    %51 = arith.addf %46, %50 : vector<16x256xf32>
    %52 = vector.broadcast %0 : vector<1x256xf32> to vector<16x256xf32>
    %53 = arith.mulf %23, %52 : vector<16x256xf32>
    %54 = arith.addf %53, %37 : vector<16x256xf32>
    %55 = vector.broadcast %1 : vector<1x256xf32> to vector<16x256xf32>
    %56 = arith.mulf %51, %55 : vector<16x256xf32>
    %57 = arith.addf %54, %56 : vector<16x256xf32>
    %c0_54 = arith.constant 0 : index
    %c0_55 = arith.constant 0 : index
    %58 = vector.load %arg4[%c0_54, %c0_55] : memref<16x1xf32, #tpu.memory_space<vmem>>, vector<16x1xf32>
    %59 = vector.broadcast %58 : vector<16x1xf32> to vector<16x256xf32>
    %60 = arith.addf %57, %59 : vector<16x256xf32>
    %c0_56 = arith.constant 0 : index
    %c0_57 = arith.constant 0 : index
    %61 = vector.load %arg5[%c0_56, %c0_57] : memref<16x1xf32, #tpu.memory_space<vmem>>, vector<16x1xf32>
    %c0_58 = arith.constant 0 : index
    %c0_59 = arith.constant 0 : index
    %62 = vector.load %arg6[%c0_58, %c0_59] : memref<16x1xf32, #tpu.memory_space<vmem>>, vector<16x1xf32>
    %cst_60 = arith.constant dense<0.000000e+00> : vector<16xf32>
    %63 = vector.multi_reduction <add>, %60, %cst_60 [1] : vector<16x256xf32> to vector<16xf32>
    %64 = vector.shape_cast %63 : vector<16xf32> to vector<16x1xf32>
    %cst_61 = arith.constant dense<0.000000e+00> : vector<16x1xf32>
    %65 = tpu.matmul %2, %64, %cst_61 {dimension_numbers = #tpu.dot_dimension_numbers<[1], [0], [0], [1], [0, 0, 1, 1], [], []>} : vector<16x16xf32>, vector<16x1xf32>, vector<16x1xf32> -> vector<16x1xf32>
    %66 = vector.broadcast %65 : vector<16x1xf32> to vector<16x256xf32>
    %67 = arith.subf %60, %66 : vector<16x256xf32>
    %68 = arith.mulf %67, %67 : vector<16x256xf32>
    %cst_62 = arith.constant dense<0.000000e+00> : vector<16xf32>
    %69 = vector.multi_reduction <add>, %68, %cst_62 [1] : vector<16x256xf32> to vector<16xf32>
    %70 = vector.shape_cast %69 : vector<16xf32> to vector<16x1xf32>
    %cst_63 = arith.constant dense<0.000000e+00> : vector<16x1xf32>
    %71 = tpu.matmul %2, %70, %cst_63 {dimension_numbers = #tpu.dot_dimension_numbers<[1], [0], [0], [1], [0, 0, 1, 1], [], []>} : vector<16x16xf32>, vector<16x1xf32>, vector<16x1xf32> -> vector<16x1xf32>
    %cst_64 = arith.constant 9.99999974E-6 : f32
    %72 = vector.broadcast %cst_64 : f32 to vector<16x1xf32>
    %73 = arith.addf %71, %72 : vector<16x1xf32>
    %74 = math.rsqrt %73 : vector<16x1xf32>
    %75 = arith.mulf %74, %61 : vector<16x1xf32>
    %76 = vector.broadcast %75 : vector<16x1xf32> to vector<16x256xf32>
    %77 = arith.mulf %67, %76 : vector<16x256xf32>
    %78 = vector.broadcast %62 : vector<16x1xf32> to vector<16x256xf32>
    %79 = arith.addf %77, %78 : vector<16x256xf32>
    %cst_65 = arith.constant 0.000000e+00 : f32
    %80 = vector.broadcast %cst_65 : f32 to vector<16x256xf32>
    %81 = arith.subf %80, %79 : vector<16x256xf32>
    %82 = math.exp %81 : vector<16x256xf32>
    %cst_66 = arith.constant 1.000000e+00 : f32
    %83 = vector.broadcast %cst_66 : f32 to vector<16x256xf32>
    %84 = arith.addf %83, %82 : vector<16x256xf32>
    %85 = tpu.reciprocal %84 {approx = true} : vector<16x256xf32> -> vector<16x256xf32>
    %86 = arith.mulf %79, %85 : vector<16x256xf32>
    %c0_67 = arith.constant 0 : index
    %c0_68 = arith.constant 0 : index
    %87 = vector.load %arg7[%c0_67, %c0_68] : memref<16x32xbf16, #tpu.memory_space<vmem>>, vector<16x32xbf16>
    %c0_69 = arith.constant 0 : index
    %c0_70 = arith.constant 0 : index
    %c0_71 = arith.constant 0 : index
    %88 = vector.load %arg2[%c0_69, %c0_70, %c0_71] : memref<1x32x1xbf16, #tpu.memory_space<vmem>>, vector<1x32x1xbf16>
    %89 = vector.shape_cast %88 : vector<1x32x1xbf16> to vector<32x1xbf16>
    %cst_72 = arith.constant dense<0.000000e+00> : vector<16x1xf32>
    %90 = tpu.matmul %87, %89, %cst_72 {dimension_numbers = #tpu.dot_dimension_numbers<[1], [0], [0], [1], [0, 0, 1, 1], [], []>} : vector<16x32xbf16>, vector<32x1xbf16>, vector<16x1xf32> -> vector<16x1xf32>
    %c0_73 = arith.constant 0 : index
    %c0_74 = arith.constant 0 : index
    %91 = vector.load %arg8[%c0_73, %c0_74] : memref<16x1xf32, #tpu.memory_space<vmem>>, vector<16x1xf32>
    %92 = arith.addf %90, %91 : vector<16x1xf32>
    %93 = vector.broadcast %92 : vector<16x1xf32> to vector<16x256xf32>
    %94 = arith.addf %86, %93 : vector<16x256xf32>
    %95 = arith.truncf %94 : vector<16x256xf32> to vector<16x256xbf16>
    %c0_75 = arith.constant 0 : index
    %c17_76 = arith.constant 17 : index
    %96 = vector.load %arg18[%c0_75, %c17_76] : memref<16x384xbf16, #tpu.memory_space<vmem>>, vector<16x256xbf16>
    tpu.vector_store %arg18[%c0_75, %c17_76], %95 {strides = array<i32>} : memref<16x384xbf16, #tpu.memory_space<vmem>>, vector<16x256xbf16>,
    %c0_77 = arith.constant 0 : index
    %c0_78 = arith.constant 0 : index
    %c0_79 = arith.constant 0 : index
    %97 = vector.load %arg9[%c0_77, %c0_78, %c0_79] : memref<9x16x16xbf16, #tpu.memory_space<vmem>>, vector<1x16x16xbf16>
    %98 = vector.shape_cast %97 : vector<1x16x16xbf16> to vector<16x16xbf16>
    %c0_80 = arith.constant 0 : index
    %c0_81 = arith.constant 0 : index
    %99 = vector.load %arg18[%c0_80, %c0_81] : memref<16x384xbf16, #tpu.memory_space<vmem>>, vector<16x256xbf16>
    %cst_82 = arith.constant dense<0.000000e+00> : vector<16x256xf32>
    %100 = tpu.matmul %98, %99, %cst_82 {dimension_numbers = #tpu.dot_dimension_numbers<[1], [0], [0], [1], [0, 0, 1, 1], [], []>} : vector<16x16xbf16>, vector<16x256xbf16>, vector<16x256xf32> -> vector<16x256xf32>
    %c3_83 = arith.constant 3 : index
    %c0_84 = arith.constant 0 : index
    %c0_85 = arith.constant 0 : index
    %101 = vector.load %arg9[%c3_83, %c0_84, %c0_85] : memref<9x16x16xbf16, #tpu.memory_space<vmem>>, vector<1x16x16xbf16>
    %102 = vector.shape_cast %101 : vector<1x16x16xbf16> to vector<16x16xbf16>
    %c0_86 = arith.constant 0 : index
    %c16_87 = arith.constant 16 : index
    %103 = vector.load %arg18[%c0_86, %c16_87] : memref<16x384xbf16, #tpu.memory_space<vmem>>, vector<16x256xbf16>
    %cst_88 = arith.constant dense<0.000000e+00> : vector<16x256xf32>
    %104 = tpu.matmul %102, %103, %cst_88 {dimension_numbers = #tpu.dot_dimension_numbers<[1], [0], [0], [1], [0, 0, 1, 1], [], []>} : vector<16x16xbf16>, vector<16x256xbf16>, vector<16x256xf32> -> vector<16x256xf32>
    %105 = arith.addf %100, %104 : vector<16x256xf32>
    %c6_89 = arith.constant 6 : index
    %c0_90 = arith.constant 0 : index
    %c0_91 = arith.constant 0 : index
    %106 = vector.load %arg9[%c6_89, %c0_90, %c0_91] : memref<9x16x16xbf16, #tpu.memory_space<vmem>>, vector<1x16x16xbf16>
    %107 = vector.shape_cast %106 : vector<1x16x16xbf16> to vector<16x16xbf16>
    %c0_92 = arith.constant 0 : index
    %c32_93 = arith.constant 32 : index
    %108 = vector.load %arg18[%c0_92, %c32_93] : memref<16x384xbf16, #tpu.memory_space<vmem>>, vector<16x256xbf16>
    %cst_94 = arith.constant dense<0.000000e+00> : vector<16x256xf32>
    %109 = tpu.matmul %107, %108, %cst_94 {dimension_numbers = #tpu.dot_dimension_numbers<[1], [0], [0], [1], [0, 0, 1, 1], [], []>} : vector<16x16xbf16>, vector<16x256xbf16>, vector<16x256xf32> -> vector<16x256xf32>
    %110 = arith.addf %105, %109 : vector<16x256xf32>
    %c1_95 = arith.constant 1 : index
    %c0_96 = arith.constant 0 : index
    %c0_97 = arith.constant 0 : index
    %111 = vector.load %arg9[%c1_95, %c0_96, %c0_97] : memref<9x16x16xbf16, #tpu.memory_space<vmem>>, vector<1x16x16xbf16>
    %112 = vector.shape_cast %111 : vector<1x16x16xbf16> to vector<16x16xbf16>
    %c0_98 = arith.constant 0 : index
    %c1_99 = arith.constant 1 : index
    %113 = vector.load %arg18[%c0_98, %c1_99] : memref<16x384xbf16, #tpu.memory_space<vmem>>, vector<16x256xbf16>
    %cst_100 = arith.constant dense<0.000000e+00> : vector<16x256xf32>
    %114 = tpu.matmul %112, %113, %cst_100 {dimension_numbers = #tpu.dot_dimension_numbers<[1], [0], [0], [1], [0, 0, 1, 1], [], []>} : vector<16x16xbf16>, vector<16x256xbf16>, vector<16x256xf32> -> vector<16x256xf32>
    %c4_101 = arith.constant 4 : index
    %c0_102 = arith.constant 0 : index
    %c0_103 = arith.constant 0 : index
    %115 = vector.load %arg9[%c4_101, %c0_102, %c0_103] : memref<9x16x16xbf16, #tpu.memory_space<vmem>>, vector<1x16x16xbf16>
    %116 = vector.shape_cast %115 : vector<1x16x16xbf16> to vector<16x16xbf16>
    %c0_104 = arith.constant 0 : index
    %c17_105 = arith.constant 17 : index
    %117 = vector.load %arg18[%c0_104, %c17_105] : memref<16x384xbf16, #tpu.memory_space<vmem>>, vector<16x256xbf16>
    %cst_106 = arith.constant dense<0.000000e+00> : vector<16x256xf32>
    %118 = tpu.matmul %116, %117, %cst_106 {dimension_numbers = #tpu.dot_dimension_numbers<[1], [0], [0], [1], [0, 0, 1, 1], [], []>} : vector<16x16xbf16>, vector<16x256xbf16>, vector<16x256xf32> -> vector<16x256xf32>
    %119 = arith.addf %114, %118 : vector<16x256xf32>
    %c7_107 = arith.constant 7 : index
    %c0_108 = arith.constant 0 : index
    %c0_109 = arith.constant 0 : index
    %120 = vector.load %arg9[%c7_107, %c0_108, %c0_109] : memref<9x16x16xbf16, #tpu.memory_space<vmem>>, vector<1x16x16xbf16>
    %121 = vector.shape_cast %120 : vector<1x16x16xbf16> to vector<16x16xbf16>
    %c0_110 = arith.constant 0 : index
    %c33_111 = arith.constant 33 : index
    %122 = vector.load %arg18[%c0_110, %c33_111] : memref<16x384xbf16, #tpu.memory_space<vmem>>, vector<16x256xbf16>
    %cst_112 = arith.constant dense<0.000000e+00> : vector<16x256xf32>
    %123 = tpu.matmul %121, %122, %cst_112 {dimension_numbers = #tpu.dot_dimension_numbers<[1], [0], [0], [1], [0, 0, 1, 1], [], []>} : vector<16x16xbf16>, vector<16x256xbf16>, vector<16x256xf32> -> vector<16x256xf32>
    %124 = arith.addf %119, %123 : vector<16x256xf32>
    %c2_113 = arith.constant 2 : index
    %c0_114 = arith.constant 0 : index
    %c0_115 = arith.constant 0 : index
    %125 = vector.load %arg9[%c2_113, %c0_114, %c0_115] : memref<9x16x16xbf16, #tpu.memory_space<vmem>>, vector<1x16x16xbf16>
    %126 = vector.shape_cast %125 : vector<1x16x16xbf16> to vector<16x16xbf16>
    %c0_116 = arith.constant 0 : index
    %c2_117 = arith.constant 2 : index
    %127 = vector.load %arg18[%c0_116, %c2_117] : memref<16x384xbf16, #tpu.memory_space<vmem>>, vector<16x256xbf16>
    %cst_118 = arith.constant dense<0.000000e+00> : vector<16x256xf32>
    %128 = tpu.matmul %126, %127, %cst_118 {dimension_numbers = #tpu.dot_dimension_numbers<[1], [0], [0], [1], [0, 0, 1, 1], [], []>} : vector<16x16xbf16>, vector<16x256xbf16>, vector<16x256xf32> -> vector<16x256xf32>
    %c5_119 = arith.constant 5 : index
    %c0_120 = arith.constant 0 : index
    %c0_121 = arith.constant 0 : index
    %129 = vector.load %arg9[%c5_119, %c0_120, %c0_121] : memref<9x16x16xbf16, #tpu.memory_space<vmem>>, vector<1x16x16xbf16>
    %130 = vector.shape_cast %129 : vector<1x16x16xbf16> to vector<16x16xbf16>
    %c0_122 = arith.constant 0 : index
    %c18_123 = arith.constant 18 : index
    %131 = vector.load %arg18[%c0_122, %c18_123] : memref<16x384xbf16, #tpu.memory_space<vmem>>, vector<16x256xbf16>
    %cst_124 = arith.constant dense<0.000000e+00> : vector<16x256xf32>
    %132 = tpu.matmul %130, %131, %cst_124 {dimension_numbers = #tpu.dot_dimension_numbers<[1], [0], [0], [1], [0, 0, 1, 1], [], []>} : vector<16x16xbf16>, vector<16x256xbf16>, vector<16x256xf32> -> vector<16x256xf32>
    %133 = arith.addf %128, %132 : vector<16x256xf32>
    %c8_125 = arith.constant 8 : index
    %c0_126 = arith.constant 0 : index
    %c0_127 = arith.constant 0 : index
    %134 = vector.load %arg9[%c8_125, %c0_126, %c0_127] : memref<9x16x16xbf16, #tpu.memory_space<vmem>>, vector<1x16x16xbf16>
    %135 = vector.shape_cast %134 : vector<1x16x16xbf16> to vector<16x16xbf16>
    %c0_128 = arith.constant 0 : index
    %c34_129 = arith.constant 34 : index
    %136 = vector.load %arg18[%c0_128, %c34_129] : memref<16x384xbf16, #tpu.memory_space<vmem>>, vector<16x256xbf16>
    %cst_130 = arith.constant dense<0.000000e+00> : vector<16x256xf32>
    %137 = tpu.matmul %135, %136, %cst_130 {dimension_numbers = #tpu.dot_dimension_numbers<[1], [0], [0], [1], [0, 0, 1, 1], [], []>} : vector<16x16xbf16>, vector<16x256xbf16>, vector<16x256xf32> -> vector<16x256xf32>
    %138 = arith.addf %133, %137 : vector<16x256xf32>
    %139 = vector.broadcast %0 : vector<1x256xf32> to vector<16x256xf32>
    %140 = arith.mulf %110, %139 : vector<16x256xf32>
    %141 = arith.addf %140, %124 : vector<16x256xf32>
    %142 = vector.broadcast %1 : vector<1x256xf32> to vector<16x256xf32>
    %143 = arith.mulf %138, %142 : vector<16x256xf32>
    %144 = arith.addf %141, %143 : vector<16x256xf32>
    %c0_131 = arith.constant 0 : index
    %c0_132 = arith.constant 0 : index
    %145 = vector.load %arg10[%c0_131, %c0_132] : memref<16x1xf32, #tpu.memory_space<vmem>>, vector<16x1xf32>
    %146 = vector.broadcast %145 : vector<16x1xf32> to vector<16x256xf32>
    %147 = arith.addf %144, %146 : vector<16x256xf32>
    %c0_133 = arith.constant 0 : index
    %c0_134 = arith.constant 0 : index
    %148 = vector.load %arg11[%c0_133, %c0_134] : memref<16x1xf32, #tpu.memory_space<vmem>>, vector<16x1xf32>
    %c0_135 = arith.constant 0 : index
    %c0_136 = arith.constant 0 : index
    %149 = vector.load %arg12[%c0_135, %c0_136] : memref<16x1xf32, #tpu.memory_space<vmem>>, vector<16x1xf32>
    %cst_137 = arith.constant dense<0.000000e+00> : vector<16xf32>
    %150 = vector.multi_reduction <add>, %147, %cst_137 [1] : vector<16x256xf32> to vector<16xf32>
    %151 = vector.shape_cast %150 : vector<16xf32> to vector<16x1xf32>
    %cst_138 = arith.constant dense<0.000000e+00> : vector<16x1xf32>
    %152 = tpu.matmul %2, %151, %cst_138 {dimension_numbers = #tpu.dot_dimension_numbers<[1], [0], [0], [1], [0, 0, 1, 1], [], []>} : vector<16x16xf32>, vector<16x1xf32>, vector<16x1xf32> -> vector<16x1xf32>
    %153 = vector.broadcast %152 : vector<16x1xf32> to vector<16x256xf32>
    %154 = arith.subf %147, %153 : vector<16x256xf32>
    %155 = arith.mulf %154, %154 : vector<16x256xf32>
    %cst_139 = arith.constant dense<0.000000e+00> : vector<16xf32>
    %156 = vector.multi_reduction <add>, %155, %cst_139 [1] : vector<16x256xf32> to vector<16xf32>
    %157 = vector.shape_cast %156 : vector<16xf32> to vector<16x1xf32>
    %cst_140 = arith.constant dense<0.000000e+00> : vector<16x1xf32>
    %158 = tpu.matmul %2, %157, %cst_140 {dimension_numbers = #tpu.dot_dimension_numbers<[1], [0], [0], [1], [0, 0, 1, 1], [], []>} : vector<16x16xf32>, vector<16x1xf32>, vector<16x1xf32> -> vector<16x1xf32>
    %cst_141 = arith.constant 9.99999974E-6 : f32
    %159 = vector.broadcast %cst_141 : f32 to vector<16x1xf32>
    %160 = arith.addf %158, %159 : vector<16x1xf32>
    %161 = math.rsqrt %160 : vector<16x1xf32>
    %162 = arith.mulf %161, %148 : vector<16x1xf32>
    %163 = vector.broadcast %162 : vector<16x1xf32> to vector<16x256xf32>
    %164 = arith.mulf %154, %163 : vector<16x256xf32>
    %165 = vector.broadcast %149 : vector<16x1xf32> to vector<16x256xf32>
    %166 = arith.addf %164, %165 : vector<16x256xf32>
    %cst_142 = arith.constant 0.000000e+00 : f32
    %167 = vector.broadcast %cst_142 : f32 to vector<16x256xf32>
    %168 = arith.subf %167, %166 : vector<16x256xf32>
    %169 = math.exp %168 : vector<16x256xf32>
    %cst_143 = arith.constant 1.000000e+00 : f32
    %170 = vector.broadcast %cst_143 : f32 to vector<16x256xf32>
    %171 = arith.addf %170, %169 : vector<16x256xf32>
    %172 = tpu.reciprocal %171 {approx = true} : vector<16x256xf32> -> vector<16x256xf32>
    %173 = arith.mulf %166, %172 : vector<16x256xf32>
    %c0_144 = arith.constant 0 : index
    %c0_145 = arith.constant 0 : index
    %174 = vector.load %arg13[%c0_144, %c0_145] : memref<16x4xbf16, #tpu.memory_space<vmem>>, vector<16x4xbf16>
    %c0_146 = arith.constant 0 : index
    %c0_147 = arith.constant 0 : index
    %c0_148 = arith.constant 0 : index
    %175 = vector.load %arg1[%c0_146, %c0_147, %c0_148] : memref<1x4x256xbf16, #tpu.memory_space<vmem>>, vector<1x4x256xbf16>
    %176 = vector.shape_cast %175 : vector<1x4x256xbf16> to vector<4x256xbf16>
    %cst_149 = arith.constant dense<0.000000e+00> : vector<16x256xf32>
    %177 = tpu.matmul %174, %176, %cst_149 {dimension_numbers = #tpu.dot_dimension_numbers<[1], [0], [0], [1], [0, 0, 1, 1], [], []>} : vector<16x4xbf16>, vector<4x256xbf16>, vector<16x256xf32> -> vector<16x256xf32>
    %c0_150 = arith.constant 0 : index
    %c0_151 = arith.constant 0 : index
    %178 = vector.load %arg14[%c0_150, %c0_151] : memref<16x1xf32, #tpu.memory_space<vmem>>, vector<16x1xf32>
    %179 = vector.broadcast %178 : vector<16x1xf32> to vector<16x256xf32>
    %180 = arith.addf %177, %179 : vector<16x256xf32>
    %181 = arith.addf %180, %173 : vector<16x256xf32>
    %c0_152 = arith.constant 0 : index
    %c0_153 = arith.constant 0 : index
    %c0_154 = arith.constant 0 : index
    %182 = vector.load %arg17[%c0_152, %c0_153, %c0_154] : memref<1x16x256xf32, #tpu.memory_space<vmem>>, vector<1x16x256xf32>
    %183 = vector.shape_cast %182 : vector<1x16x256xf32> to vector<16x256xf32>
    %184 = vector.shape_cast %181 : vector<16x256xf32> to vector<1x16x256xf32>
    tpu.vector_store %arg17[%c0_152, %c0_153, %c0_154], %184 {strides = array<i32>} : memref<1x16x256xf32, #tpu.memory_space<vmem>>, vector<1x16x256xf32>,
    return
  }
  func.func @transform_0(%arg0: i32) -> (i32, i32, i32) {
    %c0_i32 = arith.constant 0 : i32
    %c0_i32_0 = arith.constant 0 : i32
    %c0_i32_1 = arith.constant 0 : i32
    return %arg0, %c0_i32, %c0_i32_0 : i32, i32, i32
  }
  func.func @transform_1(%arg0: i32) -> (i32, i32, i32) {
    %c0_i32 = arith.constant 0 : i32
    %c0_i32_0 = arith.constant 0 : i32
    %c0_i32_1 = arith.constant 0 : i32
    return %arg0, %c0_i32, %c0_i32_0 : i32, i32, i32
  }
  func.func @transform_2(%arg0: i32) -> (i32, i32, i32) {
    %c0_i32 = arith.constant 0 : i32
    %c0_i32_0 = arith.constant 0 : i32
    %c0_i32_1 = arith.constant 0 : i32
    %c0_i32_2 = arith.constant 0 : i32
    return %c0_i32, %c0_i32_0, %c0_i32_1 : i32, i32, i32
  }
  func.func @transform_3(%arg0: i32) -> (i32, i32) {
    %c0_i32 = arith.constant 0 : i32
    %c0_i32_0 = arith.constant 0 : i32
    %c0_i32_1 = arith.constant 0 : i32
    return %c0_i32, %c0_i32_0 : i32, i32
  }
  func.func @transform_4(%arg0: i32) -> (i32, i32) {
    %c0_i32 = arith.constant 0 : i32
    %c0_i32_0 = arith.constant 0 : i32
    %c0_i32_1 = arith.constant 0 : i32
    return %c0_i32, %c0_i32_0 : i32, i32
  }
  func.func @transform_5(%arg0: i32) -> (i32, i32) {
    %c0_i32 = arith.constant 0 : i32
    %c0_i32_0 = arith.constant 0 : i32
    %c0_i32_1 = arith.constant 0 : i32
    return %c0_i32, %c0_i32_0 : i32, i32
  }
  func.func @transform_6(%arg0: i32) -> (i32, i32) {
    %c0_i32 = arith.constant 0 : i32
    %c0_i32_0 = arith.constant 0 : i32
    %c0_i32_1 = arith.constant 0 : i32
    return %c0_i32, %c0_i32_0 : i32, i32
  }
  func.func @transform_7(%arg0: i32) -> (i32, i32) {
    %c0_i32 = arith.constant 0 : i32
    %c0_i32_0 = arith.constant 0 : i32
    %c0_i32_1 = arith.constant 0 : i32
    return %c0_i32, %c0_i32_0 : i32, i32
  }
  func.func @transform_8(%arg0: i32) -> (i32, i32, i32) {
    %c0_i32 = arith.constant 0 : i32
    %c0_i32_0 = arith.constant 0 : i32
    %c0_i32_1 = arith.constant 0 : i32
    %c0_i32_2 = arith.constant 0 : i32
    return %c0_i32, %c0_i32_0, %c0_i32_1 : i32, i32, i32
  }
  func.func @transform_9(%arg0: i32) -> (i32, i32) {
    %c0_i32 = arith.constant 0 : i32
    %c0_i32_0 = arith.constant 0 : i32
    %c0_i32_1 = arith.constant 0 : i32
    return %c0_i32, %c0_i32_0 : i32, i32
  }
  func.func @transform_10(%arg0: i32) -> (i32, i32) {
    %c0_i32 = arith.constant 0 : i32
    %c0_i32_0 = arith.constant 0 : i32
    %c0_i32_1 = arith.constant 0 : i32
    return %c0_i32, %c0_i32_0 : i32, i32
  }
  func.func @transform_11(%arg0: i32) -> (i32, i32) {
    %c0_i32 = arith.constant 0 : i32
    %c0_i32_0 = arith.constant 0 : i32
    %c0_i32_1 = arith.constant 0 : i32
    return %c0_i32, %c0_i32_0 : i32, i32
  }
  func.func @transform_12(%arg0: i32) -> (i32, i32) {
    %c0_i32 = arith.constant 0 : i32
    %c0_i32_0 = arith.constant 0 : i32
    %c0_i32_1 = arith.constant 0 : i32
    return %c0_i32, %c0_i32_0 : i32, i32
  }
  func.func @transform_13(%arg0: i32) -> (i32, i32) {
    %c0_i32 = arith.constant 0 : i32
    %c0_i32_0 = arith.constant 0 : i32
    %c0_i32_1 = arith.constant 0 : i32
    return %c0_i32, %c0_i32_0 : i32, i32
  }
  func.func @transform_14(%arg0: i32) -> (i32, i32) {
    %c0_i32 = arith.constant 0 : i32
    %c0_i32_0 = arith.constant 0 : i32
    %c0_i32_1 = arith.constant 0 : i32
    return %c0_i32, %c0_i32_0 : i32, i32
  }
  func.func @transform_15(%arg0: i32) -> (i32, i32) {
    %c0_i32 = arith.constant 0 : i32
    %c0_i32_0 = arith.constant 0 : i32
    %c0_i32_1 = arith.constant 0 : i32
    return %c0_i32, %c0_i32_0 : i32, i32
  }
  func.func @transform_16(%arg0: i32) -> (i32, i32, i32) {
    %c0_i32 = arith.constant 0 : i32
    %c0_i32_0 = arith.constant 0 : i32
    %c0_i32_1 = arith.constant 0 : i32
    return %arg0, %c0_i32, %c0_i32_0 : i32, i32, i32
  }
}

</mosaic_0001>

<llo_original>
// kernel: tpu_custom_call.1
$region0: #{tpu_custom_call.1}
  #allocation0 [shape = 'u32[]', space=smem, size = 0x4, offset = 0x4, fixed_abs, tag = 'smem constant byte address 0x4 - core index']
  #allocation1 [shape = 'u32[144,128]{1,0:T(1,128)}', space=vmem, size = 0x12000, scoped, tag = 'internal scratch']
  #allocation2 [shape = 'bf16[16,384]{1,0:T(16,128)(2,1)}', space=vmem, size = 0x3000, scoped, tag = 'scratch operand']
  %s0 = inlined_call_operand.vmem [shape: bf16[2,4,256], index: 0, kind: input, shape index: {}]
  %s1 = inlined_call_operand.vmem [shape: bf16[2,32,1], index: 1, kind: input, shape index: {}]
  %s2 = inlined_call_operand.vmem [shape: bf16[9,16,4], index: 2, kind: input, shape index: {}]
  %s3 = inlined_call_operand.vmem [shape: f32[16,1], index: 3, kind: input, shape index: {}]
  %s4 = inlined_call_operand.vmem [shape: f32[16,1], index: 4, kind: input, shape index: {}]
  %s5 = inlined_call_operand.vmem [shape: f32[16,1], index: 5, kind: input, shape index: {}]
  %s6 = inlined_call_operand.vmem [shape: bf16[16,32], index: 6, kind: input, shape index: {}]
  %s7 = inlined_call_operand.vmem [shape: f32[16,1], index: 7, kind: input, shape index: {}]
  %s8 = inlined_call_operand.vmem [shape: bf16[9,16,16], index: 8, kind: input, shape index: {}]
  %s9 = inlined_call_operand.vmem [shape: f32[16,1], index: 9, kind: input, shape index: {}]
  %s10 = inlined_call_operand.vmem [shape: f32[16,1], index: 10, kind: input, shape index: {}]
  %s11 = inlined_call_operand.vmem [shape: f32[16,1], index: 11, kind: input, shape index: {}]
  %s12 = inlined_call_operand.vmem [shape: bf16[16,4], index: 12, kind: input, shape index: {}]
  %s13 = inlined_call_operand.vmem [shape: f32[16,1], index: 13, kind: input, shape index: {}]
  %s14 = inlined_call_operand.vmem [shape: f32[16,16], index: 14, kind: input, shape index: {}]
  %s15 = inlined_call_operand.vmem [shape: f32[3,256], index: 15, kind: input, shape index: {}]
  %s16 = inlined_call_operand.hbm [shape: f32[2,16,256], index: 16, kind: output, shape index: {}]
  %s17 = sld [smem:[#allocation0]]
  $region97: #{tpu_custom_call.1} parent=0
    _
  %s19 = ssub.s32 1, %s17
  %s20 = scalar_select 0, %s19, %s17
  $region1: #{tpu_custom_call.1} parent=0
    #allocation3 [shape = 'u8[32768]{0}', space=vmem, size = 0x8000, scoped, tag = 'output window, operand 0']
    #allocation4 [shape = 's32[2]{0}', space=sflag, size = 0x8, scoped, tag = 'scoped memory for tpu_custom_call.1']
    %21 = vsyncpa [#allocation4], 0
    %s22 = scalar_lea.sflag [#allocation4], 1
    %23 = vsyncpa %s22, 0
    loop: start=0, step=1, limit=4
    $region2: #{tpu_custom_call.1} parent=1 // loop_pre_header
      _
    $region3: #{tpu_custom_call.1} parent=1 // loop_header
      %s25 = sphi 0, %s29
      %p26 = scmp.ge.s32.totalorder %s25, 4
      %s35 = sphi 0, %s37
      %s38 = sphi 0, %s35
      %s39 = sphi 0, %s38
      %s55 = sphi 0, %s39
      %s61 = sphi 0, %s63
      %s64 = sphi 0, %s61
      %s65 = sphi 0, %s64
      %s81 = sphi 0, %s65
      %s85 = sphi 0, %s85
      %s87 = sphi 0, %s85
      %s88 = sphi 0, %s87
      %s102 = sphi 0, %s88
      %s106 = sphi 0, %s106
      %s108 = sphi 0, %s106
      %s109 = sphi 0, %s108
      %s123 = sphi 0, %s109
      %s127 = sphi 0, %s127
      %s129 = sphi 0, %s127
      %s130 = sphi 0, %s129
      %s144 = sphi 0, %s130
      %s148 = sphi 0, %s148
      %s150 = sphi 0, %s148
      %s151 = sphi 0, %s150
      %s165 = sphi 0, %s151
      %s169 = sphi 0, %s169
      %s171 = sphi 0, %s169
      %s172 = sphi 0, %s171
      %s186 = sphi 0, %s172
      %s190 = sphi 0, %s190
      %s192 = sphi 0, %s190
      %s193 = sphi 0, %s192
      %s207 = sphi 0, %s193
      %s211 = sphi 0, %s211
      %s213 = sphi 0, %s211
      %s214 = sphi 0, %s213
      %s228 = sphi 0, %s214
      %s232 = sphi 0, %s232
      %s234 = sphi 0, %s232
      %s235 = sphi 0, %s234
      %s249 = sphi 0, %s235
      %s253 = sphi 0, %s253
      %s255 = sphi 0, %s253
      %s256 = sphi 0, %s255
      %s270 = sphi 0, %s256
      %s274 = sphi 0, %s274
      %s276 = sphi 0, %s274
      %s277 = sphi 0, %s276
      %s291 = sphi 0, %s277
      %s295 = sphi 0, %s295
      %s297 = sphi 0, %s295
      %s298 = sphi 0, %s297
      %s312 = sphi 0, %s298
      %s316 = sphi 0, %s316
      %s318 = sphi 0, %s316
      %s319 = sphi 0, %s318
      %s333 = sphi 0, %s319
      %s337 = sphi 0, %s337
      %s339 = sphi 0, %s337
      %s340 = sphi 0, %s339
      %s354 = sphi 0, %s340
      %s358 = sphi 0, %s358
      %s360 = sphi 0, %s358
      %s361 = sphi 0, %s360
      %s375 = sphi 0, %s361
      %s381 = sphi 0, %s383
      %s384 = sphi 0, %s381
      %s385 = sphi 0, %s384
      %s401 = sphi 0, %s385
    $region4: #{tpu_custom_call.1} parent=1 // loop_header_branch
      %28 = sbr.rel (%p26) target = $region8
    $region5: #{tpu_custom_call.1} parent=1 // loop_body
      %s30 = ssub.s32 %s25, 1
      %s31 = ssub.s32 %s25, 2
      %s32 = sadd.s32 %s25, 1
      %s33 = ssub.s32 %s25, %s32
      %p34 = scmp.eq.s32.totalorder %s33, 0
      %s36 = sadd.s32 %s35, 1
      %s37 = scalar_select %p34, %s35, %s36
      %p40 = pneg %p34
      %p41 = scmp.eq.s32.totalorder %s25, 1
      %p42 = por %p40, %p41
      %p43 = scmp.ne.s32.totalorder %s35, %s38
      %p44 = scmp.eq.s32.totalorder %s25, 0
      %p45 = por %p43, %p44
      %p46 = scmp.ne.s32.totalorder %s35, %s38
      %p47 = scmp.eq.s32.totalorder %s30, 1
      %p48 = por %p46, %p47
      %p49 = scmp.ne.s32.totalorder %s38, %s39
      %p50 = scmp.eq.s32.totalorder %s30, 0
      %p51 = por %p49, %p50
      %p52 = scmp.ne.s32.totalorder %s38, %s39
      %p53 = scmp.eq.s32.totalorder %s31, 1
      %p54 = por %p52, %p53
      %p56 = scmp.ne.s32.totalorder %s39, %s55
      %p57 = scmp.eq.s32.totalorder %s31, 0
      %p58 = por %p56, %p57
      %s59 = ssub.s32 %s25, %s32
      %p60 = scmp.eq.s32.totalorder %s59, 0
      %s62 = sadd.s32 %s61, 1
      %s63 = scalar_select %p60, %s61, %s62
      %p66 = pneg %p60
      %p67 = scmp.eq.s32.totalorder %s25, 1
      %p68 = por %p66, %p67
      %p69 = scmp.ne.s32.totalorder %s61, %s64
      %p70 = scmp.eq.s32.totalorder %s25, 0
      %p71 = por %p69, %p70
      %p72 = scmp.ne.s32.totalorder %s61, %s64
      %p73 = scmp.eq.s32.totalorder %s30, 1
      %p74 = por %p72, %p73
      %p75 = scmp.ne.s32.totalorder %s64, %s65
      %p76 = scmp.eq.s32.totalorder %s30, 0
      %p77 = por %p75, %p76
      %p78 = scmp.ne.s32.totalorder %s64, %s65
      %p79 = scmp.eq.s32.totalorder %s31, 1
      %p80 = por %p78, %p79
      %p82 = scmp.ne.s32.totalorder %s65, %s81
      %p83 = scmp.eq.s32.totalorder %s31, 0
      %p84 = por %p82, %p83
      %s86 = sadd.s32 %s85, 1
      %p89 = scmp.eq.s32.totalorder %s25, 1
      %p90 = scmp.ne.s32.totalorder %s85, %s87
      %p91 = scmp.eq.s32.totalorder %s25, 0
      %p92 = por %p90, %p91
      %p93 = scmp.ne.s32.totalorder %s85, %s87
      %p94 = scmp.eq.s32.totalorder %s30, 1
      %p95 = por %p93, %p94
      %p96 = scmp.ne.s32.totalorder %s87, %s88
      %p97 = scmp.eq.s32.totalorder %s30, 0
      %p98 = por %p96, %p97
      %p99 = scmp.ne.s32.totalorder %s87, %s88
      %p100 = scmp.eq.s32.totalorder %s31, 1
      %p101 = por %p99, %p100
      %p103 = scmp.ne.s32.totalorder %s88, %s102
      %p104 = scmp.eq.s32.totalorder %s31, 0
      %p105 = por %p103, %p104
      %s107 = sadd.s32 %s106, 1
      %p110 = scmp.eq.s32.totalorder %s25, 1
      %p111 = scmp.ne.s32.totalorder %s106, %s108
      %p112 = scmp.eq.s32.totalorder %s25, 0
      %p113 = por %p111, %p112
      %p114 = scmp.ne.s32.totalorder %s106, %s108
      %p115 = scmp.eq.s32.totalorder %s30, 1
      %p116 = por %p114, %p115
      %p117 = scmp.ne.s32.totalorder %s108, %s109
      %p118 = scmp.eq.s32.totalorder %s30, 0
      %p119 = por %p117, %p118
      %p120 = scmp.ne.s32.totalorder %s108, %s109
      %p121 = scmp.eq.s32.totalorder %s31, 1
      %p122 = por %p120, %p121
      %p124 = scmp.ne.s32.totalorder %s109, %s123
      %p125 = scmp.eq.s32.totalorder %s31, 0
      %p126 = por %p124, %p125
      %s128 = sadd.s32 %s127, 1
      %p131 = scmp.eq.s32.totalorder %s25, 1
      %p132 = scmp.ne.s32.totalorder %s127, %s129
      %p133 = scmp.eq.s32.totalorder %s25, 0
      %p134 = por %p132, %p133
      %p135 = scmp.ne.s32.totalorder %s127, %s129
      %p136 = scmp.eq.s32.totalorder %s30, 1
      %p137 = por %p135, %p136
      %p138 = scmp.ne.s32.totalorder %s129, %s130
      %p139 = scmp.eq.s32.totalorder %s30, 0
      %p140 = por %p138, %p139
      %p141 = scmp.ne.s32.totalorder %s129, %s130
      %p142 = scmp.eq.s32.totalorder %s31, 1
      %p143 = por %p141, %p142
      %p145 = scmp.ne.s32.totalorder %s130, %s144
      %p146 = scmp.eq.s32.totalorder %s31, 0
      %p147 = por %p145, %p146
      %s149 = sadd.s32 %s148, 1
      %p152 = scmp.eq.s32.totalorder %s25, 1
      %p153 = scmp.ne.s32.totalorder %s148, %s150
      %p154 = scmp.eq.s32.totalorder %s25, 0
      %p155 = por %p153, %p154
      %p156 = scmp.ne.s32.totalorder %s148, %s150
      %p157 = scmp.eq.s32.totalorder %s30, 1
      %p158 = por %p156, %p157
      %p159 = scmp.ne.s32.totalorder %s150, %s151
      %p160 = scmp.eq.s32.totalorder %s30, 0
      %p161 = por %p159, %p160
      %p162 = scmp.ne.s32.totalorder %s150, %s151
      %p163 = scmp.eq.s32.totalorder %s31, 1
      %p164 = por %p162, %p163
      %p166 = scmp.ne.s32.totalorder %s151, %s165
      %p167 = scmp.eq.s32.totalorder %s31, 0
      %p168 = por %p166, %p167
      %s170 = sadd.s32 %s169, 1
      %p173 = scmp.eq.s32.totalorder %s25, 1
      %p174 = scmp.ne.s32.totalorder %s169, %s171
      %p175 = scmp.eq.s32.totalorder %s25, 0
      %p176 = por %p174, %p175
      %p177 = scmp.ne.s32.totalorder %s169, %s171
      %p178 = scmp.eq.s32.totalorder %s30, 1
      %p179 = por %p177, %p178
      %p180 = scmp.ne.s32.totalorder %s171, %s172
      %p181 = scmp.eq.s32.totalorder %s30, 0
      %p182 = por %p180, %p181
      %p183 = scmp.ne.s32.totalorder %s171, %s172
      %p184 = scmp.eq.s32.totalorder %s31, 1
      %p185 = por %p183, %p184
      %p187 = scmp.ne.s32.totalorder %s172, %s186
      %p188 = scmp.eq.s32.totalorder %s31, 0
      %p189 = por %p187, %p188
      %s191 = sadd.s32 %s190, 1
      %p194 = scmp.eq.s32.totalorder %s25, 1
      %p195 = scmp.ne.s32.totalorder %s190, %s192
      %p196 = scmp.eq.s32.totalorder %s25, 0
      %p197 = por %p195, %p196
      %p198 = scmp.ne.s32.totalorder %s190, %s192
      %p199 = scmp.eq.s32.totalorder %s30, 1
      %p200 = por %p198, %p199
      %p201 = scmp.ne.s32.totalorder %s192, %s193
      %p202 = scmp.eq.s32.totalorder %s30, 0
      %p203 = por %p201, %p202
      %p204 = scmp.ne.s32.totalorder %s192, %s193
      %p205 = scmp.eq.s32.totalorder %s31, 1
      %p206 = por %p204, %p205
      %p208 = scmp.ne.s32.totalorder %s193, %s207
      %p209 = scmp.eq.s32.totalorder %s31, 0
      %p210 = por %p208, %p209
      %s212 = sadd.s32 %s211, 1
      %p215 = scmp.eq.s32.totalorder %s25, 1
      %p216 = scmp.ne.s32.totalorder %s211, %s213
      %p217 = scmp.eq.s32.totalorder %s25, 0
      %p218 = por %p216, %p217
      %p219 = scmp.ne.s32.totalorder %s211, %s213
      %p220 = scmp.eq.s32.totalorder %s30, 1
      %p221 = por %p219, %p220
      %p222 = scmp.ne.s32.totalorder %s213, %s214
      %p223 = scmp.eq.s32.totalorder %s30, 0
      %p224 = por %p222, %p223
      %p225 = scmp.ne.s32.totalorder %s213, %s214
      %p226 = scmp.eq.s32.totalorder %s31, 1
      %p227 = por %p225, %p226
      %p229 = scmp.ne.s32.totalorder %s214, %s228
      %p230 = scmp.eq.s32.totalorder %s31, 0
      %p231 = por %p229, %p230
      %s233 = sadd.s32 %s232, 1
      %p236 = scmp.eq.s32.totalorder %s25, 1
      %p237 = scmp.ne.s32.totalorder %s232, %s234
      %p238 = scmp.eq.s32.totalorder %s25, 0
      %p239 = por %p237, %p238
      %p240 = scmp.ne.s32.totalorder %s232, %s234
      %p241 = scmp.eq.s32.totalorder %s30, 1
      %p242 = por %p240, %p241
      %p243 = scmp.ne.s32.totalorder %s234, %s235
      %p244 = scmp.eq.s32.totalorder %s30, 0
      %p245 = por %p243, %p244
      %p246 = scmp.ne.s32.totalorder %s234, %s235
      %p247 = scmp.eq.s32.totalorder %s31, 1
      %p248 = por %p246, %p247
      %p250 = scmp.ne.s32.totalorder %s235, %s249
      %p251 = scmp.eq.s32.totalorder %s31, 0
      %p252 = por %p250, %p251
      %s254 = sadd.s32 %s253, 1
      %p257 = scmp.eq.s32.totalorder %s25, 1
      %p258 = scmp.ne.s32.totalorder %s253, %s255
      %p259 = scmp.eq.s32.totalorder %s25, 0
      %p260 = por %p258, %p259
      %p261 = scmp.ne.s32.totalorder %s253, %s255
      %p262 = scmp.eq.s32.totalorder %s30, 1
      %p263 = por %p261, %p262
      %p264 = scmp.ne.s32.totalorder %s255, %s256
      %p265 = scmp.eq.s32.totalorder %s30, 0
      %p266 = por %p264, %p265
      %p267 = scmp.ne.s32.totalorder %s255, %s256
      %p268 = scmp.eq.s32.totalorder %s31, 1
      %p269 = por %p267, %p268
      %p271 = scmp.ne.s32.totalorder %s256, %s270
      %p272 = scmp.eq.s32.totalorder %s31, 0
      %p273 = por %p271, %p272
      %s275 = sadd.s32 %s274, 1
      %p278 = scmp.eq.s32.totalorder %s25, 1
      %p279 = scmp.ne.s32.totalorder %s274, %s276
      %p280 = scmp.eq.s32.totalorder %s25, 0
      %p281 = por %p279, %p280
      %p282 = scmp.ne.s32.totalorder %s274, %s276
      %p283 = scmp.eq.s32.totalorder %s30, 1
      %p284 = por %p282, %p283
      %p285 = scmp.ne.s32.totalorder %s276, %s277
      %p286 = scmp.eq.s32.totalorder %s30, 0
      %p287 = por %p285, %p286
      %p288 = scmp.ne.s32.totalorder %s276, %s277
      %p289 = scmp.eq.s32.totalorder %s31, 1
      %p290 = por %p288, %p289
      %p292 = scmp.ne.s32.totalorder %s277, %s291
      %p293 = scmp.eq.s32.totalorder %s31, 0
      %p294 = por %p292, %p293
      %s296 = sadd.s32 %s295, 1
      %p299 = scmp.eq.s32.totalorder %s25, 1
      %p300 = scmp.ne.s32.totalorder %s295, %s297
      %p301 = scmp.eq.s32.totalorder %s25, 0
      %p302 = por %p300, %p301
      %p303 = scmp.ne.s32.totalorder %s295, %s297
      %p304 = scmp.eq.s32.totalorder %s30, 1
      %p305 = por %p303, %p304
      %p306 = scmp.ne.s32.totalorder %s297, %s298
      %p307 = scmp.eq.s32.totalorder %s30, 0
      %p308 = por %p306, %p307
      %p309 = scmp.ne.s32.totalorder %s297, %s298
      %p310 = scmp.eq.s32.totalorder %s31, 1
      %p311 = por %p309, %p310
      %p313 = scmp.ne.s32.totalorder %s298, %s312
      %p314 = scmp.eq.s32.totalorder %s31, 0
      %p315 = por %p313, %p314
      %s317 = sadd.s32 %s316, 1
      %p320 = scmp.eq.s32.totalorder %s25, 1
      %p321 = scmp.ne.s32.totalorder %s316, %s318
      %p322 = scmp.eq.s32.totalorder %s25, 0
      %p323 = por %p321, %p322
      %p324 = scmp.ne.s32.totalorder %s316, %s318
      %p325 = scmp.eq.s32.totalorder %s30, 1
      %p326 = por %p324, %p325
      %p327 = scmp.ne.s32.totalorder %s318, %s319
      %p328 = scmp.eq.s32.totalorder %s30, 0
      %p329 = por %p327, %p328
      %p330 = scmp.ne.s32.totalorder %s318, %s319
      %p331 = scmp.eq.s32.totalorder %s31, 1
      %p332 = por %p330, %p331
      %p334 = scmp.ne.s32.totalorder %s319, %s333
      %p335 = scmp.eq.s32.totalorder %s31, 0
      %p336 = por %p334, %p335
      %s338 = sadd.s32 %s337, 1
      %p341 = scmp.eq.s32.totalorder %s25, 1
      %p342 = scmp.ne.s32.totalorder %s337, %s339
      %p343 = scmp.eq.s32.totalorder %s25, 0
      %p344 = por %p342, %p343
      %p345 = scmp.ne.s32.totalorder %s337, %s339
      %p346 = scmp.eq.s32.totalorder %s30, 1
      %p347 = por %p345, %p346
      %p348 = scmp.ne.s32.totalorder %s339, %s340
      %p349 = scmp.eq.s32.totalorder %s30, 0
      %p350 = por %p348, %p349
      %p351 = scmp.ne.s32.totalorder %s339, %s340
      %p352 = scmp.eq.s32.totalorder %s31, 1
      %p353 = por %p351, %p352
      %p355 = scmp.ne.s32.totalorder %s340, %s354
      %p356 = scmp.eq.s32.totalorder %s31, 0
      %p357 = por %p355, %p356
      %s359 = sadd.s32 %s358, 1
      %p362 = scmp.eq.s32.totalorder %s25, 1
      %p363 = scmp.ne.s32.totalorder %s358, %s360
      %p364 = scmp.eq.s32.totalorder %s25, 0
      %p365 = por %p363, %p364
      %p366 = scmp.ne.s32.totalorder %s358, %s360
      %p367 = scmp.eq.s32.totalorder %s30, 1
      %p368 = por %p366, %p367
      %p369 = scmp.ne.s32.totalorder %s360, %s361
      %p370 = scmp.eq.s32.totalorder %s30, 0
      %p371 = por %p369, %p370
      %p372 = scmp.ne.s32.totalorder %s360, %s361
      %p373 = scmp.eq.s32.totalorder %s31, 1
      %p374 = por %p372, %p373
      %p376 = scmp.ne.s32.totalorder %s361, %s375
      %p377 = scmp.eq.s32.totalorder %s31, 0
      %p378 = por %p376, %p377
      %s379 = ssub.s32 %s25, %s32
      %p380 = scmp.eq.s32.totalorder %s379, 0
      %s382 = sadd.s32 %s381, 1
      %s383 = scalar_select %p380, %s381, %s382
      %p386 = pneg %p380
      %p387 = scmp.eq.s32.totalorder %s25, 1
      %p388 = por %p386, %p387
      %p389 = scmp.ne.s32.totalorder %s381, %s384
      %p390 = scmp.eq.s32.totalorder %s25, 0
      %p391 = por %p389, %p390
      %p392 = scmp.ne.s32.totalorder %s381, %s384
      %p393 = scmp.eq.s32.totalorder %s30, 1
      %p394 = por %p392, %p393
      %p395 = scmp.ne.s32.totalorder %s384, %s385
      %p396 = scmp.eq.s32.totalorder %s30, 0
      %p397 = por %p395, %p396
      %p398 = scmp.ne.s32.totalorder %s384, %s385
      %p399 = scmp.eq.s32.totalorder %s31, 1
      %p400 = por %p398, %p399
      %p402 = scmp.ne.s32.totalorder %s385, %s401
      %p403 = scmp.eq.s32.totalorder %s31, 0
      %p404 = por %p402, %p403
      %p405 = scmp.le.s32.totalorder 1, %s25
      %p406 = scmp.lt.s32.totalorder %s25, 3
      %p407 = pnand %p405, %p406
      %p408 = pneg %p407
      // Predicated region
      $region9: #{tpu_custom_call.1} parent=5 // pred_check
        _
      $region10: #{tpu_custom_call.1} parent=5 // pred_check_branch
        %410 = sbr.rel (%p407) target = $region12
      $region11: #{tpu_custom_call.1} parent=5 // pred_region
        %s411 = ssub.s32 %s25, 1
        // Predicated region
        $region13: #{tpu_custom_call.1} parent=11 // pred_check
          %p412 = pneg %p98
        $region14: #{tpu_custom_call.1} parent=11 // pred_check_branch
          %414 = sbr.rel (%p412) target = $region16
        $region15: #{tpu_custom_call.1} parent=11 // pred_region
          _
        $region16: #{tpu_custom_call.1} parent=11 // pred_fallthru
          _
        // Predicated region
        $region17: #{tpu_custom_call.1} parent=11 // pred_check
          %p415 = pneg %p119
        $region18: #{tpu_custom_call.1} parent=11 // pred_check_branch
          %417 = sbr.rel (%p415) target = $region20
        $region19: #{tpu_custom_call.1} parent=11 // pred_region
          _
        $region20: #{tpu_custom_call.1} parent=11 // pred_fallthru
          _
        // Predicated region
        $region21: #{tpu_custom_call.1} parent=11 // pred_check
          %p418 = pneg %p140
        $region22: #{tpu_custom_call.1} parent=11 // pred_check_branch
          %420 = sbr.rel (%p418) target = $region24
        $region23: #{tpu_custom_call.1} parent=11 // pred_region
          _
        $region24: #{tpu_custom_call.1} parent=11 // pred_fallthru
          _
        // Predicated region
        $region25: #{tpu_custom_call.1} parent=11 // pred_check
          %p421 = pneg %p161
        $region26: #{tpu_custom_call.1} parent=11 // pred_check_branch
          %423 = sbr.rel (%p421) target = $region28
        $region27: #{tpu_custom_call.1} parent=11 // pred_region
          _
        $region28: #{tpu_custom_call.1} parent=11 // pred_fallthru
          _
        // Predicated region
        $region29: #{tpu_custom_call.1} parent=11 // pred_check
          %p424 = pneg %p182
        $region30: #{tpu_custom_call.1} parent=11 // pred_check_branch
          %426 = sbr.rel (%p424) target = $region32
        $region31: #{tpu_custom_call.1} parent=11 // pred_region
          _
        $region32: #{tpu_custom_call.1} parent=11 // pred_fallthru
          _
        // Predicated region
        $region33: #{tpu_custom_call.1} parent=11 // pred_check
          %p427 = pneg %p203
        $region34: #{tpu_custom_call.1} parent=11 // pred_check_branch
          %429 = sbr.rel (%p427) target = $region36
        $region35: #{tpu_custom_call.1} parent=11 // pred_region
          _
        $region36: #{tpu_custom_call.1} parent=11 // pred_fallthru
          _
        // Predicated region
        $region37: #{tpu_custom_call.1} parent=11 // pred_check
          %p430 = pneg %p224
        $region38: #{tpu_custom_call.1} parent=11 // pred_check_branch
          %432 = sbr.rel (%p430) target = $region40
        $region39: #{tpu_custom_call.1} parent=11 // pred_region
          _
        $region40: #{tpu_custom_call.1} parent=11 // pred_fallthru
          _
        // Predicated region
        $region41: #{tpu_custom_call.1} parent=11 // pred_check
          %p433 = pneg %p245
        $region42: #{tpu_custom_call.1} parent=11 // pred_check_branch
          %435 = sbr.rel (%p433) target = $region44
        $region43: #{tpu_custom_call.1} parent=11 // pred_region
          _
        $region44: #{tpu_custom_call.1} parent=11 // pred_fallthru
          _
        // Predicated region
        $region45: #{tpu_custom_call.1} parent=11 // pred_check
          %p436 = pneg %p266
        $region46: #{tpu_custom_call.1} parent=11 // pred_check_branch
          %438 = sbr.rel (%p436) target = $region48
        $region47: #{tpu_custom_call.1} parent=11 // pred_region
          _
        $region48: #{tpu_custom_call.1} parent=11 // pred_fallthru
          _
        // Predicated region
        $region49: #{tpu_custom_call.1} parent=11 // pred_check
          %p439 = pneg %p287
        $region50: #{tpu_custom_call.1} parent=11 // pred_check_branch
          %441 = sbr.rel (%p439) target = $region52
        $region51: #{tpu_custom_call.1} parent=11 // pred_region
          _
        $region52: #{tpu_custom_call.1} parent=11 // pred_fallthru
          _
        // Predicated region
        $region53: #{tpu_custom_call.1} parent=11 // pred_check
          %p442 = pneg %p308
        $region54: #{tpu_custom_call.1} parent=11 // pred_check_branch
          %444 = sbr.rel (%p442) target = $region56
        $region55: #{tpu_custom_call.1} parent=11 // pred_region
          _
        $region56: #{tpu_custom_call.1} parent=11 // pred_fallthru
          _
        // Predicated region
        $region57: #{tpu_custom_call.1} parent=11 // pred_check
          %p445 = pneg %p329
        $region58: #{tpu_custom_call.1} parent=11 // pred_check_branch
          %447 = sbr.rel (%p445) target = $region60
        $region59: #{tpu_custom_call.1} parent=11 // pred_region
          _
        $region60: #{tpu_custom_call.1} parent=11 // pred_fallthru
          _
        // Predicated region
        $region61: #{tpu_custom_call.1} parent=11 // pred_check
          %p448 = pneg %p350
        $region62: #{tpu_custom_call.1} parent=11 // pred_check_branch
          %450 = sbr.rel (%p448) target = $region64
        $region63: #{tpu_custom_call.1} parent=11 // pred_region
          _
        $region64: #{tpu_custom_call.1} parent=11 // pred_fallthru
          _
        // Predicated region
        $region65: #{tpu_custom_call.1} parent=11 // pred_check
          %p451 = pneg %p371
        $region66: #{tpu_custom_call.1} parent=11 // pred_check_branch
          %453 = sbr.rel (%p451) target = $region68
        $region67: #{tpu_custom_call.1} parent=11 // pred_region
          _
        $region68: #{tpu_custom_call.1} parent=11 // pred_fallthru
          _
      $region12: #{tpu_custom_call.1} parent=5 // pred_fallthru
        _
      %p454 = scmp.lt.s32.totalorder %s25, 2
      // Predicated region
      $region69: #{tpu_custom_call.1} parent=5 // pred_check
        %p455 = pneg %p454
      $region70: #{tpu_custom_call.1} parent=5 // pred_check_branch
        %457 = sbr.rel (%p455) target = $region72
      $region71: #{tpu_custom_call.1} parent=5 // pred_region
        // Predicated region
        $region73: #{tpu_custom_call.1} parent=71 // pred_check
          %p458 = pneg %p45
        $region74: #{tpu_custom_call.1} parent=71 // pred_check_branch
          %460 = sbr.rel (%p458) target = $region76
        $region75: #{tpu_custom_call.1} parent=71 // pred_region
          %p461 = scmp.lt.s32.totalorder %s25, 1
          %s462 = scalar_select %p461, %s25, 1
          %s463 = smul.addr %s462, 2
          %s464 = smul.addr %s463, 2
          %s465 = scalar_lea.vmem %s0, %s464
        $region76: #{tpu_custom_call.1} parent=71 // pred_fallthru
          _
        // Predicated region
        $region77: #{tpu_custom_call.1} parent=71 // pred_check
          %p466 = pneg %p71
        $region78: #{tpu_custom_call.1} parent=71 // pred_check_branch
          %468 = sbr.rel (%p466) target = $region80
        $region79: #{tpu_custom_call.1} parent=71 // pred_region
          %p469 = scmp.lt.s32.totalorder %s25, 1
          %s470 = scalar_select %p469, %s25, 1
          %s471 = smul.addr %s470, 4
          %s472 = smul.addr %s471, 4
          %s473 = scalar_lea.vmem %s1, %s472
        $region80: #{tpu_custom_call.1} parent=71 // pred_fallthru
          _
      $region72: #{tpu_custom_call.1} parent=5 // pred_fallthru
        _
      %p474 = scmp.le.s32.totalorder 1, %s25
      %p475 = scmp.lt.s32.totalorder %s25, 3
      %p476 = pnand %p474, %p475
      %p477 = pneg %p476
      // Predicated region
      $region81: #{tpu_custom_call.1} parent=5 // pred_check
        _
      $region82: #{tpu_custom_call.1} parent=5 // pred_check_branch
        %479 = sbr.rel (%p476) target = $region84
      $region83: #{tpu_custom_call.1} parent=5 // pred_region
        %s480 = ssub.s32 %s25, 1
        %p481 = scmp.lt.s32.totalorder %s30, 1
        %s482 = scalar_select %p481, %s30, 1
        %s483 = smul.addr %s482, 2
        %s484 = smul.addr %s483, 2
        %s485 = scalar_lea.vmem %s0, %s484
        %p486 = pneg %p51
        %p487 = pneg %p48
        %p488 = scmp.lt.s32.totalorder %s30, 1
        %s489 = scalar_select %p488, %s30, 1
        %s490 = smul.addr %s489, 4
        %s491 = smul.addr %s490, 4
        %s492 = scalar_lea.vmem %s1, %s491
        %p493 = pneg %p77
        %p494 = pneg %p74
        %p495 = pneg %p98
        %p496 = pneg %p95
        %p497 = pneg %p119
        %p498 = pneg %p116
        %p499 = pneg %p140
        %p500 = pneg %p137
        %p501 = pneg %p161
        %p502 = pneg %p158
        %p503 = pneg %p182
        %p504 = pneg %p179
        %p505 = pneg %p203
        %p506 = pneg %p200
        %p507 = pneg %p224
        %p508 = pneg %p221
        %p509 = pneg %p245
        %p510 = pneg %p242
        %p511 = pneg %p266
        %p512 = pneg %p263
        %p513 = pneg %p287
        %p514 = pneg %p284
        %p515 = pneg %p308
        %p516 = pneg %p305
        %p517 = pneg %p329
        %p518 = pneg %p326
        %p519 = pneg %p350
        %p520 = pneg %p347
        %p521 = pneg %p371
        %p522 = pneg %p368
        %p523 = pneg %p397
        %p524 = pneg %p394
        %s525 = sand.u32 %s384, 1
        %s526 = scalar_lea.sflag [#allocation4], %s525
        %s527 = sand.u32 %s384, 1
        %s528 = smul.addr %s527, 32
        %s529 = scalar_lea.vmem [#allocation3], %s528
        %p530 = scmp.lt.s32.totalorder %s30, 1
        %s531 = scalar_select %p530, %s30, 1
        %s532 = smul.addr %s531, 2
        %s533 = smul.addr %s532, 2
        %s534 = scalar_lea.vmem %s0, %s533
        %p535 = scmp.lt.s32.totalorder %s30, 1
        %s536 = scalar_select %p535, %s30, 1
        %s537 = smul.addr %s536, 4
        %s538 = smul.addr %s537, 4
        %s539 = scalar_lea.vmem %s1, %s538
        %v541 = vld [vmem:[%s15] ss:$4 sm:$0x3]
        %s542 = scalar_lea.vmem %s15, 2
        %v543 = vld [vmem:[%s542] ss:$4 sm:$0x3]
        %v544 = vld [vmem:[%s14] sm:$0xff]
        %v545 = vld [vmem:[%s14 + $0x8] sm:$0xff]
        %vm546 = vcmask 138240
        %547 = vst.msk [vmem:[#allocation2] sm:$0xff] %vm546, 0
        %vm548 = vcmask 277640
        %549 = vst.msk [vmem:[#allocation2 + $0x10] sm:$0xff] %vm548, 0
        %v550 = vld [vmem:[%s534] sm:$0xf]
        %v553 = vunpack.c.l.s4 1983009808
        %v554 = vunpack.c.0.s8 %v553
        %v555 = vlaneseq
        %v556 = vshrl.u32 %v555, 7
        %v557 = vsub.s32 %v554, %v556
        %v558 = vrot.slane %v550, %v557
        %v559 = vcombine.high %v558, %v558
        %560 = vrot.lane.b32.xlu0 %v558, 17
        %v561 = vpop.permute.xlu0 %560
        %562 = vrot.lane.b32.xlu0 %v559, 17
        %v563 = vpop.permute.xlu0 %562
        %vm564 = vcmask 138240
        %v565 = vsel %vm564, %v561, %v563
        %vm569 = vcmask 1041544
        %570 = vst.msk [vmem:[#allocation2] sm:$0x3] %vm569, %v561
        %571 = vst [vmem:[#allocation2 + $0x8] sm:$0x3] %v565
        %vm572 = vcmask 132096
        %573 = vst.msk [vmem:[#allocation2 + $0x10] sm:$0x3] %vm572, %v563
        %v574 = vld [vmem:[%s2] sm:$0xf]
        %v575 = vld [vmem:[%s2 + $0x4] sm:$0xf]
        %v576 = vld [vmem:[#allocation2] sm:$0x3]
        %v577 = vld [vmem:[#allocation2 + $0x8] sm:$0x3]
        %s578 = scalar_lea.vmem %s2, 24
        %v579 = vld [vmem:[%s578] sm:$0xf]
        %v580 = vld [vmem:[%s578 + $0x4] sm:$0xf]
        %v581 = vld [vmem:[#allocation2] sm:$0x3]
        %v582 = vld [vmem:[#allocation2 + $0x8] sm:$0x3]
        %v583 = vld [vmem:[#allocation2 + $0x10] sm:$0x3]
        %v586 = vunpack.c.l.b16 %v579
        %v587 = vunpack.c.l.b16 %v580
        %v588 = vpack.c.b16 %v587, %v586
        %592 = vrot.lane.b32.xlu0 %v581, 112
        %v593 = vpop.permute.xlu0 %592
        %594 = vrot.lane.b32.xlu0 %v582, 112
        %v595 = vpop.permute.xlu0 %594
        %596 = vrot.lane.b32.xlu0 %v583, 112
        %v597 = vpop.permute.xlu0 %596
        %vm598 = vcmask 916480
        %v599 = vsel %vm598, %v593, %v595
        %v600 = vsel %vm598, %v595, %v597
        %vm601 = vcmask 31744
        %v603 = vsel %vm601, %v588, 0
        %vm605 = vcmask 1041408
        %v607 = vsel %vm605, %v599, 0
        %v610 = vsel %vm605, %v600, 0
        %612 = vmatprep.subr.bf16.mxu0 %v610
        %613 = vmatpush1.bf16.msra.mxu0 %v607
        %614 = vmatprep.subr.bf16.mxu0 0
        %615 = vmatpush1.bf16.msra.mxu0 0
        %616 = vmatprep.subr.bf16.mxu0 0
        %617 = vmatpush1.bf16.msra.mxu0 0
        %618 = vmatprep.subr.bf16.mxu0 0
        %619 = vmatpush1.bf16.msra.mxu0 0
        %620 = vmatprep.subr.bf16.mxu0 0
        %621 = vmatpush1.bf16.msra.mxu0 0
        %622 = vmatprep.subr.bf16.mxu0 0
        %623 = vmatpush1.bf16.msra.mxu0 0
        %624 = vmatprep.subr.bf16.mxu0 0
        %625 = vmatpush1.bf16.msra.mxu0 0
        %626 = vmatprep.subr.bf16.mxu0 0
        %627 = vmatpush1.bf16.msra.mxu0 0
        %628 = vmatprep.subr.bf16.mxu0 0
        %629 = vmatpush1.bf16.msra.mxu0 0
        %630 = vmatprep.subr.bf16.mxu0 0
        %631 = vmatpush1.bf16.msra.mxu0 0
        %632 = vmatprep.subr.bf16.mxu0 0
        %633 = vmatpush1.bf16.msra.mxu0 0
        %634 = vmatprep.subr.bf16.mxu0 0
        %635 = vmatpush1.bf16.msra.mxu0 0
        %636 = vmatprep.subr.bf16.mxu0 0
        %637 = vmatpush1.bf16.msra.mxu0 0
        %638 = vmatprep.subr.bf16.mxu0 0
        %639 = vmatpush1.bf16.msra.mxu0 0
        %640 = vmatprep.subr.bf16.mxu0 0
        %641 = vmatpush1.bf16.msra.mxu0 0
        %642 = vmatprep.subr.bf16.mxu0 0
        %643 = vmatpush1.bf16.msra.mxu0 0
        %644 = vmatprep.mubr.bf16.mxu0 0
        %645 = vmatmul.mubr.bf16.gmra.mrb[0].mxu0 %v603
        %v646 = vpop.f32.mrb[0].mxu0
        %v647 = vadd.f32 0.0, %v646
        %v648 = vpop.f32.mrb[0].mxu0
        %v649 = vadd.f32 0.0, %v648
        %v650 = vpop.f32.mrb[0].mxu0
        %v651 = vadd.f32 0.0, %v650
        %v652 = vpop.f32.mrb[0].mxu0
        %v653 = vadd.f32 0.0, %v652
        %654 = vdwg.mxu0
        %v657 = vunpack.c.l.b16 %v574
        %v658 = vunpack.c.l.b16 %v575
        %v659 = vpack.c.b16 %v658, %v657
        %v661 = vsel %vm601, %v659, 0
        %v664 = vsel %vm605, %v576, 0
        %v667 = vsel %vm605, %v577, 0
        %669 = vmatprep.subr.bf16.mxu0 %v667
        %670 = vmatpush1.bf16.msra.mxu0 %v664
        %671 = vmatprep.subr.bf16.mxu0 0
        %672 = vmatpush1.bf16.msra.mxu0 0
        %673 = vmatprep.subr.bf16.mxu0 0
        %674 = vmatpush1.bf16.msra.mxu0 0
        %675 = vmatprep.subr.bf16.mxu0 0
        %676 = vmatpush1.bf16.msra.mxu0 0
        %677 = vmatprep.subr.bf16.mxu0 0
        %678 = vmatpush1.bf16.msra.mxu0 0
        %679 = vmatprep.subr.bf16.mxu0 0
        %680 = vmatpush1.bf16.msra.mxu0 0
        %681 = vmatprep.subr.bf16.mxu0 0
        %682 = vmatpush1.bf16.msra.mxu0 0
        %683 = vmatprep.subr.bf16.mxu0 0
        %684 = vmatpush1.bf16.msra.mxu0 0
        %685 = vmatprep.subr.bf16.mxu0 0
        %686 = vmatpush1.bf16.msra.mxu0 0
        %687 = vmatprep.subr.bf16.mxu0 0
        %688 = vmatpush1.bf16.msra.mxu0 0
        %689 = vmatprep.subr.bf16.mxu0 0
        %690 = vmatpush1.bf16.msra.mxu0 0
        %691 = vmatprep.subr.bf16.mxu0 0
        %692 = vmatpush1.bf16.msra.mxu0 0
        %693 = vmatprep.subr.bf16.mxu0 0
        %694 = vmatpush1.bf16.msra.mxu0 0
        %695 = vmatprep.subr.bf16.mxu0 0
        %696 = vmatpush1.bf16.msra.mxu0 0
        %697 = vmatprep.subr.bf16.mxu0 0
        %698 = vmatpush1.bf16.msra.mxu0 0
        %699 = vmatprep.subr.bf16.mxu0 0
        %700 = vmatpush1.bf16.msra.mxu0 0
        %701 = vmatprep.mubr.bf16.mxu0 0
        %702 = vmatmul.mubr.bf16.gmra.mrb[0].mxu0 %v661
        %v703 = vpop.f32.mrb[0].mxu0
        %v704 = vadd.f32 %v647, %v703
        %v705 = vpop.f32.mrb[0].mxu0
        %v706 = vadd.f32 %v649, %v705
        %v707 = vpop.f32.mrb[0].mxu0
        %v708 = vadd.f32 %v651, %v707
        %v709 = vpop.f32.mrb[0].mxu0
        %v710 = vadd.f32 %v653, %v709
        %711 = vdwg.mxu0
        %s712 = scalar_lea.vmem %s2, 48
        %v713 = vld [vmem:[%s712] sm:$0xf]
        %v714 = vld [vmem:[%s712 + $0x4] sm:$0xf]
        %v717 = vunpack.c.l.b16 %v713
        %v718 = vunpack.c.l.b16 %v714
        %v719 = vpack.c.b16 %v718, %v717
        %720 = vrot.lane.b32.xlu0 %v581, 96
        %v721 = vpop.permute.xlu0 %720
        %722 = vrot.lane.b32.xlu0 %v582, 96
        %v723 = vpop.permute.xlu0 %722
        %724 = vrot.lane.b32.xlu0 %v583, 96
        %v725 = vpop.permute.xlu0 %724
        %vm726 = vcmask 785408
        %v727 = vsel %vm726, %v721, %v723
        %v728 = vsel %vm726, %v723, %v725
        %v730 = vsel %vm601, %v719, 0
        %v733 = vsel %vm605, %v727, 0
        %v736 = vsel %vm605, %v728, 0
        %738 = vmatprep.subr.bf16.mxu0 %v736
        %739 = vmatpush1.bf16.msra.mxu0 %v733
        %740 = vmatprep.subr.bf16.mxu0 0
        %741 = vmatpush1.bf16.msra.mxu0 0
        %742 = vmatprep.subr.bf16.mxu0 0
        %743 = vmatpush1.bf16.msra.mxu0 0
        %744 = vmatprep.subr.bf16.mxu0 0
        %745 = vmatpush1.bf16.msra.mxu0 0
        %746 = vmatprep.subr.bf16.mxu0 0
        %747 = vmatpush1.bf16.msra.mxu0 0
        %748 = vmatprep.subr.bf16.mxu0 0
        %749 = vmatpush1.bf16.msra.mxu0 0
        %750 = vmatprep.subr.bf16.mxu0 0
        %751 = vmatpush1.bf16.msra.mxu0 0
        %752 = vmatprep.subr.bf16.mxu0 0
        %753 = vmatpush1.bf16.msra.mxu0 0
        %754 = vmatprep.subr.bf16.mxu0 0
        %755 = vmatpush1.bf16.msra.mxu0 0
        %756 = vmatprep.subr.bf16.mxu0 0
        %757 = vmatpush1.bf16.msra.mxu0 0
        %758 = vmatprep.subr.bf16.mxu0 0
        %759 = vmatpush1.bf16.msra.mxu0 0
        %760 = vmatprep.subr.bf16.mxu0 0
        %761 = vmatpush1.bf16.msra.mxu0 0
        %762 = vmatprep.subr.bf16.mxu0 0
        %763 = vmatpush1.bf16.msra.mxu0 0
        %764 = vmatprep.subr.bf16.mxu0 0
        %765 = vmatpush1.bf16.msra.mxu0 0
        %766 = vmatprep.subr.bf16.mxu0 0
        %767 = vmatpush1.bf16.msra.mxu0 0
        %768 = vmatprep.subr.bf16.mxu0 0
        %769 = vmatpush1.bf16.msra.mxu0 0
        %770 = vmatprep.mubr.bf16.mxu0 0
        %771 = vmatmul.mubr.bf16.gmra.mrb[0].mxu0 %v730
        %v772 = vpop.f32.mrb[0].mxu0
        %v773 = vadd.f32 0.0, %v772
        %v774 = vpop.f32.mrb[0].mxu0
        %v775 = vadd.f32 0.0, %v774
        %v776 = vpop.f32.mrb[0].mxu0
        %v777 = vadd.f32 0.0, %v776
        %v778 = vpop.f32.mrb[0].mxu0
        %v779 = vadd.f32 0.0, %v778
        %780 = vdwg.mxu0
        %v781 = vadd.f32 %v704, %v773
        %v782 = vadd.f32 %v706, %v775
        %v783 = vadd.f32 %v708, %v777
        %v784 = vadd.f32 %v710, %v779
        %s785 = scalar_lea.vmem %s2, 8
        %v786 = vld [vmem:[%s785] sm:$0xf]
        %v787 = vld [vmem:[%s785 + $0x4] sm:$0xf]
        %s788 = scalar_lea.vmem %s2, 32
        %v789 = vld [vmem:[%s788] sm:$0xf]
        %v790 = vld [vmem:[%s788 + $0x4] sm:$0xf]
        %v793 = vunpack.c.l.b16 %v789
        %v794 = vunpack.c.l.b16 %v790
        %v795 = vpack.c.b16 %v794, %v793
        %796 = vrot.lane.b32.xlu0 %v581, 111
        %v797 = vpop.permute.xlu0 %796
        %798 = vrot.lane.b32.xlu0 %v582, 111
        %v799 = vpop.permute.xlu0 %798
        %800 = vrot.lane.b32.xlu0 %v583, 111
        %v801 = vpop.permute.xlu0 %800
        %vm802 = vcmask 908288
        %v803 = vsel %vm802, %v797, %v799
        %v804 = vsel %vm802, %v799, %v801
        %v806 = vsel %vm601, %v795, 0
        %v809 = vsel %vm605, %v803, 0
        %v812 = vsel %vm605, %v804, 0
        %814 = vmatprep.subr.bf16.mxu0 %v812
        %815 = vmatpush1.bf16.msra.mxu0 %v809
        %816 = vmatprep.subr.bf16.mxu0 0
        %817 = vmatpush1.bf16.msra.mxu0 0
        %818 = vmatprep.subr.bf16.mxu0 0
        %819 = vmatpush1.bf16.msra.mxu0 0
        %820 = vmatprep.subr.bf16.mxu0 0
        %821 = vmatpush1.bf16.msra.mxu0 0
        %822 = vmatprep.subr.bf16.mxu0 0
        %823 = vmatpush1.bf16.msra.mxu0 0
        %824 = vmatprep.subr.bf16.mxu0 0
        %825 = vmatpush1.bf16.msra.mxu0 0
        %826 = vmatprep.subr.bf16.mxu0 0
        %827 = vmatpush1.bf16.msra.mxu0 0
        %828 = vmatprep.subr.bf16.mxu0 0
        %829 = vmatpush1.bf16.msra.mxu0 0
        %830 = vmatprep.subr.bf16.mxu0 0
        %831 = vmatpush1.bf16.msra.mxu0 0
        %832 = vmatprep.subr.bf16.mxu0 0
        %833 = vmatpush1.bf16.msra.mxu0 0
        %834 = vmatprep.subr.bf16.mxu0 0
        %835 = vmatpush1.bf16.msra.mxu0 0
        %836 = vmatprep.subr.bf16.mxu0 0
        %837 = vmatpush1.bf16.msra.mxu0 0
        %838 = vmatprep.subr.bf16.mxu0 0
        %839 = vmatpush1.bf16.msra.mxu0 0
        %840 = vmatprep.subr.bf16.mxu0 0
        %841 = vmatpush1.bf16.msra.mxu0 0
        %842 = vmatprep.subr.bf16.mxu0 0
        %843 = vmatpush1.bf16.msra.mxu0 0
        %844 = vmatprep.subr.bf16.mxu0 0
        %845 = vmatpush1.bf16.msra.mxu0 0
        %846 = vmatprep.mubr.bf16.mxu0 0
        %847 = vmatmul.mubr.bf16.gmra.mrb[0].mxu0 %v806
        %v848 = vpop.f32.mrb[0].mxu0
        %v849 = vadd.f32 0.0, %v848
        %v850 = vpop.f32.mrb[0].mxu0
        %v851 = vadd.f32 0.0, %v850
        %v852 = vpop.f32.mrb[0].mxu0
        %v853 = vadd.f32 0.0, %v852
        %v854 = vpop.f32.mrb[0].mxu0
        %v855 = vadd.f32 0.0, %v854
        %856 = vdwg.mxu0
        %v859 = vunpack.c.l.b16 %v786
        %v860 = vunpack.c.l.b16 %v787
        %v861 = vpack.c.b16 %v860, %v859
        %862 = vrot.lane.b32.xlu0 %v581, 127
        %v863 = vpop.permute.xlu0 %862
        %864 = vrot.lane.b32.xlu0 %v582, 127
        %v865 = vpop.permute.xlu0 %864
        %866 = vrot.lane.b32.xlu0 %v583, 127
        %v867 = vpop.permute.xlu0 %866
        %vm868 = vcmask 1039360
        %v869 = vsel %vm868, %v863, %v865
        %v870 = vsel %vm868, %v865, %v867
        %v872 = vsel %vm601, %v861, 0
        %v875 = vsel %vm605, %v869, 0
        %v878 = vsel %vm605, %v870, 0
        %880 = vmatprep.subr.bf16.mxu0 %v878
        %881 = vmatpush1.bf16.msra.mxu0 %v875
        %882 = vmatprep.subr.bf16.mxu0 0
        %883 = vmatpush1.bf16.msra.mxu0 0
        %884 = vmatprep.subr.bf16.mxu0 0
        %885 = vmatpush1.bf16.msra.mxu0 0
        %886 = vmatprep.subr.bf16.mxu0 0
        %887 = vmatpush1.bf16.msra.mxu0 0
        %888 = vmatprep.subr.bf16.mxu0 0
        %889 = vmatpush1.bf16.msra.mxu0 0
        %890 = vmatprep.subr.bf16.mxu0 0
        %891 = vmatpush1.bf16.msra.mxu0 0
        %892 = vmatprep.subr.bf16.mxu0 0
        %893 = vmatpush1.bf16.msra.mxu0 0
        %894 = vmatprep.subr.bf16.mxu0 0
        %895 = vmatpush1.bf16.msra.mxu0 0
        %896 = vmatprep.subr.bf16.mxu0 0
        %897 = vmatpush1.bf16.msra.mxu0 0
        %898 = vmatprep.subr.bf16.mxu0 0
        %899 = vmatpush1.bf16.msra.mxu0 0
        %900 = vmatprep.subr.bf16.mxu0 0
        %901 = vmatpush1.bf16.msra.mxu0 0
        %902 = vmatprep.subr.bf16.mxu0 0
        %903 = vmatpush1.bf16.msra.mxu0 0
        %904 = vmatprep.subr.bf16.mxu0 0
        %905 = vmatpush1.bf16.msra.mxu0 0
        %906 = vmatprep.subr.bf16.mxu0 0
        %907 = vmatpush1.bf16.msra.mxu0 0
        %908 = vmatprep.subr.bf16.mxu0 0
        %909 = vmatpush1.bf16.msra.mxu0 0
        %910 = vmatprep.subr.bf16.mxu0 0
        %911 = vmatpush1.bf16.msra.mxu0 0
        %912 = vmatprep.mubr.bf16.mxu0 0
        %913 = vmatmul.mubr.bf16.gmra.mrb[0].mxu0 %v872
        %v914 = vpop.f32.mrb[0].mxu0
        %v915 = vadd.f32 %v849, %v914
        %v916 = vpop.f32.mrb[0].mxu0
        %v917 = vadd.f32 %v851, %v916
        %v918 = vpop.f32.mrb[0].mxu0
        %v919 = vadd.f32 %v853, %v918
        %v920 = vpop.f32.mrb[0].mxu0
        %v921 = vadd.f32 %v855, %v920
        %922 = vdwg.mxu0
        %s923 = scalar_lea.vmem %s2, 56
        %v924 = vld [vmem:[%s923] sm:$0xf]
        %v925 = vld [vmem:[%s923 + $0x4] sm:$0xf]
        %v928 = vunpack.c.l.b16 %v924
        %v929 = vunpack.c.l.b16 %v925
        %v930 = vpack.c.b16 %v929, %v928
        %931 = vrot.lane.b32.xlu0 %v581, 95
        %v932 = vpop.permute.xlu0 %931
        %933 = vrot.lane.b32.xlu0 %v582, 95
        %v934 = vpop.permute.xlu0 %933
        %935 = vrot.lane.b32.xlu0 %v583, 95
        %v936 = vpop.permute.xlu0 %935
        %vm937 = vcmask 777216
        %v938 = vsel %vm937, %v932, %v934
        %v939 = vsel %vm937, %v934, %v936
        %v941 = vsel %vm601, %v930, 0
        %v944 = vsel %vm605, %v938, 0
        %v947 = vsel %vm605, %v939, 0
        %949 = vmatprep.subr.bf16.mxu0 %v947
        %950 = vmatpush1.bf16.msra.mxu0 %v944
        %951 = vmatprep.subr.bf16.mxu0 0
        %952 = vmatpush1.bf16.msra.mxu0 0
        %953 = vmatprep.subr.bf16.mxu0 0
        %954 = vmatpush1.bf16.msra.mxu0 0
        %955 = vmatprep.subr.bf16.mxu0 0
        %956 = vmatpush1.bf16.msra.mxu0 0
        %957 = vmatprep.subr.bf16.mxu0 0
        %958 = vmatpush1.bf16.msra.mxu0 0
        %959 = vmatprep.subr.bf16.mxu0 0
        %960 = vmatpush1.bf16.msra.mxu0 0
        %961 = vmatprep.subr.bf16.mxu0 0
        %962 = vmatpush1.bf16.msra.mxu0 0
        %963 = vmatprep.subr.bf16.mxu0 0
        %964 = vmatpush1.bf16.msra.mxu0 0
        %965 = vmatprep.subr.bf16.mxu0 0
        %966 = vmatpush1.bf16.msra.mxu0 0
        %967 = vmatprep.subr.bf16.mxu0 0
        %968 = vmatpush1.bf16.msra.mxu0 0
        %969 = vmatprep.subr.bf16.mxu0 0
        %970 = vmatpush1.bf16.msra.mxu0 0
        %971 = vmatprep.subr.bf16.mxu0 0
        %972 = vmatpush1.bf16.msra.mxu0 0
        %973 = vmatprep.subr.bf16.mxu0 0
        %974 = vmatpush1.bf16.msra.mxu0 0
        %975 = vmatprep.subr.bf16.mxu0 0
        %976 = vmatpush1.bf16.msra.mxu0 0
        %977 = vmatprep.subr.bf16.mxu0 0
        %978 = vmatpush1.bf16.msra.mxu0 0
        %979 = vmatprep.subr.bf16.mxu0 0
        %980 = vmatpush1.bf16.msra.mxu0 0
        %981 = vmatprep.mubr.bf16.mxu0 0
        %982 = vmatmul.mubr.bf16.gmra.mrb[0].mxu0 %v941
        %v983 = vpop.f32.mrb[0].mxu0
        %v984 = vadd.f32 0.0, %v983
        %v985 = vpop.f32.mrb[0].mxu0
        %v986 = vadd.f32 0.0, %v985
        %v987 = vpop.f32.mrb[0].mxu0
        %v988 = vadd.f32 0.0, %v987
        %v989 = vpop.f32.mrb[0].mxu0
        %v990 = vadd.f32 0.0, %v989
        %991 = vdwg.mxu0
        %v992 = vadd.f32 %v915, %v984
        %v993 = vadd.f32 %v917, %v986
        %v994 = vadd.f32 %v919, %v988
        %v995 = vadd.f32 %v921, %v990
        %s996 = scalar_lea.vmem %s2, 16
        %v997 = vld [vmem:[%s996] sm:$0xf]
        %v998 = vld [vmem:[%s996 + $0x4] sm:$0xf]
        %s999 = scalar_lea.vmem %s2, 40
        %v1000 = vld [vmem:[%s999] sm:$0xf]
        %v1001 = vld [vmem:[%s999 + $0x4] sm:$0xf]
        %v1004 = vunpack.c.l.b16 %v1000
        %v1005 = vunpack.c.l.b16 %v1001
        %v1006 = vpack.c.b16 %v1005, %v1004
        %1007 = vrot.lane.b32.xlu0 %v581, 110
        %v1008 = vpop.permute.xlu0 %1007
        %1009 = vrot.lane.b32.xlu0 %v582, 110
        %v1010 = vpop.permute.xlu0 %1009
        %1011 = vrot.lane.b32.xlu0 %v583, 110
        %v1012 = vpop.permute.xlu0 %1011
        %vm1013 = vcmask 900096
        %v1014 = vsel %vm1013, %v1008, %v1010
        %v1015 = vsel %vm1013, %v1010, %v1012
        %v1017 = vsel %vm601, %v1006, 0
        %v1020 = vsel %vm605, %v1014, 0
        %v1023 = vsel %vm605, %v1015, 0
        %1025 = vmatprep.subr.bf16.mxu0 %v1023
        %1026 = vmatpush1.bf16.msra.mxu0 %v1020
        %1027 = vmatprep.subr.bf16.mxu0 0
        %1028 = vmatpush1.bf16.msra.mxu0 0
        %1029 = vmatprep.subr.bf16.mxu0 0
        %1030 = vmatpush1.bf16.msra.mxu0 0
        %1031 = vmatprep.subr.bf16.mxu0 0
        %1032 = vmatpush1.bf16.msra.mxu0 0
        %1033 = vmatprep.subr.bf16.mxu0 0
        %1034 = vmatpush1.bf16.msra.mxu0 0
        %1035 = vmatprep.subr.bf16.mxu0 0
        %1036 = vmatpush1.bf16.msra.mxu0 0
        %1037 = vmatprep.subr.bf16.mxu0 0
        %1038 = vmatpush1.bf16.msra.mxu0 0
        %1039 = vmatprep.subr.bf16.mxu0 0
        %1040 = vmatpush1.bf16.msra.mxu0 0
        %1041 = vmatprep.subr.bf16.mxu0 0
        %1042 = vmatpush1.bf16.msra.mxu0 0
        %1043 = vmatprep.subr.bf16.mxu0 0
        %1044 = vmatpush1.bf16.msra.mxu0 0
        %1045 = vmatprep.subr.bf16.mxu0 0
        %1046 = vmatpush1.bf16.msra.mxu0 0
        %1047 = vmatprep.subr.bf16.mxu0 0
        %1048 = vmatpush1.bf16.msra.mxu0 0
        %1049 = vmatprep.subr.bf16.mxu0 0
        %1050 = vmatpush1.bf16.msra.mxu0 0
        %1051 = vmatprep.subr.bf16.mxu0 0
        %1052 = vmatpush1.bf16.msra.mxu0 0
        %1053 = vmatprep.subr.bf16.mxu0 0
        %1054 = vmatpush1.bf16.msra.mxu0 0
        %1055 = vmatprep.subr.bf16.mxu0 0
        %1056 = vmatpush1.bf16.msra.mxu0 0
        %1057 = vmatprep.mubr.bf16.mxu0 0
        %1058 = vmatmul.mubr.bf16.gmra.mrb[0].mxu0 %v1017
        %v1059 = vpop.f32.mrb[0].mxu0
        %v1060 = vadd.f32 0.0, %v1059
        %v1061 = vpop.f32.mrb[0].mxu0
        %v1062 = vadd.f32 0.0, %v1061
        %v1063 = vpop.f32.mrb[0].mxu0
        %v1064 = vadd.f32 0.0, %v1063
        %v1065 = vpop.f32.mrb[0].mxu0
        %v1066 = vadd.f32 0.0, %v1065
        %1067 = vdwg.mxu0
        %v1070 = vunpack.c.l.b16 %v997
        %v1071 = vunpack.c.l.b16 %v998
        %v1072 = vpack.c.b16 %v1071, %v1070
        %1073 = vrot.lane.b32.xlu0 %v581, 126
        %v1074 = vpop.permute.xlu0 %1073
        %1075 = vrot.lane.b32.xlu0 %v582, 126
        %v1076 = vpop.permute.xlu0 %1075
        %1077 = vrot.lane.b32.xlu0 %v583, 126
        %v1078 = vpop.permute.xlu0 %1077
        %vm1079 = vcmask 1031168
        %v1080 = vsel %vm1079, %v1074, %v1076
        %v1081 = vsel %vm1079, %v1076, %v1078
        %v1083 = vsel %vm601, %v1072, 0
        %v1086 = vsel %vm605, %v1080, 0
        %v1089 = vsel %vm605, %v1081, 0
        %1091 = vmatprep.subr.bf16.mxu0 %v1089
        %1092 = vmatpush1.bf16.msra.mxu0 %v1086
        %1093 = vmatprep.subr.bf16.mxu0 0
        %1094 = vmatpush1.bf16.msra.mxu0 0
        %1095 = vmatprep.subr.bf16.mxu0 0
        %1096 = vmatpush1.bf16.msra.mxu0 0
        %1097 = vmatprep.subr.bf16.mxu0 0
        %1098 = vmatpush1.bf16.msra.mxu0 0
        %1099 = vmatprep.subr.bf16.mxu0 0
        %1100 = vmatpush1.bf16.msra.mxu0 0
        %1101 = vmatprep.subr.bf16.mxu0 0
        %1102 = vmatpush1.bf16.msra.mxu0 0
        %1103 = vmatprep.subr.bf16.mxu0 0
        %1104 = vmatpush1.bf16.msra.mxu0 0
        %1105 = vmatprep.subr.bf16.mxu0 0
        %1106 = vmatpush1.bf16.msra.mxu0 0
        %1107 = vmatprep.subr.bf16.mxu0 0
        %1108 = vmatpush1.bf16.msra.mxu0 0
        %1109 = vmatprep.subr.bf16.mxu0 0
        %1110 = vmatpush1.bf16.msra.mxu0 0
        %1111 = vmatprep.subr.bf16.mxu0 0
        %1112 = vmatpush1.bf16.msra.mxu0 0
        %1113 = vmatprep.subr.bf16.mxu0 0
        %1114 = vmatpush1.bf16.msra.mxu0 0
        %1115 = vmatprep.subr.bf16.mxu0 0
        %1116 = vmatpush1.bf16.msra.mxu0 0
        %1117 = vmatprep.subr.bf16.mxu0 0
        %1118 = vmatpush1.bf16.msra.mxu0 0
        %1119 = vmatprep.subr.bf16.mxu0 0
        %1120 = vmatpush1.bf16.msra.mxu0 0
        %1121 = vmatprep.subr.bf16.mxu0 0
        %1122 = vmatpush1.bf16.msra.mxu0 0
        %1123 = vmatprep.mubr.bf16.mxu0 0
        %1124 = vmatmul.mubr.bf16.gmra.mrb[0].mxu0 %v1083
        %v1125 = vpop.f32.mrb[0].mxu0
        %v1126 = vadd.f32 %v1060, %v1125
        %v1127 = vpop.f32.mrb[0].mxu0
        %v1128 = vadd.f32 %v1062, %v1127
        %v1129 = vpop.f32.mrb[0].mxu0
        %v1130 = vadd.f32 %v1064, %v1129
        %v1131 = vpop.f32.mrb[0].mxu0
        %v1132 = vadd.f32 %v1066, %v1131
        %1133 = vdwg.mxu0
        %s1134 = scalar_lea.vmem %s2, 64
        %v1135 = vld [vmem:[%s1134] sm:$0xf]
        %v1136 = vld [vmem:[%s1134 + $0x4] sm:$0xf]
        %v1139 = vunpack.c.l.b16 %v1135
        %v1140 = vunpack.c.l.b16 %v1136
        %v1141 = vpack.c.b16 %v1140, %v1139
        %1142 = vrot.lane.b32.xlu0 %v581, 94
        %v1143 = vpop.permute.xlu0 %1142
        %1144 = vrot.lane.b32.xlu0 %v582, 94
        %v1145 = vpop.permute.xlu0 %1144
        %1146 = vrot.lane.b32.xlu0 %v583, 94
        %v1147 = vpop.permute.xlu0 %1146
        %vm1148 = vcmask 769024
        %v1149 = vsel %vm1148, %v1143, %v1145
        %v1150 = vsel %vm1148, %v1145, %v1147
        %v1152 = vsel %vm601, %v1141, 0
        %v1155 = vsel %vm605, %v1149, 0
        %v1158 = vsel %vm605, %v1150, 0
        %1160 = vmatprep.subr.bf16.mxu0 %v1158
        %1161 = vmatpush1.bf16.msra.mxu0 %v1155
        %1162 = vmatprep.subr.bf16.mxu0 0
        %1163 = vmatpush1.bf16.msra.mxu0 0
        %1164 = vmatprep.subr.bf16.mxu0 0
        %1165 = vmatpush1.bf16.msra.mxu0 0
        %1166 = vmatprep.subr.bf16.mxu0 0
        %1167 = vmatpush1.bf16.msra.mxu0 0
        %1168 = vmatprep.subr.bf16.mxu0 0
        %1169 = vmatpush1.bf16.msra.mxu0 0
        %1170 = vmatprep.subr.bf16.mxu0 0
        %1171 = vmatpush1.bf16.msra.mxu0 0
        %1172 = vmatprep.subr.bf16.mxu0 0
        %1173 = vmatpush1.bf16.msra.mxu0 0
        %1174 = vmatprep.subr.bf16.mxu0 0
        %1175 = vmatpush1.bf16.msra.mxu0 0
        %1176 = vmatprep.subr.bf16.mxu0 0
        %1177 = vmatpush1.bf16.msra.mxu0 0
        %1178 = vmatprep.subr.bf16.mxu0 0
        %1179 = vmatpush1.bf16.msra.mxu0 0
        %1180 = vmatprep.subr.bf16.mxu0 0
        %1181 = vmatpush1.bf16.msra.mxu0 0
        %1182 = vmatprep.subr.bf16.mxu0 0
        %1183 = vmatpush1.bf16.msra.mxu0 0
        %1184 = vmatprep.subr.bf16.mxu0 0
        %1185 = vmatpush1.bf16.msra.mxu0 0
        %1186 = vmatprep.subr.bf16.mxu0 0
        %1187 = vmatpush1.bf16.msra.mxu0 0
        %1188 = vmatprep.subr.bf16.mxu0 0
        %1189 = vmatpush1.bf16.msra.mxu0 0
        %1190 = vmatprep.subr.bf16.mxu0 0
        %1191 = vmatpush1.bf16.msra.mxu0 0
        %1192 = vmatprep.mubr.bf16.mxu0 0
        %1193 = vmatmul.mubr.bf16.gmra.mrb[0].mxu0 %v1152
        %v1194 = vpop.f32.mrb[0].mxu0
        %v1195 = vadd.f32 0.0, %v1194
        %v1196 = vpop.f32.mrb[0].mxu0
        %v1197 = vadd.f32 0.0, %v1196
        %v1198 = vpop.f32.mrb[0].mxu0
        %v1199 = vadd.f32 0.0, %v1198
        %v1200 = vpop.f32.mrb[0].mxu0
        %v1201 = vadd.f32 0.0, %v1200
        %1202 = vdwg.mxu0
        %v1203 = vadd.f32 %v1126, %v1195
        %v1204 = vadd.f32 %v1128, %v1197
        %v1205 = vadd.f32 %v1130, %v1199
        %v1206 = vadd.f32 %v1132, %v1201
        %v1208 = vlaneseq
        %v1209 = vshrl.u32 %v1208, 7
        %v1210 = vsub.s32 0, %v1209
        %v1211 = vrot.slane %v541, %v1210
        %v1212 = vlaneseq
        %v1213 = vshrl.u32 %v1212, 7
        %v1214 = vsub.s32 1, %v1213
        %v1215 = vrot.slane %v541, %v1214
        %v1218 = vmul.f32 %v781, %v1211
        %v1219 = vmul.f32 %v782, %v1215
        %v1220 = vmul.f32 %v783, %v1211
        %v1221 = vmul.f32 %v784, %v1215
        %v1222 = vadd.f32 %v1218, %v992
        %v1223 = vadd.f32 %v1219, %v993
        %v1224 = vadd.f32 %v1220, %v994
        %v1225 = vadd.f32 %v1221, %v995
        %v1227 = vlaneseq
        %v1228 = vshrl.u32 %v1227, 7
        %v1229 = vsub.s32 0, %v1228
        %v1230 = vrot.slane %v543, %v1229
        %v1231 = vlaneseq
        %v1232 = vshrl.u32 %v1231, 7
        %v1233 = vsub.s32 1, %v1232
        %v1234 = vrot.slane %v543, %v1233
        %v1237 = vmul.f32 %v1203, %v1230
        %v1238 = vmul.f32 %v1204, %v1234
        %v1239 = vmul.f32 %v1205, %v1230
        %v1240 = vmul.f32 %v1206, %v1234
        %v1241 = vadd.f32 %v1222, %v1237
        %v1242 = vadd.f32 %v1223, %v1238
        %v1243 = vadd.f32 %v1224, %v1239
        %v1244 = vadd.f32 %v1225, %v1240
        %v1245 = vld [vmem:[%s3] sm:$0xff]
        %v1246 = vld [vmem:[%s3 + $0x8] sm:$0xff]
        %1248 = vset.pattern.permute.xlu0 0
        %1249 = vperm.xlu0 %1248, %v1245
        %v1250 = vpop.permute.xlu0 %1249
        %1253 = vset.pattern.permute.xlu0 0
        %1254 = vperm.xlu0 %1253, %v1246
        %v1255 = vpop.permute.xlu0 %1254
        %v1257 = vadd.f32 %v1241, %v1250
        %v1258 = vadd.f32 %v1242, %v1250
        %v1259 = vadd.f32 %v1243, %v1255
        %v1260 = vadd.f32 %v1244, %v1255
        %v1261 = vld [vmem:[%s4] sm:$0xff]
        %v1262 = vld [vmem:[%s4 + $0x8] sm:$0xff]
        %v1263 = vld [vmem:[%s5] sm:$0xff]
        %v1264 = vld [vmem:[%s5 + $0x8] sm:$0xff]
        %v1265 = vadd.f32 %v1257, %v1258
        %1266 = vadd.xlane.f32.xlu0 %v1265
        %v1267 = vpop.xlane.xlu0 %1266
        %v1268 = vadd.f32 %v1259, %v1260
        %1269 = vadd.xlane.f32.xlu0 %v1268
        %v1270 = vpop.xlane.xlu0 %1269
        %vm1271 = vcmask 130048
        %v1273 = vsel %vm1271, %v544, 0
        %v1276 = vsel %vm1271, %v545, 0
        %1278 = vmatprep.subr.mxu0 0.0
        %1279 = vmatpush1.msra.mxu0 %v1267
        %1280 = vmatprep.subr.mxu0 0.0
        %1281 = vmatpush1.msra.mxu0 %v1270
        %1282 = vmatprep.subr.mxu0 0.0
        %1283 = vmatpush1.msra.mxu0 0.0
        %1284 = vmatprep.subr.mxu0 0.0
        %1285 = vmatpush1.msra.mxu0 0.0
        %1286 = vmatprep.subr.mxu0 0.0
        %1287 = vmatpush1.msra.mxu0 0.0
        %1288 = vmatprep.subr.mxu0 0.0
        %1289 = vmatpush1.msra.mxu0 0.0
        %1290 = vmatprep.subr.mxu0 0.0
        %1291 = vmatpush1.msra.mxu0 0.0
        %1292 = vmatprep.subr.mxu0 0.0
        %1293 = vmatpush1.msra.mxu0 0.0
        %1294 = vmatprep.subr.mxu0 0.0
        %1295 = vmatpush1.msra.mxu0 0.0
        %1296 = vmatprep.subr.mxu0 0.0
        %1297 = vmatpush1.msra.mxu0 0.0
        %1298 = vmatprep.subr.mxu0 0.0
        %1299 = vmatpush1.msra.mxu0 0.0
        %1300 = vmatprep.subr.mxu0 0.0
        %1301 = vmatpush1.msra.mxu0 0.0
        %1302 = vmatprep.subr.mxu0 0.0
        %1303 = vmatpush1.msra.mxu0 0.0
        %1304 = vmatprep.subr.mxu0 0.0
        %1305 = vmatpush1.msra.mxu0 0.0
        %1306 = vmatprep.subr.mxu0 0.0
        %1307 = vmatpush1.msra.mxu0 0.0
        %1308 = vmatprep.subr.mxu0 0.0
        %1309 = vmatpush1.msra.mxu0 0.0
        %1310 = vmatprep.subr.mxu0 0.0
        %1311 = vmatpush1.msra.mxu0 0.0
        %1312 = vmatprep.subr.mxu0 0.0
        %1313 = vmatpush1.msra.mxu0 0.0
        %1314 = vmatprep.subr.mxu0 0.0
        %1315 = vmatpush1.msra.mxu0 0.0
        %1316 = vmatprep.subr.mxu0 0.0
        %1317 = vmatpush1.msra.mxu0 0.0
        %1318 = vmatprep.subr.mxu0 0.0
        %1319 = vmatpush1.msra.mxu0 0.0
        %1320 = vmatprep.subr.mxu0 0.0
        %1321 = vmatpush1.msra.mxu0 0.0
        %1322 = vmatprep.subr.mxu0 0.0
        %1323 = vmatpush1.msra.mxu0 0.0
        %1324 = vmatprep.subr.mxu0 0.0
        %1325 = vmatpush1.msra.mxu0 0.0
        %1326 = vmatprep.subr.mxu0 0.0
        %1327 = vmatpush1.msra.mxu0 0.0
        %1328 = vmatprep.subr.mxu0 0.0
        %1329 = vmatpush1.msra.mxu0 0.0
        %1330 = vmatprep.subr.mxu0 0.0
        %1331 = vmatpush1.msra.mxu0 0.0
        %1332 = vmatprep.subr.mxu0 0.0
        %1333 = vmatpush1.msra.mxu0 0.0
        %1334 = vmatprep.subr.mxu0 0.0
        %1335 = vmatpush1.msra.mxu0 0.0
        %1336 = vmatprep.subr.mxu0 0.0
        %1337 = vmatpush1.msra.mxu0 0.0
        %1338 = vmatprep.subr.mxu0 0.0
        %1339 = vmatpush1.msra.mxu0 0.0
        %1340 = vmatprep.subr.mxu0 0.0
        %1341 = vmatpush1.msra.mxu0 0.0
        %1342 = vmatprep.mubr.f32.mxu0 0.0
        %1343 = vmatmul.mubr.f32.gmra.mrb[0].mxu0 %v1273
        %v1344 = vpop.f32.mrb[0].mxu0
        %v1345 = vadd.f32 0.0, %v1344
        %v1346 = vpop.f32.mrb[0].mxu0
        %1347 = vmatprep.mubr.f32.mxu0 0.0
        %1348 = vmatmul.mubr.f32.gmra.mrb[0].mxu0 %v1276
        %v1349 = vpop.f32.mrb[0].mxu0
        %v1350 = vadd.f32 0.0, %v1349
        %v1351 = vpop.f32.mrb[0].mxu0
        %1352 = vdwg.mxu0
        %1354 = vset.pattern.permute.xlu0 0
        %1355 = vperm.xlu0 %1354, %v1345
        %v1356 = vpop.permute.xlu0 %1355
        %1359 = vset.pattern.permute.xlu0 0
        %1360 = vperm.xlu0 %1359, %v1350
        %v1361 = vpop.permute.xlu0 %1360
        %v1363 = vsub.f32 %v1257, %v1356
        %v1364 = vsub.f32 %v1258, %v1356
        %v1365 = vsub.f32 %v1259, %v1361
        %v1366 = vsub.f32 %v1260, %v1361
        %v1367 = vmul.f32 %v1363, %v1363
        %v1368 = vmul.f32 %v1364, %v1364
        %v1369 = vmul.f32 %v1365, %v1365
        %v1370 = vmul.f32 %v1366, %v1366
        %v1371 = vadd.f32 %v1367, %v1368
        %1372 = vadd.xlane.f32.xlu0 %v1371
        %v1373 = vpop.xlane.xlu0 %1372
        %v1374 = vadd.f32 %v1369, %v1370
        %1375 = vadd.xlane.f32.xlu0 %v1374
        %v1376 = vpop.xlane.xlu0 %1375
        %1377 = vmatprep.subr.mxu0 0.0
        %1378 = vmatpush1.msra.mxu0 %v1373
        %1379 = vmatprep.subr.mxu0 0.0
        %1380 = vmatpush1.msra.mxu0 %v1376
        %1381 = vmatprep.subr.mxu0 0.0
        %1382 = vmatpush1.msra.mxu0 0.0
        %1383 = vmatprep.subr.mxu0 0.0
        %1384 = vmatpush1.msra.mxu0 0.0
        %1385 = vmatprep.subr.mxu0 0.0
        %1386 = vmatpush1.msra.mxu0 0.0
        %1387 = vmatprep.subr.mxu0 0.0
        %1388 = vmatpush1.msra.mxu0 0.0
        %1389 = vmatprep.subr.mxu0 0.0
        %1390 = vmatpush1.msra.mxu0 0.0
        %1391 = vmatprep.subr.mxu0 0.0
        %1392 = vmatpush1.msra.mxu0 0.0
        %1393 = vmatprep.subr.mxu0 0.0
        %1394 = vmatpush1.msra.mxu0 0.0
        %1395 = vmatprep.subr.mxu0 0.0
        %1396 = vmatpush1.msra.mxu0 0.0
        %1397 = vmatprep.subr.mxu0 0.0
        %1398 = vmatpush1.msra.mxu0 0.0
        %1399 = vmatprep.subr.mxu0 0.0
        %1400 = vmatpush1.msra.mxu0 0.0
        %1401 = vmatprep.subr.mxu0 0.0
        %1402 = vmatpush1.msra.mxu0 0.0
        %1403 = vmatprep.subr.mxu0 0.0
        %1404 = vmatpush1.msra.mxu0 0.0
        %1405 = vmatprep.subr.mxu0 0.0
        %1406 = vmatpush1.msra.mxu0 0.0
        %1407 = vmatprep.subr.mxu0 0.0
        %1408 = vmatpush1.msra.mxu0 0.0
        %1409 = vmatprep.subr.mxu0 0.0
        %1410 = vmatpush1.msra.mxu0 0.0
        %1411 = vmatprep.subr.mxu0 0.0
        %1412 = vmatpush1.msra.mxu0 0.0
        %1413 = vmatprep.subr.mxu0 0.0
        %1414 = vmatpush1.msra.mxu0 0.0
        %1415 = vmatprep.subr.mxu0 0.0
        %1416 = vmatpush1.msra.mxu0 0.0
        %1417 = vmatprep.subr.mxu0 0.0
        %1418 = vmatpush1.msra.mxu0 0.0
        %1419 = vmatprep.subr.mxu0 0.0
        %1420 = vmatpush1.msra.mxu0 0.0
        %1421 = vmatprep.subr.mxu0 0.0
        %1422 = vmatpush1.msra.mxu0 0.0
        %1423 = vmatprep.subr.mxu0 0.0
        %1424 = vmatpush1.msra.mxu0 0.0
        %1425 = vmatprep.subr.mxu0 0.0
        %1426 = vmatpush1.msra.mxu0 0.0
        %1427 = vmatprep.subr.mxu0 0.0
        %1428 = vmatpush1.msra.mxu0 0.0
        %1429 = vmatprep.subr.mxu0 0.0
        %1430 = vmatpush1.msra.mxu0 0.0
        %1431 = vmatprep.subr.mxu0 0.0
        %1432 = vmatpush1.msra.mxu0 0.0
        %1433 = vmatprep.subr.mxu0 0.0
        %1434 = vmatpush1.msra.mxu0 0.0
        %1435 = vmatprep.subr.mxu0 0.0
        %1436 = vmatpush1.msra.mxu0 0.0
        %1437 = vmatprep.subr.mxu0 0.0
        %1438 = vmatpush1.msra.mxu0 0.0
        %1439 = vmatprep.subr.mxu0 0.0
        %1440 = vmatpush1.msra.mxu0 0.0
        %1441 = vmatprep.mubr.f32.mxu0 0.0
        %1442 = vmatmul.mubr.f32.gmra.mrb[0].mxu0 %v1273
        %v1443 = vpop.f32.mrb[0].mxu0
        %v1444 = vadd.f32 1e-05, %v1443
        %v1445 = vpop.f32.mrb[0].mxu0
        %1446 = vmatprep.mubr.f32.mxu0 0.0
        %1447 = vmatmul.mubr.f32.gmra.mrb[0].mxu0 %v1276
        %v1448 = vpop.f32.mrb[0].mxu0
        %v1449 = vadd.f32 1e-05, %v1448
        %v1450 = vpop.f32.mrb[0].mxu0
        %1451 = vdwg.mxu0
        %v1452 = vrsqrt.pop %v1444
        %v1453 = vrsqrt.pop %v1449
        %v1454 = vmul.f32 %v1452, %v1261
        %v1455 = vmul.f32 %v1453, %v1262
        %1457 = vset.pattern.permute.xlu0 0
        %1458 = vperm.xlu0 %1457, %v1454
        %v1459 = vpop.permute.xlu0 %1458
        %1462 = vset.pattern.permute.xlu0 0
        %1463 = vperm.xlu0 %1462, %v1455
        %v1464 = vpop.permute.xlu0 %1463
        %v1466 = vmul.f32 %v1363, %v1459
        %v1467 = vmul.f32 %v1364, %v1459
        %v1468 = vmul.f32 %v1365, %v1464
        %v1469 = vmul.f32 %v1366, %v1464
        %1471 = vset.pattern.permute.xlu0 0
        %1472 = vperm.xlu0 %1471, %v1263
        %v1473 = vpop.permute.xlu0 %1472
        %1476 = vset.pattern.permute.xlu0 0
        %1477 = vperm.xlu0 %1476, %v1264
        %v1478 = vpop.permute.xlu0 %1477
        %v1480 = vadd.f32 %v1466, %v1473
        %v1481 = vadd.f32 %v1467, %v1473
        %v1482 = vadd.f32 %v1468, %v1478
        %v1483 = vadd.f32 %v1469, %v1478
        %v1484 = vsub.f32 0.0, %v1480
        %v1485 = vsub.f32 0.0, %v1481
        %v1486 = vsub.f32 0.0, %v1482
        %v1487 = vsub.f32 0.0, %v1483
        %v1488 = vmul.f32 %v1484, 1.442695
        %v1489 = vpow.pop %v1488
        %v1490 = vmul.f32 %v1485, 1.442695
        %v1491 = vpow.pop %v1490
        %v1492 = vmul.f32 %v1486, 1.442695
        %v1493 = vpow.pop %v1492
        %v1494 = vmul.f32 %v1487, 1.442695
        %v1495 = vpow.pop %v1494
        %v1496 = vadd.f32 %v1489, 1.0
        %v1497 = vadd.f32 %v1491, 1.0
        %v1498 = vadd.f32 %v1493, 1.0
        %v1499 = vadd.f32 %v1495, 1.0
        %v1500 = vrcp.pop %v1496
        %v1501 = vrcp.pop %v1497
        %v1502 = vrcp.pop %v1498
        %v1503 = vrcp.pop %v1499
        %v1504 = vmul.f32 %v1480, %v1500
        %v1505 = vmul.f32 %v1481, %v1501
        %v1506 = vmul.f32 %v1482, %v1502
        %v1507 = vmul.f32 %v1483, %v1503
        %v1508 = vld [vmem:[%s6] sm:$0xf]
        %v1509 = vld [vmem:[%s6 + $0x4] sm:$0xf]
        %v1510 = vld [vmem:[%s539] sm:$0xf]
        %v1511 = vld [vmem:[%s539 + $0x4] sm:$0xf]
        %v1512 = vld [vmem:[%s539 + $0x8] sm:$0xf]
        %v1513 = vld [vmem:[%s539 + $0xc] sm:$0xf]
        %v1514 = vld [vmem:[%s7] sm:$0xff]
        %v1515 = vld [vmem:[%s7 + $0x8] sm:$0xff]
        %v1518 = vunpack.c.l.b16 %v1508
        %v1519 = vunpack.c.l.b16 %v1509
        %v1520 = vpack.c.b16 %v1519, %v1518
        %v1525 = vunpack.c.l.b16 %v1510
        %v1526 = vunpack.c.l.b16 %v1511
        %v1527 = vunpack.c.l.b16 %v1512
        %v1528 = vunpack.c.l.b16 %v1513
        %v1529 = vpack.c.b16 %v1526, %v1525
        %v1530 = vpack.c.b16 %v1528, %v1527
        %vm1533 = vcmask 261120
        %v1535 = vsel %vm1533, %v1520, 0
        %1537 = vmatprep.subr.bf16.mxu0 0
        %1538 = vmatpush1.bf16.msra.mxu0 %v1529
        %1539 = vmatprep.subr.bf16.mxu0 0
        %1540 = vmatpush1.bf16.msra.mxu0 %v1530
        %1541 = vmatprep.subr.bf16.mxu0 0
        %1542 = vmatpush1.bf16.msra.mxu0 0
        %1543 = vmatprep.subr.bf16.mxu0 0
        %1544 = vmatpush1.bf16.msra.mxu0 0
        %1545 = vmatprep.subr.bf16.mxu0 0
        %1546 = vmatpush1.bf16.msra.mxu0 0
        %1547 = vmatprep.subr.bf16.mxu0 0
        %1548 = vmatpush1.bf16.msra.mxu0 0
        %1549 = vmatprep.subr.bf16.mxu0 0
        %1550 = vmatpush1.bf16.msra.mxu0 0
        %1551 = vmatprep.subr.bf16.mxu0 0
        %1552 = vmatpush1.bf16.msra.mxu0 0
        %1553 = vmatprep.subr.bf16.mxu0 0
        %1554 = vmatpush1.bf16.msra.mxu0 0
        %1555 = vmatprep.subr.bf16.mxu0 0
        %1556 = vmatpush1.bf16.msra.mxu0 0
        %1557 = vmatprep.subr.bf16.mxu0 0
        %1558 = vmatpush1.bf16.msra.mxu0 0
        %1559 = vmatprep.subr.bf16.mxu0 0
        %1560 = vmatpush1.bf16.msra.mxu0 0
        %1561 = vmatprep.subr.bf16.mxu0 0
        %1562 = vmatpush1.bf16.msra.mxu0 0
        %1563 = vmatprep.subr.bf16.mxu0 0
        %1564 = vmatpush1.bf16.msra.mxu0 0
        %1565 = vmatprep.subr.bf16.mxu0 0
        %1566 = vmatpush1.bf16.msra.mxu0 0
        %1567 = vmatprep.subr.bf16.mxu0 0
        %1568 = vmatpush1.bf16.msra.mxu0 0
        %1569 = vmatprep.mubr.bf16.mxu0 0
        %1570 = vmatmul.mubr.bf16.gmra.mrb[0].mxu0 %v1535
        %v1571 = vpop.f32.mrb[0].mxu0
        %v1572 = vadd.f32 %v1514, %v1571
        %v1573 = vpop.f32.mrb[0].mxu0
        %v1574 = vpop.f32.mrb[0].mxu0
        %v1575 = vadd.f32 %v1515, %v1574
        %v1576 = vpop.f32.mrb[0].mxu0
        %1577 = vdwg.mxu0
        %1579 = vset.pattern.permute.xlu0 0
        %1580 = vperm.xlu0 %1579, %v1572
        %v1581 = vpop.permute.xlu0 %1580
        %1584 = vset.pattern.permute.xlu0 0
        %1585 = vperm.xlu0 %1584, %v1575
        %v1586 = vpop.permute.xlu0 %1585
        %v1588 = vadd.f32 %v1504, %v1581
        %v1589 = vadd.f32 %v1505, %v1581
        %v1590 = vadd.f32 %v1506, %v1586
        %v1591 = vadd.f32 %v1507, %v1586
        %v1592 = vpack.c.bf16 %v1590, %v1588
        %v1593 = vpack.c.bf16 %v1591, %v1589
        %1596 = vrot.lane.b32.xlu0 %v1592, 17
        %v1597 = vpop.permute.xlu0 %1596
        %1598 = vrot.lane.b32.xlu0 %v1593, 17
        %v1599 = vpop.permute.xlu0 %1598
        %v1600 = vsel %vm564, %v1597, %v1599
        %vm1604 = vcmask 1047688
        %1605 = vst.msk [vmem:[#allocation2] sm:$0xff] %vm1604, %v1597
        %1606 = vst [vmem:[#allocation2 + $0x8] sm:$0xff] %v1600
        %1607 = vst.msk [vmem:[#allocation2 + $0x10] sm:$0xff] %vm546, %v1599
        %v1608 = vld [vmem:[%s8] sm:$0xf]
        %v1609 = vld [vmem:[%s8 + $0x4] sm:$0xf]
        %v1610 = vld [vmem:[#allocation2] sm:$0xff]
        %v1611 = vld [vmem:[#allocation2 + $0x8] sm:$0xff]
        %s1612 = scalar_lea.vmem %s8, 24
        %v1613 = vld [vmem:[%s1612] sm:$0xf]
        %v1614 = vld [vmem:[%s1612 + $0x4] sm:$0xf]
        %v1615 = vld [vmem:[#allocation2] sm:$0xff]
        %v1616 = vld [vmem:[#allocation2 + $0x8] sm:$0xff]
        %v1617 = vld [vmem:[#allocation2 + $0x10] sm:$0xff]
        %v1620 = vunpack.c.l.b16 %v1613
        %v1621 = vunpack.c.l.b16 %v1614
        %v1622 = vpack.c.b16 %v1621, %v1620
        %1626 = vrot.lane.b32.xlu0 %v1615, 112
        %v1627 = vpop.permute.xlu0 %1626
        %1628 = vrot.lane.b32.xlu0 %v1616, 112
        %v1629 = vpop.permute.xlu0 %1628
        %1630 = vrot.lane.b32.xlu0 %v1617, 112
        %v1631 = vpop.permute.xlu0 %1630
        %v1632 = vsel %vm598, %v1627, %v1629
        %v1633 = vsel %vm598, %v1629, %v1631
        %v1637 = vsel %vm1271, %v1622, 0
        %1639 = vmatprep.subr.bf16.mxu0 %v1633
        %1640 = vmatpush1.bf16.msra.mxu0 %v1632
        %1641 = vmatprep.subr.bf16.mxu0 0
        %1642 = vmatpush1.bf16.msra.mxu0 0
        %1643 = vmatprep.subr.bf16.mxu0 0
        %1644 = vmatpush1.bf16.msra.mxu0 0
        %1645 = vmatprep.subr.bf16.mxu0 0
        %1646 = vmatpush1.bf16.msra.mxu0 0
        %1647 = vmatprep.subr.bf16.mxu0 0
        %1648 = vmatpush1.bf16.msra.mxu0 0
        %1649 = vmatprep.subr.bf16.mxu0 0
        %1650 = vmatpush1.bf16.msra.mxu0 0
        %1651 = vmatprep.subr.bf16.mxu0 0
        %1652 = vmatpush1.bf16.msra.mxu0 0
        %1653 = vmatprep.subr.bf16.mxu0 0
        %1654 = vmatpush1.bf16.msra.mxu0 0
        %1655 = vmatprep.subr.bf16.mxu0 0
        %1656 = vmatpush1.bf16.msra.mxu0 0
        %1657 = vmatprep.subr.bf16.mxu0 0
        %1658 = vmatpush1.bf16.msra.mxu0 0
        %1659 = vmatprep.subr.bf16.mxu0 0
        %1660 = vmatpush1.bf16.msra.mxu0 0
        %1661 = vmatprep.subr.bf16.mxu0 0
        %1662 = vmatpush1.bf16.msra.mxu0 0
        %1663 = vmatprep.subr.bf16.mxu0 0
        %1664 = vmatpush1.bf16.msra.mxu0 0
        %1665 = vmatprep.subr.bf16.mxu0 0
        %1666 = vmatpush1.bf16.msra.mxu0 0
        %1667 = vmatprep.subr.bf16.mxu0 0
        %1668 = vmatpush1.bf16.msra.mxu0 0
        %1669 = vmatprep.subr.bf16.mxu0 0
        %1670 = vmatpush1.bf16.msra.mxu0 0
        %1671 = vmatprep.mubr.bf16.mxu0 0
        %1672 = vmatmul.mubr.bf16.gmra.mrb[0].mxu0 %v1637
        %v1673 = vpop.f32.mrb[0].mxu0
        %v1674 = vadd.f32 0.0, %v1673
        %v1675 = vpop.f32.mrb[0].mxu0
        %v1676 = vadd.f32 0.0, %v1675
        %v1677 = vpop.f32.mrb[0].mxu0
        %v1678 = vadd.f32 0.0, %v1677
        %v1679 = vpop.f32.mrb[0].mxu0
        %v1680 = vadd.f32 0.0, %v1679
        %1681 = vdwg.mxu0
        %v1684 = vunpack.c.l.b16 %v1608
        %v1685 = vunpack.c.l.b16 %v1609
        %v1686 = vpack.c.b16 %v1685, %v1684
        %v1688 = vsel %vm1271, %v1686, 0
        %1690 = vmatprep.subr.bf16.mxu0 %v1611
        %1691 = vmatpush1.bf16.msra.mxu0 %v1610
        %1692 = vmatprep.subr.bf16.mxu0 0
        %1693 = vmatpush1.bf16.msra.mxu0 0
        %1694 = vmatprep.subr.bf16.mxu0 0
        %1695 = vmatpush1.bf16.msra.mxu0 0
        %1696 = vmatprep.subr.bf16.mxu0 0
        %1697 = vmatpush1.bf16.msra.mxu0 0
        %1698 = vmatprep.subr.bf16.mxu0 0
        %1699 = vmatpush1.bf16.msra.mxu0 0
        %1700 = vmatprep.subr.bf16.mxu0 0
        %1701 = vmatpush1.bf16.msra.mxu0 0
        %1702 = vmatprep.subr.bf16.mxu0 0
        %1703 = vmatpush1.bf16.msra.mxu0 0
        %1704 = vmatprep.subr.bf16.mxu0 0
        %1705 = vmatpush1.bf16.msra.mxu0 0
        %1706 = vmatprep.subr.bf16.mxu0 0
        %1707 = vmatpush1.bf16.msra.mxu0 0
        %1708 = vmatprep.subr.bf16.mxu0 0
        %1709 = vmatpush1.bf16.msra.mxu0 0
        %1710 = vmatprep.subr.bf16.mxu0 0
        %1711 = vmatpush1.bf16.msra.mxu0 0
        %1712 = vmatprep.subr.bf16.mxu0 0
        %1713 = vmatpush1.bf16.msra.mxu0 0
        %1714 = vmatprep.subr.bf16.mxu0 0
        %1715 = vmatpush1.bf16.msra.mxu0 0
        %1716 = vmatprep.subr.bf16.mxu0 0
        %1717 = vmatpush1.bf16.msra.mxu0 0
        %1718 = vmatprep.subr.bf16.mxu0 0
        %1719 = vmatpush1.bf16.msra.mxu0 0
        %1720 = vmatprep.subr.bf16.mxu0 0
        %1721 = vmatpush1.bf16.msra.mxu0 0
        %1722 = vmatprep.mubr.bf16.mxu0 0
        %1723 = vmatmul.mubr.bf16.gmra.mrb[0].mxu0 %v1688
        %v1724 = vpop.f32.mrb[0].mxu0
        %v1725 = vadd.f32 %v1674, %v1724
        %v1726 = vpop.f32.mrb[0].mxu0
        %v1727 = vadd.f32 %v1676, %v1726
        %v1728 = vpop.f32.mrb[0].mxu0
        %v1729 = vadd.f32 %v1678, %v1728
        %v1730 = vpop.f32.mrb[0].mxu0
        %v1731 = vadd.f32 %v1680, %v1730
        %1732 = vdwg.mxu0
        %s1733 = scalar_lea.vmem %s8, 48
        %v1734 = vld [vmem:[%s1733] sm:$0xf]
        %v1735 = vld [vmem:[%s1733 + $0x4] sm:$0xf]
        %v1738 = vunpack.c.l.b16 %v1734
        %v1739 = vunpack.c.l.b16 %v1735
        %v1740 = vpack.c.b16 %v1739, %v1738
        %1741 = vrot.lane.b32.xlu0 %v1615, 96
        %v1742 = vpop.permute.xlu0 %1741
        %1743 = vrot.lane.b32.xlu0 %v1616, 96
        %v1744 = vpop.permute.xlu0 %1743
        %1745 = vrot.lane.b32.xlu0 %v1617, 96
        %v1746 = vpop.permute.xlu0 %1745
        %v1747 = vsel %vm726, %v1742, %v1744
        %v1748 = vsel %vm726, %v1744, %v1746
        %v1752 = vsel %vm1271, %v1740, 0
        %1754 = vmatprep.subr.bf16.mxu0 %v1748
        %1755 = vmatpush1.bf16.msra.mxu0 %v1747
        %1756 = vmatprep.subr.bf16.mxu0 0
        %1757 = vmatpush1.bf16.msra.mxu0 0
        %1758 = vmatprep.subr.bf16.mxu0 0
        %1759 = vmatpush1.bf16.msra.mxu0 0
        %1760 = vmatprep.subr.bf16.mxu0 0
        %1761 = vmatpush1.bf16.msra.mxu0 0
        %1762 = vmatprep.subr.bf16.mxu0 0
        %1763 = vmatpush1.bf16.msra.mxu0 0
        %1764 = vmatprep.subr.bf16.mxu0 0
        %1765 = vmatpush1.bf16.msra.mxu0 0
        %1766 = vmatprep.subr.bf16.mxu0 0
        %1767 = vmatpush1.bf16.msra.mxu0 0
        %1768 = vmatprep.subr.bf16.mxu0 0
        %1769 = vmatpush1.bf16.msra.mxu0 0
        %1770 = vmatprep.subr.bf16.mxu0 0
        %1771 = vmatpush1.bf16.msra.mxu0 0
        %1772 = vmatprep.subr.bf16.mxu0 0
        %1773 = vmatpush1.bf16.msra.mxu0 0
        %1774 = vmatprep.subr.bf16.mxu0 0
        %1775 = vmatpush1.bf16.msra.mxu0 0
        %1776 = vmatprep.subr.bf16.mxu0 0
        %1777 = vmatpush1.bf16.msra.mxu0 0
        %1778 = vmatprep.subr.bf16.mxu0 0
        %1779 = vmatpush1.bf16.msra.mxu0 0
        %1780 = vmatprep.subr.bf16.mxu0 0
        %1781 = vmatpush1.bf16.msra.mxu0 0
        %1782 = vmatprep.subr.bf16.mxu0 0
        %1783 = vmatpush1.bf16.msra.mxu0 0
        %1784 = vmatprep.subr.bf16.mxu0 0
        %1785 = vmatpush1.bf16.msra.mxu0 0
        %1786 = vmatprep.mubr.bf16.mxu0 0
        %1787 = vmatmul.mubr.bf16.gmra.mrb[0].mxu0 %v1752
        %v1788 = vpop.f32.mrb[0].mxu0
        %v1789 = vadd.f32 0.0, %v1788
        %v1790 = vpop.f32.mrb[0].mxu0
        %v1791 = vadd.f32 0.0, %v1790
        %v1792 = vpop.f32.mrb[0].mxu0
        %v1793 = vadd.f32 0.0, %v1792
        %v1794 = vpop.f32.mrb[0].mxu0
        %v1795 = vadd.f32 0.0, %v1794
        %1796 = vdwg.mxu0
        %v1797 = vadd.f32 %v1725, %v1789
        %v1798 = vadd.f32 %v1727, %v1791
        %v1799 = vadd.f32 %v1729, %v1793
        %v1800 = vadd.f32 %v1731, %v1795
        %s1801 = scalar_lea.vmem %s8, 8
        %v1802 = vld [vmem:[%s1801] sm:$0xf]
        %v1803 = vld [vmem:[%s1801 + $0x4] sm:$0xf]
        %s1804 = scalar_lea.vmem %s8, 32
        %v1805 = vld [vmem:[%s1804] sm:$0xf]
        %v1806 = vld [vmem:[%s1804 + $0x4] sm:$0xf]
        %v1809 = vunpack.c.l.b16 %v1805
        %v1810 = vunpack.c.l.b16 %v1806
        %v1811 = vpack.c.b16 %v1810, %v1809
        %1812 = vrot.lane.b32.xlu0 %v1615, 111
        %v1813 = vpop.permute.xlu0 %1812
        %1814 = vrot.lane.b32.xlu0 %v1616, 111
        %v1815 = vpop.permute.xlu0 %1814
        %1816 = vrot.lane.b32.xlu0 %v1617, 111
        %v1817 = vpop.permute.xlu0 %1816
        %v1818 = vsel %vm802, %v1813, %v1815
        %v1819 = vsel %vm802, %v1815, %v1817
        %v1823 = vsel %vm1271, %v1811, 0
        %1825 = vmatprep.subr.bf16.mxu0 %v1819
        %1826 = vmatpush1.bf16.msra.mxu0 %v1818
        %1827 = vmatprep.subr.bf16.mxu0 0
        %1828 = vmatpush1.bf16.msra.mxu0 0
        %1829 = vmatprep.subr.bf16.mxu0 0
        %1830 = vmatpush1.bf16.msra.mxu0 0
        %1831 = vmatprep.subr.bf16.mxu0 0
        %1832 = vmatpush1.bf16.msra.mxu0 0
        %1833 = vmatprep.subr.bf16.mxu0 0
        %1834 = vmatpush1.bf16.msra.mxu0 0
        %1835 = vmatprep.subr.bf16.mxu0 0
        %1836 = vmatpush1.bf16.msra.mxu0 0
        %1837 = vmatprep.subr.bf16.mxu0 0
        %1838 = vmatpush1.bf16.msra.mxu0 0
        %1839 = vmatprep.subr.bf16.mxu0 0
        %1840 = vmatpush1.bf16.msra.mxu0 0
        %1841 = vmatprep.subr.bf16.mxu0 0
        %1842 = vmatpush1.bf16.msra.mxu0 0
        %1843 = vmatprep.subr.bf16.mxu0 0
        %1844 = vmatpush1.bf16.msra.mxu0 0
        %1845 = vmatprep.subr.bf16.mxu0 0
        %1846 = vmatpush1.bf16.msra.mxu0 0
        %1847 = vmatprep.subr.bf16.mxu0 0
        %1848 = vmatpush1.bf16.msra.mxu0 0
        %1849 = vmatprep.subr.bf16.mxu0 0
        %1850 = vmatpush1.bf16.msra.mxu0 0
        %1851 = vmatprep.subr.bf16.mxu0 0
        %1852 = vmatpush1.bf16.msra.mxu0 0
        %1853 = vmatprep.subr.bf16.mxu0 0
        %1854 = vmatpush1.bf16.msra.mxu0 0
        %1855 = vmatprep.subr.bf16.mxu0 0
        %1856 = vmatpush1.bf16.msra.mxu0 0
        %1857 = vmatprep.mubr.bf16.mxu0 0
        %1858 = vmatmul.mubr.bf16.gmra.mrb[0].mxu0 %v1823
        %v1859 = vpop.f32.mrb[0].mxu0
        %v1860 = vadd.f32 0.0, %v1859
        %v1861 = vpop.f32.mrb[0].mxu0
        %v1862 = vadd.f32 0.0, %v1861
        %v1863 = vpop.f32.mrb[0].mxu0
        %v1864 = vadd.f32 0.0, %v1863
        %v1865 = vpop.f32.mrb[0].mxu0
        %v1866 = vadd.f32 0.0, %v1865
        %1867 = vdwg.mxu0
        %v1870 = vunpack.c.l.b16 %v1802
        %v1871 = vunpack.c.l.b16 %v1803
        %v1872 = vpack.c.b16 %v1871, %v1870
        %1873 = vrot.lane.b32.xlu0 %v1615, 127
        %v1874 = vpop.permute.xlu0 %1873
        %1875 = vrot.lane.b32.xlu0 %v1616, 127
        %v1876 = vpop.permute.xlu0 %1875
        %1877 = vrot.lane.b32.xlu0 %v1617, 127
        %v1878 = vpop.permute.xlu0 %1877
        %v1879 = vsel %vm868, %v1874, %v1876
        %v1880 = vsel %vm868, %v1876, %v1878
        %v1884 = vsel %vm1271, %v1872, 0
        %1886 = vmatprep.subr.bf16.mxu0 %v1880
        %1887 = vmatpush1.bf16.msra.mxu0 %v1879
        %1888 = vmatprep.subr.bf16.mxu0 0
        %1889 = vmatpush1.bf16.msra.mxu0 0
        %1890 = vmatprep.subr.bf16.mxu0 0
        %1891 = vmatpush1.bf16.msra.mxu0 0
        %1892 = vmatprep.subr.bf16.mxu0 0
        %1893 = vmatpush1.bf16.msra.mxu0 0
        %1894 = vmatprep.subr.bf16.mxu0 0
        %1895 = vmatpush1.bf16.msra.mxu0 0
        %1896 = vmatprep.subr.bf16.mxu0 0
        %1897 = vmatpush1.bf16.msra.mxu0 0
        %1898 = vmatprep.subr.bf16.mxu0 0
        %1899 = vmatpush1.bf16.msra.mxu0 0
        %1900 = vmatprep.subr.bf16.mxu0 0
        %1901 = vmatpush1.bf16.msra.mxu0 0
        %1902 = vmatprep.subr.bf16.mxu0 0
        %1903 = vmatpush1.bf16.msra.mxu0 0
        %1904 = vmatprep.subr.bf16.mxu0 0
        %1905 = vmatpush1.bf16.msra.mxu0 0
        %1906 = vmatprep.subr.bf16.mxu0 0
        %1907 = vmatpush1.bf16.msra.mxu0 0
        %1908 = vmatprep.subr.bf16.mxu0 0
        %1909 = vmatpush1.bf16.msra.mxu0 0
        %1910 = vmatprep.subr.bf16.mxu0 0
        %1911 = vmatpush1.bf16.msra.mxu0 0
        %1912 = vmatprep.subr.bf16.mxu0 0
        %1913 = vmatpush1.bf16.msra.mxu0 0
        %1914 = vmatprep.subr.bf16.mxu0 0
        %1915 = vmatpush1.bf16.msra.mxu0 0
        %1916 = vmatprep.subr.bf16.mxu0 0
        %1917 = vmatpush1.bf16.msra.mxu0 0
        %1918 = vmatprep.mubr.bf16.mxu0 0
        %1919 = vmatmul.mubr.bf16.gmra.mrb[0].mxu0 %v1884
        %v1920 = vpop.f32.mrb[0].mxu0
        %v1921 = vadd.f32 %v1860, %v1920
        %v1922 = vpop.f32.mrb[0].mxu0
        %v1923 = vadd.f32 %v1862, %v1922
        %v1924 = vpop.f32.mrb[0].mxu0
        %v1925 = vadd.f32 %v1864, %v1924
        %v1926 = vpop.f32.mrb[0].mxu0
        %v1927 = vadd.f32 %v1866, %v1926
        %1928 = vdwg.mxu0
        %s1929 = scalar_lea.vmem %s8, 56
        %v1930 = vld [vmem:[%s1929] sm:$0xf]
        %v1931 = vld [vmem:[%s1929 + $0x4] sm:$0xf]
        %v1934 = vunpack.c.l.b16 %v1930
        %v1935 = vunpack.c.l.b16 %v1931
        %v1936 = vpack.c.b16 %v1935, %v1934
        %1937 = vrot.lane.b32.xlu0 %v1615, 95
        %v1938 = vpop.permute.xlu0 %1937
        %1939 = vrot.lane.b32.xlu0 %v1616, 95
        %v1940 = vpop.permute.xlu0 %1939
        %1941 = vrot.lane.b32.xlu0 %v1617, 95
        %v1942 = vpop.permute.xlu0 %1941
        %v1943 = vsel %vm937, %v1938, %v1940
        %v1944 = vsel %vm937, %v1940, %v1942
        %v1948 = vsel %vm1271, %v1936, 0
        %1950 = vmatprep.subr.bf16.mxu0 %v1944
        %1951 = vmatpush1.bf16.msra.mxu0 %v1943
        %1952 = vmatprep.subr.bf16.mxu0 0
        %1953 = vmatpush1.bf16.msra.mxu0 0
        %1954 = vmatprep.subr.bf16.mxu0 0
        %1955 = vmatpush1.bf16.msra.mxu0 0
        %1956 = vmatprep.subr.bf16.mxu0 0
        %1957 = vmatpush1.bf16.msra.mxu0 0
        %1958 = vmatprep.subr.bf16.mxu0 0
        %1959 = vmatpush1.bf16.msra.mxu0 0
        %1960 = vmatprep.subr.bf16.mxu0 0
        %1961 = vmatpush1.bf16.msra.mxu0 0
        %1962 = vmatprep.subr.bf16.mxu0 0
        %1963 = vmatpush1.bf16.msra.mxu0 0
        %1964 = vmatprep.subr.bf16.mxu0 0
        %1965 = vmatpush1.bf16.msra.mxu0 0
        %1966 = vmatprep.subr.bf16.mxu0 0
        %1967 = vmatpush1.bf16.msra.mxu0 0
        %1968 = vmatprep.subr.bf16.mxu0 0
        %1969 = vmatpush1.bf16.msra.mxu0 0
        %1970 = vmatprep.subr.bf16.mxu0 0
        %1971 = vmatpush1.bf16.msra.mxu0 0
        %1972 = vmatprep.subr.bf16.mxu0 0
        %1973 = vmatpush1.bf16.msra.mxu0 0
        %1974 = vmatprep.subr.bf16.mxu0 0
        %1975 = vmatpush1.bf16.msra.mxu0 0
        %1976 = vmatprep.subr.bf16.mxu0 0
        %1977 = vmatpush1.bf16.msra.mxu0 0
        %1978 = vmatprep.subr.bf16.mxu0 0
        %1979 = vmatpush1.bf16.msra.mxu0 0
        %1980 = vmatprep.subr.bf16.mxu0 0
        %1981 = vmatpush1.bf16.msra.mxu0 0
        %1982 = vmatprep.mubr.bf16.mxu0 0
        %1983 = vmatmul.mubr.bf16.gmra.mrb[0].mxu0 %v1948
        %v1984 = vpop.f32.mrb[0].mxu0
        %v1985 = vadd.f32 0.0, %v1984
        %v1986 = vpop.f32.mrb[0].mxu0
        %v1987 = vadd.f32 0.0, %v1986
        %v1988 = vpop.f32.mrb[0].mxu0
        %v1989 = vadd.f32 0.0, %v1988
        %v1990 = vpop.f32.mrb[0].mxu0
        %v1991 = vadd.f32 0.0, %v1990
        %1992 = vdwg.mxu0
        %v1993 = vadd.f32 %v1921, %v1985
        %v1994 = vadd.f32 %v1923, %v1987
        %v1995 = vadd.f32 %v1925, %v1989
        %v1996 = vadd.f32 %v1927, %v1991
        %s1997 = scalar_lea.vmem %s8, 16
        %v1998 = vld [vmem:[%s1997] sm:$0xf]
        %v1999 = vld [vmem:[%s1997 + $0x4] sm:$0xf]
        %s2000 = scalar_lea.vmem %s8, 40
        %v2001 = vld [vmem:[%s2000] sm:$0xf]
        %v2002 = vld [vmem:[%s2000 + $0x4] sm:$0xf]
        %v2005 = vunpack.c.l.b16 %v2001
        %v2006 = vunpack.c.l.b16 %v2002
        %v2007 = vpack.c.b16 %v2006, %v2005
        %2008 = vrot.lane.b32.xlu0 %v1615, 110
        %v2009 = vpop.permute.xlu0 %2008
        %2010 = vrot.lane.b32.xlu0 %v1616, 110
        %v2011 = vpop.permute.xlu0 %2010
        %2012 = vrot.lane.b32.xlu0 %v1617, 110
        %v2013 = vpop.permute.xlu0 %2012
        %v2014 = vsel %vm1013, %v2009, %v2011
        %v2015 = vsel %vm1013, %v2011, %v2013
        %v2019 = vsel %vm1271, %v2007, 0
        %2021 = vmatprep.subr.bf16.mxu0 %v2015
        %2022 = vmatpush1.bf16.msra.mxu0 %v2014
        %2023 = vmatprep.subr.bf16.mxu0 0
        %2024 = vmatpush1.bf16.msra.mxu0 0
        %2025 = vmatprep.subr.bf16.mxu0 0
        %2026 = vmatpush1.bf16.msra.mxu0 0
        %2027 = vmatprep.subr.bf16.mxu0 0
        %2028 = vmatpush1.bf16.msra.mxu0 0
        %2029 = vmatprep.subr.bf16.mxu0 0
        %2030 = vmatpush1.bf16.msra.mxu0 0
        %2031 = vmatprep.subr.bf16.mxu0 0
        %2032 = vmatpush1.bf16.msra.mxu0 0
        %2033 = vmatprep.subr.bf16.mxu0 0
        %2034 = vmatpush1.bf16.msra.mxu0 0
        %2035 = vmatprep.subr.bf16.mxu0 0
        %2036 = vmatpush1.bf16.msra.mxu0 0
        %2037 = vmatprep.subr.bf16.mxu0 0
        %2038 = vmatpush1.bf16.msra.mxu0 0
        %2039 = vmatprep.subr.bf16.mxu0 0
        %2040 = vmatpush1.bf16.msra.mxu0 0
        %2041 = vmatprep.subr.bf16.mxu0 0
        %2042 = vmatpush1.bf16.msra.mxu0 0
        %2043 = vmatprep.subr.bf16.mxu0 0
        %2044 = vmatpush1.bf16.msra.mxu0 0
        %2045 = vmatprep.subr.bf16.mxu0 0
        %2046 = vmatpush1.bf16.msra.mxu0 0
        %2047 = vmatprep.subr.bf16.mxu0 0
        %2048 = vmatpush1.bf16.msra.mxu0 0
        %2049 = vmatprep.subr.bf16.mxu0 0
        %2050 = vmatpush1.bf16.msra.mxu0 0
        %2051 = vmatprep.subr.bf16.mxu0 0
        %2052 = vmatpush1.bf16.msra.mxu0 0
        %2053 = vmatprep.mubr.bf16.mxu0 0
        %2054 = vmatmul.mubr.bf16.gmra.mrb[0].mxu0 %v2019
        %v2055 = vpop.f32.mrb[0].mxu0
        %v2056 = vadd.f32 0.0, %v2055
        %v2057 = vpop.f32.mrb[0].mxu0
        %v2058 = vadd.f32 0.0, %v2057
        %v2059 = vpop.f32.mrb[0].mxu0
        %v2060 = vadd.f32 0.0, %v2059
        %v2061 = vpop.f32.mrb[0].mxu0
        %v2062 = vadd.f32 0.0, %v2061
        %2063 = vdwg.mxu0
        %v2066 = vunpack.c.l.b16 %v1998
        %v2067 = vunpack.c.l.b16 %v1999
        %v2068 = vpack.c.b16 %v2067, %v2066
        %2069 = vrot.lane.b32.xlu0 %v1615, 126
        %v2070 = vpop.permute.xlu0 %2069
        %2071 = vrot.lane.b32.xlu0 %v1616, 126
        %v2072 = vpop.permute.xlu0 %2071
        %2073 = vrot.lane.b32.xlu0 %v1617, 126
        %v2074 = vpop.permute.xlu0 %2073
        %v2075 = vsel %vm1079, %v2070, %v2072
        %v2076 = vsel %vm1079, %v2072, %v2074
        %v2080 = vsel %vm1271, %v2068, 0
        %2082 = vmatprep.subr.bf16.mxu0 %v2076
        %2083 = vmatpush1.bf16.msra.mxu0 %v2075
        %2084 = vmatprep.subr.bf16.mxu0 0
        %2085 = vmatpush1.bf16.msra.mxu0 0
        %2086 = vmatprep.subr.bf16.mxu0 0
        %2087 = vmatpush1.bf16.msra.mxu0 0
        %2088 = vmatprep.subr.bf16.mxu0 0
        %2089 = vmatpush1.bf16.msra.mxu0 0
        %2090 = vmatprep.subr.bf16.mxu0 0
        %2091 = vmatpush1.bf16.msra.mxu0 0
        %2092 = vmatprep.subr.bf16.mxu0 0
        %2093 = vmatpush1.bf16.msra.mxu0 0
        %2094 = vmatprep.subr.bf16.mxu0 0
        %2095 = vmatpush1.bf16.msra.mxu0 0
        %2096 = vmatprep.subr.bf16.mxu0 0
        %2097 = vmatpush1.bf16.msra.mxu0 0
        %2098 = vmatprep.subr.bf16.mxu0 0
        %2099 = vmatpush1.bf16.msra.mxu0 0
        %2100 = vmatprep.subr.bf16.mxu0 0
        %2101 = vmatpush1.bf16.msra.mxu0 0
        %2102 = vmatprep.subr.bf16.mxu0 0
        %2103 = vmatpush1.bf16.msra.mxu0 0
        %2104 = vmatprep.subr.bf16.mxu0 0
        %2105 = vmatpush1.bf16.msra.mxu0 0
        %2106 = vmatprep.subr.bf16.mxu0 0
        %2107 = vmatpush1.bf16.msra.mxu0 0
        %2108 = vmatprep.subr.bf16.mxu0 0
        %2109 = vmatpush1.bf16.msra.mxu0 0
        %2110 = vmatprep.subr.bf16.mxu0 0
        %2111 = vmatpush1.bf16.msra.mxu0 0
        %2112 = vmatprep.subr.bf16.mxu0 0
        %2113 = vmatpush1.bf16.msra.mxu0 0
        %2114 = vmatprep.mubr.bf16.mxu0 0
        %2115 = vmatmul.mubr.bf16.gmra.mrb[0].mxu0 %v2080
        %v2116 = vpop.f32.mrb[0].mxu0
        %v2117 = vadd.f32 %v2056, %v2116
        %v2118 = vpop.f32.mrb[0].mxu0
        %v2119 = vadd.f32 %v2058, %v2118
        %v2120 = vpop.f32.mrb[0].mxu0
        %v2121 = vadd.f32 %v2060, %v2120
        %v2122 = vpop.f32.mrb[0].mxu0
        %v2123 = vadd.f32 %v2062, %v2122
        %2124 = vdwg.mxu0
        %s2125 = scalar_lea.vmem %s8, 64
        %v2126 = vld [vmem:[%s2125] sm:$0xf]
        %v2127 = vld [vmem:[%s2125 + $0x4] sm:$0xf]
        %v2130 = vunpack.c.l.b16 %v2126
        %v2131 = vunpack.c.l.b16 %v2127
        %v2132 = vpack.c.b16 %v2131, %v2130
        %2133 = vrot.lane.b32.xlu0 %v1615, 94
        %v2134 = vpop.permute.xlu0 %2133
        %2135 = vrot.lane.b32.xlu0 %v1616, 94
        %v2136 = vpop.permute.xlu0 %2135
        %2137 = vrot.lane.b32.xlu0 %v1617, 94
        %v2138 = vpop.permute.xlu0 %2137
        %v2139 = vsel %vm1148, %v2134, %v2136
        %v2140 = vsel %vm1148, %v2136, %v2138
        %v2144 = vsel %vm1271, %v2132, 0
        %2146 = vmatprep.subr.bf16.mxu0 %v2140
        %2147 = vmatpush1.bf16.msra.mxu0 %v2139
        %2148 = vmatprep.subr.bf16.mxu0 0
        %2149 = vmatpush1.bf16.msra.mxu0 0
        %2150 = vmatprep.subr.bf16.mxu0 0
        %2151 = vmatpush1.bf16.msra.mxu0 0
        %2152 = vmatprep.subr.bf16.mxu0 0
        %2153 = vmatpush1.bf16.msra.mxu0 0
        %2154 = vmatprep.subr.bf16.mxu0 0
        %2155 = vmatpush1.bf16.msra.mxu0 0
        %2156 = vmatprep.subr.bf16.mxu0 0
        %2157 = vmatpush1.bf16.msra.mxu0 0
        %2158 = vmatprep.subr.bf16.mxu0 0
        %2159 = vmatpush1.bf16.msra.mxu0 0
        %2160 = vmatprep.subr.bf16.mxu0 0
        %2161 = vmatpush1.bf16.msra.mxu0 0
        %2162 = vmatprep.subr.bf16.mxu0 0
        %2163 = vmatpush1.bf16.msra.mxu0 0
        %2164 = vmatprep.subr.bf16.mxu0 0
        %2165 = vmatpush1.bf16.msra.mxu0 0
        %2166 = vmatprep.subr.bf16.mxu0 0
        %2167 = vmatpush1.bf16.msra.mxu0 0
        %2168 = vmatprep.subr.bf16.mxu0 0
        %2169 = vmatpush1.bf16.msra.mxu0 0
        %2170 = vmatprep.subr.bf16.mxu0 0
        %2171 = vmatpush1.bf16.msra.mxu0 0
        %2172 = vmatprep.subr.bf16.mxu0 0
        %2173 = vmatpush1.bf16.msra.mxu0 0
        %2174 = vmatprep.subr.bf16.mxu0 0
        %2175 = vmatpush1.bf16.msra.mxu0 0
        %2176 = vmatprep.subr.bf16.mxu0 0
        %2177 = vmatpush1.bf16.msra.mxu0 0
        %2178 = vmatprep.mubr.bf16.mxu0 0
        %2179 = vmatmul.mubr.bf16.gmra.mrb[0].mxu0 %v2144
        %v2180 = vpop.f32.mrb[0].mxu0
        %v2181 = vadd.f32 0.0, %v2180
        %v2182 = vpop.f32.mrb[0].mxu0
        %v2183 = vadd.f32 0.0, %v2182
        %v2184 = vpop.f32.mrb[0].mxu0
        %v2185 = vadd.f32 0.0, %v2184
        %v2186 = vpop.f32.mrb[0].mxu0
        %v2187 = vadd.f32 0.0, %v2186
        %2188 = vdwg.mxu0
        %v2189 = vadd.f32 %v2117, %v2181
        %v2190 = vadd.f32 %v2119, %v2183
        %v2191 = vadd.f32 %v2121, %v2185
        %v2192 = vadd.f32 %v2123, %v2187
        %v2193 = vmul.f32 %v1797, %v1211
        %v2194 = vmul.f32 %v1798, %v1215
        %v2195 = vmul.f32 %v1799, %v1211
        %v2196 = vmul.f32 %v1800, %v1215
        %v2197 = vadd.f32 %v2193, %v1993
        %v2198 = vadd.f32 %v2194, %v1994
        %v2199 = vadd.f32 %v2195, %v1995
        %v2200 = vadd.f32 %v2196, %v1996
        %v2201 = vmul.f32 %v2189, %v1230
        %v2202 = vmul.f32 %v2190, %v1234
        %v2203 = vmul.f32 %v2191, %v1230
        %v2204 = vmul.f32 %v2192, %v1234
        %v2205 = vadd.f32 %v2197, %v2201
        %v2206 = vadd.f32 %v2198, %v2202
        %v2207 = vadd.f32 %v2199, %v2203
        %v2208 = vadd.f32 %v2200, %v2204
        %v2209 = vld [vmem:[%s9] sm:$0xff]
        %v2210 = vld [vmem:[%s9 + $0x8] sm:$0xff]
        %2212 = vset.pattern.permute.xlu0 0
        %2213 = vperm.xlu0 %2212, %v2209
        %v2214 = vpop.permute.xlu0 %2213
        %2217 = vset.pattern.permute.xlu0 0
        %2218 = vperm.xlu0 %2217, %v2210
        %v2219 = vpop.permute.xlu0 %2218
        %v2221 = vadd.f32 %v2205, %v2214
        %v2222 = vadd.f32 %v2206, %v2214
        %v2223 = vadd.f32 %v2207, %v2219
        %v2224 = vadd.f32 %v2208, %v2219
        %v2225 = vld [vmem:[%s10] sm:$0xff]
        %v2226 = vld [vmem:[%s10 + $0x8] sm:$0xff]
        %v2227 = vld [vmem:[%s11] sm:$0xff]
        %v2228 = vld [vmem:[%s11 + $0x8] sm:$0xff]
        %v2229 = vadd.f32 %v2221, %v2222
        %2230 = vadd.xlane.f32.xlu0 %v2229
        %v2231 = vpop.xlane.xlu0 %2230
        %v2232 = vadd.f32 %v2223, %v2224
        %2233 = vadd.xlane.f32.xlu0 %v2232
        %v2234 = vpop.xlane.xlu0 %2233
        %2235 = vmatprep.subr.mxu0 0.0
        %2236 = vmatpush1.msra.mxu0 %v2231
        %2237 = vmatprep.subr.mxu0 0.0
        %2238 = vmatpush1.msra.mxu0 %v2234
        %2239 = vmatprep.subr.mxu0 0.0
        %2240 = vmatpush1.msra.mxu0 0.0
        %2241 = vmatprep.subr.mxu0 0.0
        %2242 = vmatpush1.msra.mxu0 0.0
        %2243 = vmatprep.subr.mxu0 0.0
        %2244 = vmatpush1.msra.mxu0 0.0
        %2245 = vmatprep.subr.mxu0 0.0
        %2246 = vmatpush1.msra.mxu0 0.0
        %2247 = vmatprep.subr.mxu0 0.0
        %2248 = vmatpush1.msra.mxu0 0.0
        %2249 = vmatprep.subr.mxu0 0.0
        %2250 = vmatpush1.msra.mxu0 0.0
        %2251 = vmatprep.subr.mxu0 0.0
        %2252 = vmatpush1.msra.mxu0 0.0
        %2253 = vmatprep.subr.mxu0 0.0
        %2254 = vmatpush1.msra.mxu0 0.0
        %2255 = vmatprep.subr.mxu0 0.0
        %2256 = vmatpush1.msra.mxu0 0.0
        %2257 = vmatprep.subr.mxu0 0.0
        %2258 = vmatpush1.msra.mxu0 0.0
        %2259 = vmatprep.subr.mxu0 0.0
        %2260 = vmatpush1.msra.mxu0 0.0
        %2261 = vmatprep.subr.mxu0 0.0
        %2262 = vmatpush1.msra.mxu0 0.0
        %2263 = vmatprep.subr.mxu0 0.0
        %2264 = vmatpush1.msra.mxu0 0.0
        %2265 = vmatprep.subr.mxu0 0.0
        %2266 = vmatpush1.msra.mxu0 0.0
        %2267 = vmatprep.subr.mxu0 0.0
        %2268 = vmatpush1.msra.mxu0 0.0
        %2269 = vmatprep.subr.mxu0 0.0
        %2270 = vmatpush1.msra.mxu0 0.0
        %2271 = vmatprep.subr.mxu0 0.0
        %2272 = vmatpush1.msra.mxu0 0.0
        %2273 = vmatprep.subr.mxu0 0.0
        %2274 = vmatpush1.msra.mxu0 0.0
        %2275 = vmatprep.subr.mxu0 0.0
        %2276 = vmatpush1.msra.mxu0 0.0
        %2277 = vmatprep.subr.mxu0 0.0
        %2278 = vmatpush1.msra.mxu0 0.0
        %2279 = vmatprep.subr.mxu0 0.0
        %2280 = vmatpush1.msra.mxu0 0.0
        %2281 = vmatprep.subr.mxu0 0.0
        %2282 = vmatpush1.msra.mxu0 0.0
        %2283 = vmatprep.subr.mxu0 0.0
        %2284 = vmatpush1.msra.mxu0 0.0
        %2285 = vmatprep.subr.mxu0 0.0
        %2286 = vmatpush1.msra.mxu0 0.0
        %2287 = vmatprep.subr.mxu0 0.0
        %2288 = vmatpush1.msra.mxu0 0.0
        %2289 = vmatprep.subr.mxu0 0.0
        %2290 = vmatpush1.msra.mxu0 0.0
        %2291 = vmatprep.subr.mxu0 0.0
        %2292 = vmatpush1.msra.mxu0 0.0
        %2293 = vmatprep.subr.mxu0 0.0
        %2294 = vmatpush1.msra.mxu0 0.0
        %2295 = vmatprep.subr.mxu0 0.0
        %2296 = vmatpush1.msra.mxu0 0.0
        %2297 = vmatprep.subr.mxu0 0.0
        %2298 = vmatpush1.msra.mxu0 0.0
        %2299 = vmatprep.mubr.f32.mxu0 0.0
        %2300 = vmatmul.mubr.f32.gmra.mrb[0].mxu0 %v1273
        %v2301 = vpop.f32.mrb[0].mxu0
        %v2302 = vadd.f32 0.0, %v2301
        %v2303 = vpop.f32.mrb[0].mxu0
        %2304 = vmatprep.mubr.f32.mxu0 0.0
        %2305 = vmatmul.mubr.f32.gmra.mrb[0].mxu0 %v1276
        %v2306 = vpop.f32.mrb[0].mxu0
        %v2307 = vadd.f32 0.0, %v2306
        %v2308 = vpop.f32.mrb[0].mxu0
        %2309 = vdwg.mxu0
        %2311 = vset.pattern.permute.xlu0 0
        %2312 = vperm.xlu0 %2311, %v2302
        %v2313 = vpop.permute.xlu0 %2312
        %2316 = vset.pattern.permute.xlu0 0
        %2317 = vperm.xlu0 %2316, %v2307
        %v2318 = vpop.permute.xlu0 %2317
        %v2320 = vsub.f32 %v2221, %v2313
        %v2321 = vsub.f32 %v2222, %v2313
        %v2322 = vsub.f32 %v2223, %v2318
        %v2323 = vsub.f32 %v2224, %v2318
        %v2324 = vmul.f32 %v2320, %v2320
        %v2325 = vmul.f32 %v2321, %v2321
        %v2326 = vmul.f32 %v2322, %v2322
        %v2327 = vmul.f32 %v2323, %v2323
        %v2328 = vadd.f32 %v2324, %v2325
        %2329 = vadd.xlane.f32.xlu0 %v2328
        %v2330 = vpop.xlane.xlu0 %2329
        %v2331 = vadd.f32 %v2326, %v2327
        %2332 = vadd.xlane.f32.xlu0 %v2331
        %v2333 = vpop.xlane.xlu0 %2332
        %2334 = vmatprep.subr.mxu0 0.0
        %2335 = vmatpush1.msra.mxu0 %v2330
        %2336 = vmatprep.subr.mxu0 0.0
        %2337 = vmatpush1.msra.mxu0 %v2333
        %2338 = vmatprep.subr.mxu0 0.0
        %2339 = vmatpush1.msra.mxu0 0.0
        %2340 = vmatprep.subr.mxu0 0.0
        %2341 = vmatpush1.msra.mxu0 0.0
        %2342 = vmatprep.subr.mxu0 0.0
        %2343 = vmatpush1.msra.mxu0 0.0
        %2344 = vmatprep.subr.mxu0 0.0
        %2345 = vmatpush1.msra.mxu0 0.0
        %2346 = vmatprep.subr.mxu0 0.0
        %2347 = vmatpush1.msra.mxu0 0.0
        %2348 = vmatprep.subr.mxu0 0.0
        %2349 = vmatpush1.msra.mxu0 0.0
        %2350 = vmatprep.subr.mxu0 0.0
        %2351 = vmatpush1.msra.mxu0 0.0
        %2352 = vmatprep.subr.mxu0 0.0
        %2353 = vmatpush1.msra.mxu0 0.0
        %2354 = vmatprep.subr.mxu0 0.0
        %2355 = vmatpush1.msra.mxu0 0.0
        %2356 = vmatprep.subr.mxu0 0.0
        %2357 = vmatpush1.msra.mxu0 0.0
        %2358 = vmatprep.subr.mxu0 0.0
        %2359 = vmatpush1.msra.mxu0 0.0
        %2360 = vmatprep.subr.mxu0 0.0
        %2361 = vmatpush1.msra.mxu0 0.0
        %2362 = vmatprep.subr.mxu0 0.0
        %2363 = vmatpush1.msra.mxu0 0.0
        %2364 = vmatprep.subr.mxu0 0.0
        %2365 = vmatpush1.msra.mxu0 0.0
        %2366 = vmatprep.subr.mxu0 0.0
        %2367 = vmatpush1.msra.mxu0 0.0
        %2368 = vmatprep.subr.mxu0 0.0
        %2369 = vmatpush1.msra.mxu0 0.0
        %2370 = vmatprep.subr.mxu0 0.0
        %2371 = vmatpush1.msra.mxu0 0.0
        %2372 = vmatprep.subr.mxu0 0.0
        %2373 = vmatpush1.msra.mxu0 0.0
        %2374 = vmatprep.subr.mxu0 0.0
        %2375 = vmatpush1.msra.mxu0 0.0
        %2376 = vmatprep.subr.mxu0 0.0
        %2377 = vmatpush1.msra.mxu0 0.0
        %2378 = vmatprep.subr.mxu0 0.0
        %2379 = vmatpush1.msra.mxu0 0.0
        %2380 = vmatprep.subr.mxu0 0.0
        %2381 = vmatpush1.msra.mxu0 0.0
        %2382 = vmatprep.subr.mxu0 0.0
        %2383 = vmatpush1.msra.mxu0 0.0
        %2384 = vmatprep.subr.mxu0 0.0
        %2385 = vmatpush1.msra.mxu0 0.0
        %2386 = vmatprep.subr.mxu0 0.0
        %2387 = vmatpush1.msra.mxu0 0.0
        %2388 = vmatprep.subr.mxu0 0.0
        %2389 = vmatpush1.msra.mxu0 0.0
        %2390 = vmatprep.subr.mxu0 0.0
        %2391 = vmatpush1.msra.mxu0 0.0
        %2392 = vmatprep.subr.mxu0 0.0
        %2393 = vmatpush1.msra.mxu0 0.0
        %2394 = vmatprep.subr.mxu0 0.0
        %2395 = vmatpush1.msra.mxu0 0.0
        %2396 = vmatprep.subr.mxu0 0.0
        %2397 = vmatpush1.msra.mxu0 0.0
        %2398 = vmatprep.mubr.f32.mxu0 0.0
        %2399 = vmatmul.mubr.f32.gmra.mrb[0].mxu0 %v1273
        %v2400 = vpop.f32.mrb[0].mxu0
        %v2401 = vadd.f32 1e-05, %v2400
        %v2402 = vpop.f32.mrb[0].mxu0
        %2403 = vmatprep.mubr.f32.mxu0 0.0
        %2404 = vmatmul.mubr.f32.gmra.mrb[0].mxu0 %v1276
        %v2405 = vpop.f32.mrb[0].mxu0
        %v2406 = vadd.f32 1e-05, %v2405
        %v2407 = vpop.f32.mrb[0].mxu0
        %2408 = vdwg.mxu0
        %v2409 = vrsqrt.pop %v2401
        %v2410 = vrsqrt.pop %v2406
        %v2411 = vmul.f32 %v2409, %v2225
        %v2412 = vmul.f32 %v2410, %v2226
        %2414 = vset.pattern.permute.xlu0 0
        %2415 = vperm.xlu0 %2414, %v2411
        %v2416 = vpop.permute.xlu0 %2415
        %2419 = vset.pattern.permute.xlu0 0
        %2420 = vperm.xlu0 %2419, %v2412
        %v2421 = vpop.permute.xlu0 %2420
        %v2423 = vmul.f32 %v2320, %v2416
        %v2424 = vmul.f32 %v2321, %v2416
        %v2425 = vmul.f32 %v2322, %v2421
        %v2426 = vmul.f32 %v2323, %v2421
        %2428 = vset.pattern.permute.xlu0 0
        %2429 = vperm.xlu0 %2428, %v2227
        %v2430 = vpop.permute.xlu0 %2429
        %2433 = vset.pattern.permute.xlu0 0
        %2434 = vperm.xlu0 %2433, %v2228
        %v2435 = vpop.permute.xlu0 %2434
        %v2437 = vadd.f32 %v2423, %v2430
        %v2438 = vadd.f32 %v2424, %v2430
        %v2439 = vadd.f32 %v2425, %v2435
        %v2440 = vadd.f32 %v2426, %v2435
        %v2441 = vsub.f32 0.0, %v2437
        %v2442 = vsub.f32 0.0, %v2438
        %v2443 = vsub.f32 0.0, %v2439
        %v2444 = vsub.f32 0.0, %v2440
        %v2445 = vmul.f32 %v2441, 1.442695
        %v2446 = vpow.pop %v2445
        %v2447 = vmul.f32 %v2442, 1.442695
        %v2448 = vpow.pop %v2447
        %v2449 = vmul.f32 %v2443, 1.442695
        %v2450 = vpow.pop %v2449
        %v2451 = vmul.f32 %v2444, 1.442695
        %v2452 = vpow.pop %v2451
        %v2453 = vadd.f32 %v2446, 1.0
        %v2454 = vadd.f32 %v2448, 1.0
        %v2455 = vadd.f32 %v2450, 1.0
        %v2456 = vadd.f32 %v2452, 1.0
        %v2457 = vrcp.pop %v2453
        %v2458 = vrcp.pop %v2454
        %v2459 = vrcp.pop %v2455
        %v2460 = vrcp.pop %v2456
        %v2461 = vmul.f32 %v2437, %v2457
        %v2462 = vmul.f32 %v2438, %v2458
        %v2463 = vmul.f32 %v2439, %v2459
        %v2464 = vmul.f32 %v2440, %v2460
        %v2465 = vld [vmem:[%s12] sm:$0xf]
        %v2466 = vld [vmem:[%s12 + $0x4] sm:$0xf]
        %v2467 = vld [vmem:[%s534] sm:$0xf]
        %v2468 = vld [vmem:[%s13] sm:$0xff]
        %v2469 = vld [vmem:[%s13 + $0x8] sm:$0xff]
        %2471 = vset.pattern.permute.xlu0 0
        %2472 = vperm.xlu0 %2471, %v2468
        %v2473 = vpop.permute.xlu0 %2472
        %2476 = vset.pattern.permute.xlu0 0
        %2477 = vperm.xlu0 %2476, %v2469
        %v2478 = vpop.permute.xlu0 %2477
        %v2482 = vunpack.c.l.b16 %v2465
        %v2483 = vunpack.c.l.b16 %v2466
        %v2484 = vpack.c.b16 %v2483, %v2482
        %v2487 = vunpack.c.l.s4 1983009808
        %v2488 = vunpack.c.0.s8 %v2487
        %v2489 = vlaneseq
        %v2490 = vshrl.u32 %v2489, 7
        %v2491 = vsub.s32 %v2488, %v2490
        %v2492 = vrot.slane %v2467, %v2491
        %v2493 = vcombine.high %v2492, %v2492
        %v2495 = vsel %vm601, %v2484, 0
        %v2498 = vsel %vm605, %v2492, 0
        %v2501 = vsel %vm605, %v2493, 0
        %2503 = vmatprep.subr.bf16.mxu0 %v2501
        %2504 = vmatpush1.bf16.msra.mxu0 %v2498
        %2505 = vmatprep.subr.bf16.mxu0 0
        %2506 = vmatpush1.bf16.msra.mxu0 0
        %2507 = vmatprep.subr.bf16.mxu0 0
        %2508 = vmatpush1.bf16.msra.mxu0 0
        %2509 = vmatprep.subr.bf16.mxu0 0
        %2510 = vmatpush1.bf16.msra.mxu0 0
        %2511 = vmatprep.subr.bf16.mxu0 0
        %2512 = vmatpush1.bf16.msra.mxu0 0
        %2513 = vmatprep.subr.bf16.mxu0 0
        %2514 = vmatpush1.bf16.msra.mxu0 0
        %2515 = vmatprep.subr.bf16.mxu0 0
        %2516 = vmatpush1.bf16.msra.mxu0 0
        %2517 = vmatprep.subr.bf16.mxu0 0
        %2518 = vmatpush1.bf16.msra.mxu0 0
        %2519 = vmatprep.subr.bf16.mxu0 0
        %2520 = vmatpush1.bf16.msra.mxu0 0
        %2521 = vmatprep.subr.bf16.mxu0 0
        %2522 = vmatpush1.bf16.msra.mxu0 0
        %2523 = vmatprep.subr.bf16.mxu0 0
        %2524 = vmatpush1.bf16.msra.mxu0 0
        %2525 = vmatprep.subr.bf16.mxu0 0
        %2526 = vmatpush1.bf16.msra.mxu0 0
        %2527 = vmatprep.subr.bf16.mxu0 0
        %2528 = vmatpush1.bf16.msra.mxu0 0
        %2529 = vmatprep.subr.bf16.mxu0 0
        %2530 = vmatpush1.bf16.msra.mxu0 0
        %2531 = vmatprep.subr.bf16.mxu0 0
        %2532 = vmatpush1.bf16.msra.mxu0 0
        %2533 = vmatprep.subr.bf16.mxu0 0
        %2534 = vmatpush1.bf16.msra.mxu0 0
        %2535 = vmatprep.mubr.bf16.mxu0 0
        %2536 = vmatmul.mubr.bf16.gmra.mrb[0].mxu0 %v2495
        %v2537 = vpop.f32.mrb[0].mxu0
        %v2538 = vadd.f32 %v2473, %v2537
        %v2539 = vpop.f32.mrb[0].mxu0
        %v2540 = vadd.f32 %v2473, %v2539
        %v2541 = vpop.f32.mrb[0].mxu0
        %v2542 = vadd.f32 %v2478, %v2541
        %v2543 = vpop.f32.mrb[0].mxu0
        %v2544 = vadd.f32 %v2478, %v2543
        %2545 = vdwg.mxu0
        %v2546 = vadd.f32 %v2538, %v2461
        %v2547 = vadd.f32 %v2540, %v2462
        %v2548 = vadd.f32 %v2542, %v2463
        %v2549 = vadd.f32 %v2544, %v2464
        %2550 = vst [vmem:[%s529] sm:$0xff] %v2546
        %2551 = vst [vmem:[%s529 + $0x8] sm:$0xff] %v2547
        %2552 = vst [vmem:[%s529 + $0x10] sm:$0xff] %v2548
        %2553 = vst [vmem:[%s529 + $0x18] sm:$0xff] %v2549
        %s2554 = sand.u32 %s384, 1
        %s2555 = scalar_lea.sflag [#allocation4], %s2554
        %s2556 = sand.u32 %s384, 1
        %s2557 = smul.addr %s2556, 32
        %s2558 = scalar_lea.vmem [#allocation3], %s2557
        // Predicated region
        $region85: #{tpu_custom_call.1} parent=83 // pred_check
          %p2559 = pneg %p394
        $region86: #{tpu_custom_call.1} parent=83 // pred_check_branch
          %2561 = sbr.rel (%p2559) target = $region88
        $region87: #{tpu_custom_call.1} parent=83 // pred_region
          %s2563 = ssub.s32 512, 512
          %2564 = vsyncadd %s2555, %s2563
          %s2565 = smul.addr %s30, 4
          %s2566 = smul.addr %s2565, 128
          %s2567 = scalar_lea.hbm %s16, %s2566
          %s2568 = sshll.u32 %s2558, 4
          %s2569 = int_to_ptr.vmem [resolvable:$true] %s2568
          %2574 = dma.vmem_to_hbm [thread:$0]  %s2569, 512, %s2567, %s2555, 256, 256, 16
        $region88: #{tpu_custom_call.1} parent=83 // pred_fallthru
          _
      $region84: #{tpu_custom_call.1} parent=5 // pred_fallthru
        _
      %p2575 = scmp.le.s32.totalorder 2, %s25
      // Predicated region
      $region89: #{tpu_custom_call.1} parent=5 // pred_check
        %p2576 = pneg %p2575
      $region90: #{tpu_custom_call.1} parent=5 // pred_check_branch
        %2578 = sbr.rel (%p2576) target = $region92
      $region91: #{tpu_custom_call.1} parent=5 // pred_region
        %s2579 = ssub.s32 %s25, 2
        // Predicated region
        $region93: #{tpu_custom_call.1} parent=91 // pred_check
          %p2580 = pneg %p400
        $region94: #{tpu_custom_call.1} parent=91 // pred_check_branch
          %2582 = sbr.rel (%p2580) target = $region96
        $region95: #{tpu_custom_call.1} parent=91 // pred_region
          %s2583 = sand.u32 %s385, 1
          %s2584 = scalar_lea.sflag [#allocation4], %s2583
          %s2585 = sand.u32 %s385, 1
          %s2586 = smul.addr %s2585, 32
          %s2587 = scalar_lea.vmem [#allocation3], %s2586
          %2588 = dma.done %s2584, 512
        $region96: #{tpu_custom_call.1} parent=91 // pred_fallthru
          _
      $region92: #{tpu_custom_call.1} parent=5 // pred_fallthru
        _
    $region6: #{tpu_custom_call.1} parent=1 // loop_footer
      %s29 = sadd.s32 1, %s25
    $region7: #{tpu_custom_call.1} parent=1 // loop_footer_branch
      %24 = sbr.rel target = $region3
    $region8: #{tpu_custom_call.1} parent=1 // loop_exit
      _
    %2589 = vsyncpa [#allocation4], 1
    %s2590 = scalar_lea.sflag [#allocation4], 1
    %2591 = vsyncpa %s2590, 1

</llo_original>
